<compile_context>
chip_gen: v7x
topology: tpu7x:2x2x1
jax: 0.10.0
libtpu: 0.0.40
codegen_flags: <defaults>
</compile_context>

<pallas_src>
import functools
import math

import jax
import jax.numpy as jnp
from jax.experimental import pallas as pl
from jax.experimental.pallas import tpu as pltpu

HIDDEN = 50
EMB_DIM = 10
VOCAB = 100        # synthetic small vocab (real module uses DistilBert's vocab)
PAD_IDX = 0
GP = 128           # gate pitch: each gate padded to one full vreg lane width


# ----------------------------------------------------------------------------
# Pallas kernel: fused bidirectional GRU recurrence + output projection
# ----------------------------------------------------------------------------
def _rnn_attn_kernel(x_ref,        # (S*B, E)   embedded tokens, time-major, flattened
                     wih_ref,      # (E, 6*GP)  [fwd r|z|n | bwd r|z|n] input weights (padded)
                     gb_ref,       # (1, 6*GP)  folded gate biases (b_ih, + b_hh for r,z)
                     whh_f_ref,    # (GP, 3*GP) fwd hidden weights (rows/cols >= H are zero)
                     whh_b_ref,    # (GP, 3*GP) bwd hidden weights
                     bhn_f_ref,    # (1, GP)    fwd b_hn (padded)
                     bhn_b_ref,    # (1, GP)    bwd b_hn (padded)
                     wo_ref,       # (2*GP, 2)  fused output projection (padded rows zero)
                     bo_ref,       # (1, 2)
                     out_ref,      # (B, 2)
                     *, S, B):
    # --- hoisted input projection: all timesteps, both directions, one matmul.
    gi_all = jnp.dot(x_ref[...], wih_ref[...],
                     preferred_element_type=jnp.float32) + gb_ref[...]   # (S*B, 6GP)

    bhn_f = bhn_f_ref[...]
    bhn_b = bhn_b_ref[...]

    def cell(gi, gh, h, bhn):
        # PyTorch GRU gate order (r, z, n); b_hn stays inside the r* term.
        r = jax.nn.sigmoid(gi[:, 0:GP] + gh[:, 0:GP])
        z = jax.nn.sigmoid(gi[:, GP:2 * GP] + gh[:, GP:2 * GP])
        n = jnp.tanh(gi[:, 2 * GP:3 * GP] + r * (gh[:, 2 * GP:3 * GP] + bhn))
        return (1.0 - z) * n + z * h

    # Hidden state carried at padded width GP; lanes [H, GP) remain exactly zero
    # throughout because the padded weight/bias columns are zero.
    h_f = jnp.zeros((B, GP), jnp.float32)
    h_b = jnp.zeros((B, GP), jnp.float32)

    # Fused, fully-unrolled bidirectional recurrence (S is a small static int).
    for t in range(S):
        gi_f = gi_all[t * B:(t + 1) * B, 0:3 * GP]                  # fwd gates at t
        gi_b = gi_all[(S - 1 - t) * B:(S - t) * B, 3 * GP:6 * GP]   # bwd gates at S-1-t
        gh_f = jnp.dot(h_f, whh_f_ref[...], preferred_element_type=jnp.float32)
        gh_b = jnp.dot(h_b, whh_b_ref[...], preferred_element_type=jnp.float32)
        h_f = cell(gi_f, gh_f, h_f, bhn_f)
        h_b = cell(gi_b, gh_b, h_b, bhn_b)

    # cat([hidden[-1] (=backward final), hidden[-2] (=forward final)]) @ W_out.T + b
    feat = jnp.concatenate([h_b, h_f], axis=1)                      # (B, 2GP), lane-aligned
    out_ref[...] = (jnp.dot(feat, wo_ref[...], preferred_element_type=jnp.float32)
                    + bo_ref[...])


# ----------------------------------------------------------------------------
# Host-side weight packing into the lane-aligned, bias-folded layout
# ----------------------------------------------------------------------------
def _pack_params(params):
    H, E = HIDDEN, EMB_DIM

    def pad_ih(w):                       # (3H, E) -> (E, 3GP)
        out = jnp.zeros((E, 3 * GP), jnp.float32)
        for g in range(3):
            out = out.at[:, g * GP:g * GP + H].set(w[g * H:(g + 1) * H, :].T)
        return out

    def pad_hh(w):                       # (3H, H) -> (GP, 3GP), zero-padded
        out = jnp.zeros((GP, 3 * GP), jnp.float32)
        for g in range(3):
            out = out.at[:H, g * GP:g * GP + H].set(w[g * H:(g + 1) * H, :].T)
        return out

    def fold_bias(bih, bhh):             # -> (1, 3GP): r,z get bih+bhh; n gets bih only
        out = jnp.zeros((1, 3 * GP), jnp.float32)
        out = out.at[0, 0 * GP:0 * GP + H].set(bih[0:H] + bhh[0:H])
        out = out.at[0, 1 * GP:1 * GP + H].set(bih[H:2 * H] + bhh[H:2 * H])
        out = out.at[0, 2 * GP:2 * GP + H].set(bih[2 * H:3 * H])
        return out

    def pad_bhn(bhh):                    # -> (1, GP)
        return jnp.zeros((1, GP), jnp.float32).at[0, :H].set(bhh[2 * H:3 * H])

    wih_cat = jnp.concatenate([pad_ih(params["wih_f"]), pad_ih(params["wih_b"])], axis=1)
    gbias = jnp.concatenate([fold_bias(params["bih_f"], params["bhh_f"]),
                             fold_bias(params["bih_b"], params["bhh_b"])], axis=1)
    whh_f = pad_hh(params["whh_f"])
    whh_b = pad_hh(params["whh_b"])
    bhn_f = pad_bhn(params["bhh_f"])
    bhn_b = pad_bhn(params["bhh_b"])

    # Fused output projection: feat = [h_bwd (GP) | h_fwd (GP)]
    wo = jnp.zeros((2 * GP, 2), jnp.float32)
    wo = wo.at[0:HIDDEN, :].set(params["w_out"][:, :HIDDEN].T)        # multiplies h_bwd
    wo = wo.at[GP:GP + HIDDEN, :].set(params["w_out"][:, HIDDEN:].T)  # multiplies h_fwd
    bo = params["b_out"].reshape(1, 2)

    return wih_cat, gbias, whh_f, whh_b, bhn_f, bhn_b, wo, bo


def rnn_attn_pallas(x_emb, params):
    """x_emb: (S, B, E) float32 embedded sequence.  Returns (B, 2) float32."""
    S, B, E = x_emb.shape
    packed = _pack_params(params)
    x_flat = x_emb.reshape(S * B, E)

    kernel = functools.partial(_rnn_attn_kernel, S=S, B=B)
    vmem = pl.BlockSpec(memory_space=pltpu.MemorySpace.VMEM)
    return pl.pallas_call(
        kernel,
        out_shape=jax.ShapeDtypeStruct((B, 2), jnp.float32),
        in_specs=[vmem] * (1 + len(packed)),
        out_specs=vmem,
    )(x_flat, *packed)


# ----------------------------------------------------------------------------
# Glue: embedding with max_norm=1 + padding_idx (plain JAX)
# ----------------------------------------------------------------------------
def embed(tokens, emb_w):
    # nn.Embedding(max_norm=1): rows with L2 norm > 1 are renormalized to norm 1.
    norms = jnp.sqrt(jnp.sum(emb_w * emb_w, axis=1, keepdims=True))
    scale = jnp.where(norms > 1.0, 1.0 / (norms + 1e-7), 1.0)
    w = emb_w * scale
    return jnp.take(w, tokens, axis=0)        # (S, B, E)


@jax.jit
def forward(tokens, params):
    x_emb = embed(tokens, params["emb"])      # (S, B, E)
    return rnn_attn_pallas(x_emb, params)     # (B, 2)


# ----------------------------------------------------------------------------
# Pure-JAX reference for verification
# ----------------------------------------------------------------------------
def rnn_attn_ref(x_emb, params):
    S, B, E = x_emb.shape
    H = HIDDEN

    def cell(x_t, h, wih, whh, bih, bhh):
        gi = x_t @ wih.T + bih
        gh = h @ whh.T + bhh
        r = jax.nn.sigmoid(gi[:, :H] + gh[:, :H])
        z = jax.nn.sigmoid(gi[:, H:2 * H] + gh[:, H:2 * H])
        n = jnp.tanh(gi[:, 2 * H:] + r * gh[:, 2 * H:])
        return (1.0 - z) * n + z * h

    h_f = jnp.zeros((B, H), jnp.float32)
    for t in range(S):
        h_f = cell(x_emb[t], h_f, params["wih_f"], params["whh_f"],
                   params["bih_f"], params["bhh_f"])
    h_b = jnp.zeros((B, H), jnp.float32)
    for t in range(S - 1, -1, -1):
        h_b = cell(x_emb[t], h_b, params["wih_b"], params["whh_b"],
                   params["bih_b"], params["bhh_b"])
    feat = jnp.concatenate([h_b, h_f], axis=1)   # cat([hidden[-1], hidden[-2]])
    return feat @ params["w_out"].T + params["b_out"]


# ----------------------------------------------------------------------------
def init_params(key):
    H, E = HIDDEN, EMB_DIM
    ks = jax.random.split(key, 12)
    std = 1.0 / math.sqrt(H)
    u = lambda k, shp, s: jax.random.uniform(k, shp, jnp.float32, -s, s)

    emb_w = jax.random.normal(ks[0], (VOCAB, E), jnp.float32)
    emb_w = emb_w.at[PAD_IDX].set(0.0)          # padding_idx row is zero

    params = {
        "emb": emb_w,
        "wih_f": u(ks[1], (3 * H, E), std), "whh_f": u(ks[2], (3 * H, H), std),
        "bih_f": u(ks[3], (3 * H,), std),   "bhh_f": u(ks[4], (3 * H,), std),
        "wih_b": u(ks[5], (3 * H, E), std), "whh_b": u(ks[6], (3 * H, H), std),
        "bih_b": u(ks[7], (3 * H,), std),   "bhh_b": u(ks[8], (3 * H,), std),
        "w_out": u(ks[9], (2, 2 * H), 1.0 / math.sqrt(2 * H)),
        "b_out": u(ks[10], (2,), 1.0 / math.sqrt(2 * H)),
    }
    return params


if __name__ == "__main__":
    key = jax.random.PRNGKey(0)
    pkey, xkey = jax.random.split(key)
    params = init_params(pkey)

    S, B = 8, 2
    # layout: x is (S, B) int32 token ids (seq-major, as consumed by nn.GRU)
    x = jax.random.randint(xkey, (S, B), 0, VOCAB, dtype=jnp.int32)

    out = forward(x, params)
    out = jax.block_until_ready(out)

    x_emb = embed(x, params["emb"])
    ref = rnn_attn_ref(x_emb, params)
    assert out.shape == (B, 2)
    assert jnp.allclose(out, ref, atol=1e-4, rtol=1e-4), (out, ref)

    print("KERNEL_OK")
</pallas_src>

<mosaic_0001>
module attributes {stable_mosaic.version = 11 : i64} {
  func.func @_rnn_attn_kernel(%arg0: memref<16x10xf32, #tpu.memory_space<vmem>>, %arg1: memref<10x768xf32, #tpu.memory_space<vmem>>, %arg2: memref<1x768xf32, #tpu.memory_space<vmem>>, %arg3: memref<128x384xf32, #tpu.memory_space<vmem>>, %arg4: memref<128x384xf32, #tpu.memory_space<vmem>>, %arg5: memref<1x128xf32, #tpu.memory_space<vmem>>, %arg6: memref<1x128xf32, #tpu.memory_space<vmem>>, %arg7: memref<256x2xf32, #tpu.memory_space<vmem>>, %arg8: memref<1x2xf32, #tpu.memory_space<vmem>>, %arg9: memref<2x2xf32, #tpu.memory_space<vmem>>) attributes {dimension_semantics = [], scalar_prefetch = 0 : i64, scratch_operands = 0 : i64, tpu.core_type = #tpu.core_type<tc>} {
    %c0 = arith.constant 0 : index
    %c0_0 = arith.constant 0 : index
    %0 = vector.load %arg0[%c0, %c0_0] : memref<16x10xf32, #tpu.memory_space<vmem>>, vector<16x10xf32>
    %c0_1 = arith.constant 0 : index
    %c0_2 = arith.constant 0 : index
    %1 = vector.load %arg1[%c0_1, %c0_2] : memref<10x768xf32, #tpu.memory_space<vmem>>, vector<10x768xf32>
    %cst = arith.constant dense<0.000000e+00> : vector<16x768xf32>
    %2 = tpu.matmul %0, %1, %cst {dimension_numbers = #tpu.dot_dimension_numbers<[1], [0], [0], [1], [0, 0, 1, 1], [], []>} : vector<16x10xf32>, vector<10x768xf32>, vector<16x768xf32> -> vector<16x768xf32>
    %c0_3 = arith.constant 0 : index
    %c0_4 = arith.constant 0 : index
    %3 = vector.load %arg2[%c0_3, %c0_4] : memref<1x768xf32, #tpu.memory_space<vmem>>, vector<1x768xf32>
    %4 = vector.broadcast %3 : vector<1x768xf32> to vector<16x768xf32>
    %5 = arith.addf %2, %4 : vector<16x768xf32>
    %c0_5 = arith.constant 0 : index
    %c0_6 = arith.constant 0 : index
    %6 = vector.load %arg5[%c0_5, %c0_6] : memref<1x128xf32, #tpu.memory_space<vmem>>, vector<1x128xf32>
    %c0_7 = arith.constant 0 : index
    %c0_8 = arith.constant 0 : index
    %7 = vector.load %arg6[%c0_7, %c0_8] : memref<1x128xf32, #tpu.memory_space<vmem>>, vector<1x128xf32>
    %cst_9 = arith.constant 0.000000e+00 : f32
    %8 = vector.broadcast %cst_9 : f32 to vector<2x128xf32>
    %cst_10 = arith.constant 0.000000e+00 : f32
    %9 = vector.broadcast %cst_10 : f32 to vector<2x128xf32>
    %10 = vector.extract_strided_slice %5 {offsets = [0, 0], sizes = [2, 384], strides = [1, 1]} : vector<16x768xf32> to vector<2x384xf32>
    %11 = vector.extract_strided_slice %5 {offsets = [14, 384], sizes = [2, 384], strides = [1, 1]} : vector<16x768xf32> to vector<2x384xf32>
    %c0_11 = arith.constant 0 : index
    %c0_12 = arith.constant 0 : index
    %12 = vector.load %arg3[%c0_11, %c0_12] : memref<128x384xf32, #tpu.memory_space<vmem>>, vector<128x384xf32>
    %cst_13 = arith.constant dense<0.000000e+00> : vector<2x384xf32>
    %13 = tpu.matmul %8, %12, %cst_13 {dimension_numbers = #tpu.dot_dimension_numbers<[1], [0], [0], [1], [0, 0, 1, 1], [], []>} : vector<2x128xf32>, vector<128x384xf32>, vector<2x384xf32> -> vector<2x384xf32>
    %c0_14 = arith.constant 0 : index
    %c0_15 = arith.constant 0 : index
    %14 = vector.load %arg4[%c0_14, %c0_15] : memref<128x384xf32, #tpu.memory_space<vmem>>, vector<128x384xf32>
    %cst_16 = arith.constant dense<0.000000e+00> : vector<2x384xf32>
    %15 = tpu.matmul %9, %14, %cst_16 {dimension_numbers = #tpu.dot_dimension_numbers<[1], [0], [0], [1], [0, 0, 1, 1], [], []>} : vector<2x128xf32>, vector<128x384xf32>, vector<2x384xf32> -> vector<2x384xf32>
    %16 = vector.extract_strided_slice %10 {offsets = [0, 0], sizes = [2, 128], strides = [1, 1]} : vector<2x384xf32> to vector<2x128xf32>
    %17 = vector.extract_strided_slice %13 {offsets = [0, 0], sizes = [2, 128], strides = [1, 1]} : vector<2x384xf32> to vector<2x128xf32>
    %18 = arith.addf %16, %17 : vector<2x128xf32>
    %19 = arith.negf %18 : vector<2x128xf32>
    %20 = math.exp %19 : vector<2x128xf32>
    %cst_17 = arith.constant 1.000000e+00 : f32
    %21 = vector.broadcast %cst_17 : f32 to vector<2x128xf32>
    %22 = arith.addf %21, %20 : vector<2x128xf32>
    %23 = arith.divf %21, %22 : vector<2x128xf32>
    %24 = vector.extract_strided_slice %10 {offsets = [0, 128], sizes = [2, 128], strides = [1, 1]} : vector<2x384xf32> to vector<2x128xf32>
    %25 = vector.extract_strided_slice %13 {offsets = [0, 128], sizes = [2, 128], strides = [1, 1]} : vector<2x384xf32> to vector<2x128xf32>
    %26 = arith.addf %24, %25 : vector<2x128xf32>
    %27 = arith.negf %26 : vector<2x128xf32>
    %28 = math.exp %27 : vector<2x128xf32>
    %cst_18 = arith.constant 1.000000e+00 : f32
    %29 = vector.broadcast %cst_18 : f32 to vector<2x128xf32>
    %30 = arith.addf %29, %28 : vector<2x128xf32>
    %31 = arith.divf %29, %30 : vector<2x128xf32>
    %32 = vector.extract_strided_slice %10 {offsets = [0, 256], sizes = [2, 128], strides = [1, 1]} : vector<2x384xf32> to vector<2x128xf32>
    %33 = vector.extract_strided_slice %13 {offsets = [0, 256], sizes = [2, 128], strides = [1, 1]} : vector<2x384xf32> to vector<2x128xf32>
    %34 = vector.broadcast %6 : vector<1x128xf32> to vector<2x128xf32>
    %35 = arith.addf %33, %34 : vector<2x128xf32>
    %36 = arith.mulf %23, %35 : vector<2x128xf32>
    %37 = arith.addf %32, %36 : vector<2x128xf32>
    %38 = math.tanh %37 : vector<2x128xf32>
    %cst_19 = arith.constant 1.000000e+00 : f32
    %39 = vector.broadcast %cst_19 : f32 to vector<2x128xf32>
    %40 = arith.subf %39, %31 : vector<2x128xf32>
    %41 = arith.mulf %40, %38 : vector<2x128xf32>
    %42 = arith.mulf %31, %8 : vector<2x128xf32>
    %43 = arith.addf %41, %42 : vector<2x128xf32>
    %44 = vector.extract_strided_slice %11 {offsets = [0, 0], sizes = [2, 128], strides = [1, 1]} : vector<2x384xf32> to vector<2x128xf32>
    %45 = vector.extract_strided_slice %15 {offsets = [0, 0], sizes = [2, 128], strides = [1, 1]} : vector<2x384xf32> to vector<2x128xf32>
    %46 = arith.addf %44, %45 : vector<2x128xf32>
    %47 = arith.negf %46 : vector<2x128xf32>
    %48 = math.exp %47 : vector<2x128xf32>
    %cst_20 = arith.constant 1.000000e+00 : f32
    %49 = vector.broadcast %cst_20 : f32 to vector<2x128xf32>
    %50 = arith.addf %49, %48 : vector<2x128xf32>
    %51 = arith.divf %49, %50 : vector<2x128xf32>
    %52 = vector.extract_strided_slice %11 {offsets = [0, 128], sizes = [2, 128], strides = [1, 1]} : vector<2x384xf32> to vector<2x128xf32>
    %53 = vector.extract_strided_slice %15 {offsets = [0, 128], sizes = [2, 128], strides = [1, 1]} : vector<2x384xf32> to vector<2x128xf32>
    %54 = arith.addf %52, %53 : vector<2x128xf32>
    %55 = arith.negf %54 : vector<2x128xf32>
    %56 = math.exp %55 : vector<2x128xf32>
    %cst_21 = arith.constant 1.000000e+00 : f32
    %57 = vector.broadcast %cst_21 : f32 to vector<2x128xf32>
    %58 = arith.addf %57, %56 : vector<2x128xf32>
    %59 = arith.divf %57, %58 : vector<2x128xf32>
    %60 = vector.extract_strided_slice %11 {offsets = [0, 256], sizes = [2, 128], strides = [1, 1]} : vector<2x384xf32> to vector<2x128xf32>
    %61 = vector.extract_strided_slice %15 {offsets = [0, 256], sizes = [2, 128], strides = [1, 1]} : vector<2x384xf32> to vector<2x128xf32>
    %62 = vector.broadcast %7 : vector<1x128xf32> to vector<2x128xf32>
    %63 = arith.addf %61, %62 : vector<2x128xf32>
    %64 = arith.mulf %51, %63 : vector<2x128xf32>
    %65 = arith.addf %60, %64 : vector<2x128xf32>
    %66 = math.tanh %65 : vector<2x128xf32>
    %cst_22 = arith.constant 1.000000e+00 : f32
    %67 = vector.broadcast %cst_22 : f32 to vector<2x128xf32>
    %68 = arith.subf %67, %59 : vector<2x128xf32>
    %69 = arith.mulf %68, %66 : vector<2x128xf32>
    %70 = arith.mulf %59, %9 : vector<2x128xf32>
    %71 = arith.addf %69, %70 : vector<2x128xf32>
    %72 = vector.extract_strided_slice %5 {offsets = [2, 0], sizes = [2, 384], strides = [1, 1]} : vector<16x768xf32> to vector<2x384xf32>
    %73 = vector.extract_strided_slice %5 {offsets = [12, 384], sizes = [2, 384], strides = [1, 1]} : vector<16x768xf32> to vector<2x384xf32>
    %c0_23 = arith.constant 0 : index
    %c0_24 = arith.constant 0 : index
    %74 = vector.load %arg3[%c0_23, %c0_24] : memref<128x384xf32, #tpu.memory_space<vmem>>, vector<128x384xf32>
    %cst_25 = arith.constant dense<0.000000e+00> : vector<2x384xf32>
    %75 = tpu.matmul %43, %74, %cst_25 {dimension_numbers = #tpu.dot_dimension_numbers<[1], [0], [0], [1], [0, 0, 1, 1], [], []>} : vector<2x128xf32>, vector<128x384xf32>, vector<2x384xf32> -> vector<2x384xf32>
    %c0_26 = arith.constant 0 : index
    %c0_27 = arith.constant 0 : index
    %76 = vector.load %arg4[%c0_26, %c0_27] : memref<128x384xf32, #tpu.memory_space<vmem>>, vector<128x384xf32>
    %cst_28 = arith.constant dense<0.000000e+00> : vector<2x384xf32>
    %77 = tpu.matmul %71, %76, %cst_28 {dimension_numbers = #tpu.dot_dimension_numbers<[1], [0], [0], [1], [0, 0, 1, 1], [], []>} : vector<2x128xf32>, vector<128x384xf32>, vector<2x384xf32> -> vector<2x384xf32>
    %78 = vector.extract_strided_slice %72 {offsets = [0, 0], sizes = [2, 128], strides = [1, 1]} : vector<2x384xf32> to vector<2x128xf32>
    %79 = vector.extract_strided_slice %75 {offsets = [0, 0], sizes = [2, 128], strides = [1, 1]} : vector<2x384xf32> to vector<2x128xf32>
    %80 = arith.addf %78, %79 : vector<2x128xf32>
    %81 = arith.negf %80 : vector<2x128xf32>
    %82 = math.exp %81 : vector<2x128xf32>
    %cst_29 = arith.constant 1.000000e+00 : f32
    %83 = vector.broadcast %cst_29 : f32 to vector<2x128xf32>
    %84 = arith.addf %83, %82 : vector<2x128xf32>
    %85 = arith.divf %83, %84 : vector<2x128xf32>
    %86 = vector.extract_strided_slice %72 {offsets = [0, 128], sizes = [2, 128], strides = [1, 1]} : vector<2x384xf32> to vector<2x128xf32>
    %87 = vector.extract_strided_slice %75 {offsets = [0, 128], sizes = [2, 128], strides = [1, 1]} : vector<2x384xf32> to vector<2x128xf32>
    %88 = arith.addf %86, %87 : vector<2x128xf32>
    %89 = arith.negf %88 : vector<2x128xf32>
    %90 = math.exp %89 : vector<2x128xf32>
    %cst_30 = arith.constant 1.000000e+00 : f32
    %91 = vector.broadcast %cst_30 : f32 to vector<2x128xf32>
    %92 = arith.addf %91, %90 : vector<2x128xf32>
    %93 = arith.divf %91, %92 : vector<2x128xf32>
    %94 = vector.extract_strided_slice %72 {offsets = [0, 256], sizes = [2, 128], strides = [1, 1]} : vector<2x384xf32> to vector<2x128xf32>
    %95 = vector.extract_strided_slice %75 {offsets = [0, 256], sizes = [2, 128], strides = [1, 1]} : vector<2x384xf32> to vector<2x128xf32>
    %96 = vector.broadcast %6 : vector<1x128xf32> to vector<2x128xf32>
    %97 = arith.addf %95, %96 : vector<2x128xf32>
    %98 = arith.mulf %85, %97 : vector<2x128xf32>
    %99 = arith.addf %94, %98 : vector<2x128xf32>
    %100 = math.tanh %99 : vector<2x128xf32>
    %cst_31 = arith.constant 1.000000e+00 : f32
    %101 = vector.broadcast %cst_31 : f32 to vector<2x128xf32>
    %102 = arith.subf %101, %93 : vector<2x128xf32>
    %103 = arith.mulf %102, %100 : vector<2x128xf32>
    %104 = arith.mulf %93, %43 : vector<2x128xf32>
    %105 = arith.addf %103, %104 : vector<2x128xf32>
    %106 = vector.extract_strided_slice %73 {offsets = [0, 0], sizes = [2, 128], strides = [1, 1]} : vector<2x384xf32> to vector<2x128xf32>
    %107 = vector.extract_strided_slice %77 {offsets = [0, 0], sizes = [2, 128], strides = [1, 1]} : vector<2x384xf32> to vector<2x128xf32>
    %108 = arith.addf %106, %107 : vector<2x128xf32>
    %109 = arith.negf %108 : vector<2x128xf32>
    %110 = math.exp %109 : vector<2x128xf32>
    %cst_32 = arith.constant 1.000000e+00 : f32
    %111 = vector.broadcast %cst_32 : f32 to vector<2x128xf32>
    %112 = arith.addf %111, %110 : vector<2x128xf32>
    %113 = arith.divf %111, %112 : vector<2x128xf32>
    %114 = vector.extract_strided_slice %73 {offsets = [0, 128], sizes = [2, 128], strides = [1, 1]} : vector<2x384xf32> to vector<2x128xf32>
    %115 = vector.extract_strided_slice %77 {offsets = [0, 128], sizes = [2, 128], strides = [1, 1]} : vector<2x384xf32> to vector<2x128xf32>
    %116 = arith.addf %114, %115 : vector<2x128xf32>
    %117 = arith.negf %116 : vector<2x128xf32>
    %118 = math.exp %117 : vector<2x128xf32>
    %cst_33 = arith.constant 1.000000e+00 : f32
    %119 = vector.broadcast %cst_33 : f32 to vector<2x128xf32>
    %120 = arith.addf %119, %118 : vector<2x128xf32>
    %121 = arith.divf %119, %120 : vector<2x128xf32>
    %122 = vector.extract_strided_slice %73 {offsets = [0, 256], sizes = [2, 128], strides = [1, 1]} : vector<2x384xf32> to vector<2x128xf32>
    %123 = vector.extract_strided_slice %77 {offsets = [0, 256], sizes = [2, 128], strides = [1, 1]} : vector<2x384xf32> to vector<2x128xf32>
    %124 = vector.broadcast %7 : vector<1x128xf32> to vector<2x128xf32>
    %125 = arith.addf %123, %124 : vector<2x128xf32>
    %126 = arith.mulf %113, %125 : vector<2x128xf32>
    %127 = arith.addf %122, %126 : vector<2x128xf32>
    %128 = math.tanh %127 : vector<2x128xf32>
    %cst_34 = arith.constant 1.000000e+00 : f32
    %129 = vector.broadcast %cst_34 : f32 to vector<2x128xf32>
    %130 = arith.subf %129, %121 : vector<2x128xf32>
    %131 = arith.mulf %130, %128 : vector<2x128xf32>
    %132 = arith.mulf %121, %71 : vector<2x128xf32>
    %133 = arith.addf %131, %132 : vector<2x128xf32>
    %134 = vector.extract_strided_slice %5 {offsets = [4, 0], sizes = [2, 384], strides = [1, 1]} : vector<16x768xf32> to vector<2x384xf32>
    %135 = vector.extract_strided_slice %5 {offsets = [10, 384], sizes = [2, 384], strides = [1, 1]} : vector<16x768xf32> to vector<2x384xf32>
    %c0_35 = arith.constant 0 : index
    %c0_36 = arith.constant 0 : index
    %136 = vector.load %arg3[%c0_35, %c0_36] : memref<128x384xf32, #tpu.memory_space<vmem>>, vector<128x384xf32>
    %cst_37 = arith.constant dense<0.000000e+00> : vector<2x384xf32>
    %137 = tpu.matmul %105, %136, %cst_37 {dimension_numbers = #tpu.dot_dimension_numbers<[1], [0], [0], [1], [0, 0, 1, 1], [], []>} : vector<2x128xf32>, vector<128x384xf32>, vector<2x384xf32> -> vector<2x384xf32>
    %c0_38 = arith.constant 0 : index
    %c0_39 = arith.constant 0 : index
    %138 = vector.load %arg4[%c0_38, %c0_39] : memref<128x384xf32, #tpu.memory_space<vmem>>, vector<128x384xf32>
    %cst_40 = arith.constant dense<0.000000e+00> : vector<2x384xf32>
    %139 = tpu.matmul %133, %138, %cst_40 {dimension_numbers = #tpu.dot_dimension_numbers<[1], [0], [0], [1], [0, 0, 1, 1], [], []>} : vector<2x128xf32>, vector<128x384xf32>, vector<2x384xf32> -> vector<2x384xf32>
    %140 = vector.extract_strided_slice %134 {offsets = [0, 0], sizes = [2, 128], strides = [1, 1]} : vector<2x384xf32> to vector<2x128xf32>
    %141 = vector.extract_strided_slice %137 {offsets = [0, 0], sizes = [2, 128], strides = [1, 1]} : vector<2x384xf32> to vector<2x128xf32>
    %142 = arith.addf %140, %141 : vector<2x128xf32>
    %143 = arith.negf %142 : vector<2x128xf32>
    %144 = math.exp %143 : vector<2x128xf32>
    %cst_41 = arith.constant 1.000000e+00 : f32
    %145 = vector.broadcast %cst_41 : f32 to vector<2x128xf32>
    %146 = arith.addf %145, %144 : vector<2x128xf32>
    %147 = arith.divf %145, %146 : vector<2x128xf32>
    %148 = vector.extract_strided_slice %134 {offsets = [0, 128], sizes = [2, 128], strides = [1, 1]} : vector<2x384xf32> to vector<2x128xf32>
    %149 = vector.extract_strided_slice %137 {offsets = [0, 128], sizes = [2, 128], strides = [1, 1]} : vector<2x384xf32> to vector<2x128xf32>
    %150 = arith.addf %148, %149 : vector<2x128xf32>
    %151 = arith.negf %150 : vector<2x128xf32>
    %152 = math.exp %151 : vector<2x128xf32>
    %cst_42 = arith.constant 1.000000e+00 : f32
    %153 = vector.broadcast %cst_42 : f32 to vector<2x128xf32>
    %154 = arith.addf %153, %152 : vector<2x128xf32>
    %155 = arith.divf %153, %154 : vector<2x128xf32>
    %156 = vector.extract_strided_slice %134 {offsets = [0, 256], sizes = [2, 128], strides = [1, 1]} : vector<2x384xf32> to vector<2x128xf32>
    %157 = vector.extract_strided_slice %137 {offsets = [0, 256], sizes = [2, 128], strides = [1, 1]} : vector<2x384xf32> to vector<2x128xf32>
    %158 = vector.broadcast %6 : vector<1x128xf32> to vector<2x128xf32>
    %159 = arith.addf %157, %158 : vector<2x128xf32>
    %160 = arith.mulf %147, %159 : vector<2x128xf32>
    %161 = arith.addf %156, %160 : vector<2x128xf32>
    %162 = math.tanh %161 : vector<2x128xf32>
    %cst_43 = arith.constant 1.000000e+00 : f32
    %163 = vector.broadcast %cst_43 : f32 to vector<2x128xf32>
    %164 = arith.subf %163, %155 : vector<2x128xf32>
    %165 = arith.mulf %164, %162 : vector<2x128xf32>
    %166 = arith.mulf %155, %105 : vector<2x128xf32>
    %167 = arith.addf %165, %166 : vector<2x128xf32>
    %168 = vector.extract_strided_slice %135 {offsets = [0, 0], sizes = [2, 128], strides = [1, 1]} : vector<2x384xf32> to vector<2x128xf32>
    %169 = vector.extract_strided_slice %139 {offsets = [0, 0], sizes = [2, 128], strides = [1, 1]} : vector<2x384xf32> to vector<2x128xf32>
    %170 = arith.addf %168, %169 : vector<2x128xf32>
    %171 = arith.negf %170 : vector<2x128xf32>
    %172 = math.exp %171 : vector<2x128xf32>
    %cst_44 = arith.constant 1.000000e+00 : f32
    %173 = vector.broadcast %cst_44 : f32 to vector<2x128xf32>
    %174 = arith.addf %173, %172 : vector<2x128xf32>
    %175 = arith.divf %173, %174 : vector<2x128xf32>
    %176 = vector.extract_strided_slice %135 {offsets = [0, 128], sizes = [2, 128], strides = [1, 1]} : vector<2x384xf32> to vector<2x128xf32>
    %177 = vector.extract_strided_slice %139 {offsets = [0, 128], sizes = [2, 128], strides = [1, 1]} : vector<2x384xf32> to vector<2x128xf32>
    %178 = arith.addf %176, %177 : vector<2x128xf32>
    %179 = arith.negf %178 : vector<2x128xf32>
    %180 = math.exp %179 : vector<2x128xf32>
    %cst_45 = arith.constant 1.000000e+00 : f32
    %181 = vector.broadcast %cst_45 : f32 to vector<2x128xf32>
    %182 = arith.addf %181, %180 : vector<2x128xf32>
    %183 = arith.divf %181, %182 : vector<2x128xf32>
    %184 = vector.extract_strided_slice %135 {offsets = [0, 256], sizes = [2, 128], strides = [1, 1]} : vector<2x384xf32> to vector<2x128xf32>
    %185 = vector.extract_strided_slice %139 {offsets = [0, 256], sizes = [2, 128], strides = [1, 1]} : vector<2x384xf32> to vector<2x128xf32>
    %186 = vector.broadcast %7 : vector<1x128xf32> to vector<2x128xf32>
    %187 = arith.addf %185, %186 : vector<2x128xf32>
    %188 = arith.mulf %175, %187 : vector<2x128xf32>
    %189 = arith.addf %184, %188 : vector<2x128xf32>
    %190 = math.tanh %189 : vector<2x128xf32>
    %cst_46 = arith.constant 1.000000e+00 : f32
    %191 = vector.broadcast %cst_46 : f32 to vector<2x128xf32>
    %192 = arith.subf %191, %183 : vector<2x128xf32>
    %193 = arith.mulf %192, %190 : vector<2x128xf32>
    %194 = arith.mulf %183, %133 : vector<2x128xf32>
    %195 = arith.addf %193, %194 : vector<2x128xf32>
    %196 = vector.extract_strided_slice %5 {offsets = [6, 0], sizes = [2, 384], strides = [1, 1]} : vector<16x768xf32> to vector<2x384xf32>
    %197 = vector.extract_strided_slice %5 {offsets = [8, 384], sizes = [2, 384], strides = [1, 1]} : vector<16x768xf32> to vector<2x384xf32>
    %c0_47 = arith.constant 0 : index
    %c0_48 = arith.constant 0 : index
    %198 = vector.load %arg3[%c0_47, %c0_48] : memref<128x384xf32, #tpu.memory_space<vmem>>, vector<128x384xf32>
    %cst_49 = arith.constant dense<0.000000e+00> : vector<2x384xf32>
    %199 = tpu.matmul %167, %198, %cst_49 {dimension_numbers = #tpu.dot_dimension_numbers<[1], [0], [0], [1], [0, 0, 1, 1], [], []>} : vector<2x128xf32>, vector<128x384xf32>, vector<2x384xf32> -> vector<2x384xf32>
    %c0_50 = arith.constant 0 : index
    %c0_51 = arith.constant 0 : index
    %200 = vector.load %arg4[%c0_50, %c0_51] : memref<128x384xf32, #tpu.memory_space<vmem>>, vector<128x384xf32>
    %cst_52 = arith.constant dense<0.000000e+00> : vector<2x384xf32>
    %201 = tpu.matmul %195, %200, %cst_52 {dimension_numbers = #tpu.dot_dimension_numbers<[1], [0], [0], [1], [0, 0, 1, 1], [], []>} : vector<2x128xf32>, vector<128x384xf32>, vector<2x384xf32> -> vector<2x384xf32>
    %202 = vector.extract_strided_slice %196 {offsets = [0, 0], sizes = [2, 128], strides = [1, 1]} : vector<2x384xf32> to vector<2x128xf32>
    %203 = vector.extract_strided_slice %199 {offsets = [0, 0], sizes = [2, 128], strides = [1, 1]} : vector<2x384xf32> to vector<2x128xf32>
    %204 = arith.addf %202, %203 : vector<2x128xf32>
    %205 = arith.negf %204 : vector<2x128xf32>
    %206 = math.exp %205 : vector<2x128xf32>
    %cst_53 = arith.constant 1.000000e+00 : f32
    %207 = vector.broadcast %cst_53 : f32 to vector<2x128xf32>
    %208 = arith.addf %207, %206 : vector<2x128xf32>
    %209 = arith.divf %207, %208 : vector<2x128xf32>
    %210 = vector.extract_strided_slice %196 {offsets = [0, 128], sizes = [2, 128], strides = [1, 1]} : vector<2x384xf32> to vector<2x128xf32>
    %211 = vector.extract_strided_slice %199 {offsets = [0, 128], sizes = [2, 128], strides = [1, 1]} : vector<2x384xf32> to vector<2x128xf32>
    %212 = arith.addf %210, %211 : vector<2x128xf32>
    %213 = arith.negf %212 : vector<2x128xf32>
    %214 = math.exp %213 : vector<2x128xf32>
    %cst_54 = arith.constant 1.000000e+00 : f32
    %215 = vector.broadcast %cst_54 : f32 to vector<2x128xf32>
    %216 = arith.addf %215, %214 : vector<2x128xf32>
    %217 = arith.divf %215, %216 : vector<2x128xf32>
    %218 = vector.extract_strided_slice %196 {offsets = [0, 256], sizes = [2, 128], strides = [1, 1]} : vector<2x384xf32> to vector<2x128xf32>
    %219 = vector.extract_strided_slice %199 {offsets = [0, 256], sizes = [2, 128], strides = [1, 1]} : vector<2x384xf32> to vector<2x128xf32>
    %220 = vector.broadcast %6 : vector<1x128xf32> to vector<2x128xf32>
    %221 = arith.addf %219, %220 : vector<2x128xf32>
    %222 = arith.mulf %209, %221 : vector<2x128xf32>
    %223 = arith.addf %218, %222 : vector<2x128xf32>
    %224 = math.tanh %223 : vector<2x128xf32>
    %cst_55 = arith.constant 1.000000e+00 : f32
    %225 = vector.broadcast %cst_55 : f32 to vector<2x128xf32>
    %226 = arith.subf %225, %217 : vector<2x128xf32>
    %227 = arith.mulf %226, %224 : vector<2x128xf32>
    %228 = arith.mulf %217, %167 : vector<2x128xf32>
    %229 = arith.addf %227, %228 : vector<2x128xf32>
    %230 = vector.extract_strided_slice %197 {offsets = [0, 0], sizes = [2, 128], strides = [1, 1]} : vector<2x384xf32> to vector<2x128xf32>
    %231 = vector.extract_strided_slice %201 {offsets = [0, 0], sizes = [2, 128], strides = [1, 1]} : vector<2x384xf32> to vector<2x128xf32>
    %232 = arith.addf %230, %231 : vector<2x128xf32>
    %233 = arith.negf %232 : vector<2x128xf32>
    %234 = math.exp %233 : vector<2x128xf32>
    %cst_56 = arith.constant 1.000000e+00 : f32
    %235 = vector.broadcast %cst_56 : f32 to vector<2x128xf32>
    %236 = arith.addf %235, %234 : vector<2x128xf32>
    %237 = arith.divf %235, %236 : vector<2x128xf32>
    %238 = vector.extract_strided_slice %197 {offsets = [0, 128], sizes = [2, 128], strides = [1, 1]} : vector<2x384xf32> to vector<2x128xf32>
    %239 = vector.extract_strided_slice %201 {offsets = [0, 128], sizes = [2, 128], strides = [1, 1]} : vector<2x384xf32> to vector<2x128xf32>
    %240 = arith.addf %238, %239 : vector<2x128xf32>
    %241 = arith.negf %240 : vector<2x128xf32>
    %242 = math.exp %241 : vector<2x128xf32>
    %cst_57 = arith.constant 1.000000e+00 : f32
    %243 = vector.broadcast %cst_57 : f32 to vector<2x128xf32>
    %244 = arith.addf %243, %242 : vector<2x128xf32>
    %245 = arith.divf %243, %244 : vector<2x128xf32>
    %246 = vector.extract_strided_slice %197 {offsets = [0, 256], sizes = [2, 128], strides = [1, 1]} : vector<2x384xf32> to vector<2x128xf32>
    %247 = vector.extract_strided_slice %201 {offsets = [0, 256], sizes = [2, 128], strides = [1, 1]} : vector<2x384xf32> to vector<2x128xf32>
    %248 = vector.broadcast %7 : vector<1x128xf32> to vector<2x128xf32>
    %249 = arith.addf %247, %248 : vector<2x128xf32>
    %250 = arith.mulf %237, %249 : vector<2x128xf32>
    %251 = arith.addf %246, %250 : vector<2x128xf32>
    %252 = math.tanh %251 : vector<2x128xf32>
    %cst_58 = arith.constant 1.000000e+00 : f32
    %253 = vector.broadcast %cst_58 : f32 to vector<2x128xf32>
    %254 = arith.subf %253, %245 : vector<2x128xf32>
    %255 = arith.mulf %254, %252 : vector<2x128xf32>
    %256 = arith.mulf %245, %195 : vector<2x128xf32>
    %257 = arith.addf %255, %256 : vector<2x128xf32>
    %258 = vector.extract_strided_slice %5 {offsets = [8, 0], sizes = [2, 384], strides = [1, 1]} : vector<16x768xf32> to vector<2x384xf32>
    %259 = vector.extract_strided_slice %5 {offsets = [6, 384], sizes = [2, 384], strides = [1, 1]} : vector<16x768xf32> to vector<2x384xf32>
    %c0_59 = arith.constant 0 : index
    %c0_60 = arith.constant 0 : index
    %260 = vector.load %arg3[%c0_59, %c0_60] : memref<128x384xf32, #tpu.memory_space<vmem>>, vector<128x384xf32>
    %cst_61 = arith.constant dense<0.000000e+00> : vector<2x384xf32>
    %261 = tpu.matmul %229, %260, %cst_61 {dimension_numbers = #tpu.dot_dimension_numbers<[1], [0], [0], [1], [0, 0, 1, 1], [], []>} : vector<2x128xf32>, vector<128x384xf32>, vector<2x384xf32> -> vector<2x384xf32>
    %c0_62 = arith.constant 0 : index
    %c0_63 = arith.constant 0 : index
    %262 = vector.load %arg4[%c0_62, %c0_63] : memref<128x384xf32, #tpu.memory_space<vmem>>, vector<128x384xf32>
    %cst_64 = arith.constant dense<0.000000e+00> : vector<2x384xf32>
    %263 = tpu.matmul %257, %262, %cst_64 {dimension_numbers = #tpu.dot_dimension_numbers<[1], [0], [0], [1], [0, 0, 1, 1], [], []>} : vector<2x128xf32>, vector<128x384xf32>, vector<2x384xf32> -> vector<2x384xf32>
    %264 = vector.extract_strided_slice %258 {offsets = [0, 0], sizes = [2, 128], strides = [1, 1]} : vector<2x384xf32> to vector<2x128xf32>
    %265 = vector.extract_strided_slice %261 {offsets = [0, 0], sizes = [2, 128], strides = [1, 1]} : vector<2x384xf32> to vector<2x128xf32>
    %266 = arith.addf %264, %265 : vector<2x128xf32>
    %267 = arith.negf %266 : vector<2x128xf32>
    %268 = math.exp %267 : vector<2x128xf32>
    %cst_65 = arith.constant 1.000000e+00 : f32
    %269 = vector.broadcast %cst_65 : f32 to vector<2x128xf32>
    %270 = arith.addf %269, %268 : vector<2x128xf32>
    %271 = arith.divf %269, %270 : vector<2x128xf32>
    %272 = vector.extract_strided_slice %258 {offsets = [0, 128], sizes = [2, 128], strides = [1, 1]} : vector<2x384xf32> to vector<2x128xf32>
    %273 = vector.extract_strided_slice %261 {offsets = [0, 128], sizes = [2, 128], strides = [1, 1]} : vector<2x384xf32> to vector<2x128xf32>
    %274 = arith.addf %272, %273 : vector<2x128xf32>
    %275 = arith.negf %274 : vector<2x128xf32>
    %276 = math.exp %275 : vector<2x128xf32>
    %cst_66 = arith.constant 1.000000e+00 : f32
    %277 = vector.broadcast %cst_66 : f32 to vector<2x128xf32>
    %278 = arith.addf %277, %276 : vector<2x128xf32>
    %279 = arith.divf %277, %278 : vector<2x128xf32>
    %280 = vector.extract_strided_slice %258 {offsets = [0, 256], sizes = [2, 128], strides = [1, 1]} : vector<2x384xf32> to vector<2x128xf32>
    %281 = vector.extract_strided_slice %261 {offsets = [0, 256], sizes = [2, 128], strides = [1, 1]} : vector<2x384xf32> to vector<2x128xf32>
    %282 = vector.broadcast %6 : vector<1x128xf32> to vector<2x128xf32>
    %283 = arith.addf %281, %282 : vector<2x128xf32>
    %284 = arith.mulf %271, %283 : vector<2x128xf32>
    %285 = arith.addf %280, %284 : vector<2x128xf32>
    %286 = math.tanh %285 : vector<2x128xf32>
    %cst_67 = arith.constant 1.000000e+00 : f32
    %287 = vector.broadcast %cst_67 : f32 to vector<2x128xf32>
    %288 = arith.subf %287, %279 : vector<2x128xf32>
    %289 = arith.mulf %288, %286 : vector<2x128xf32>
    %290 = arith.mulf %279, %229 : vector<2x128xf32>
    %291 = arith.addf %289, %290 : vector<2x128xf32>
    %292 = vector.extract_strided_slice %259 {offsets = [0, 0], sizes = [2, 128], strides = [1, 1]} : vector<2x384xf32> to vector<2x128xf32>
    %293 = vector.extract_strided_slice %263 {offsets = [0, 0], sizes = [2, 128], strides = [1, 1]} : vector<2x384xf32> to vector<2x128xf32>
    %294 = arith.addf %292, %293 : vector<2x128xf32>
    %295 = arith.negf %294 : vector<2x128xf32>
    %296 = math.exp %295 : vector<2x128xf32>
    %cst_68 = arith.constant 1.000000e+00 : f32
    %297 = vector.broadcast %cst_68 : f32 to vector<2x128xf32>
    %298 = arith.addf %297, %296 : vector<2x128xf32>
    %299 = arith.divf %297, %298 : vector<2x128xf32>
    %300 = vector.extract_strided_slice %259 {offsets = [0, 128], sizes = [2, 128], strides = [1, 1]} : vector<2x384xf32> to vector<2x128xf32>
    %301 = vector.extract_strided_slice %263 {offsets = [0, 128], sizes = [2, 128], strides = [1, 1]} : vector<2x384xf32> to vector<2x128xf32>
    %302 = arith.addf %300, %301 : vector<2x128xf32>
    %303 = arith.negf %302 : vector<2x128xf32>
    %304 = math.exp %303 : vector<2x128xf32>
    %cst_69 = arith.constant 1.000000e+00 : f32
    %305 = vector.broadcast %cst_69 : f32 to vector<2x128xf32>
    %306 = arith.addf %305, %304 : vector<2x128xf32>
    %307 = arith.divf %305, %306 : vector<2x128xf32>
    %308 = vector.extract_strided_slice %259 {offsets = [0, 256], sizes = [2, 128], strides = [1, 1]} : vector<2x384xf32> to vector<2x128xf32>
    %309 = vector.extract_strided_slice %263 {offsets = [0, 256], sizes = [2, 128], strides = [1, 1]} : vector<2x384xf32> to vector<2x128xf32>
    %310 = vector.broadcast %7 : vector<1x128xf32> to vector<2x128xf32>
    %311 = arith.addf %309, %310 : vector<2x128xf32>
    %312 = arith.mulf %299, %311 : vector<2x128xf32>
    %313 = arith.addf %308, %312 : vector<2x128xf32>
    %314 = math.tanh %313 : vector<2x128xf32>
    %cst_70 = arith.constant 1.000000e+00 : f32
    %315 = vector.broadcast %cst_70 : f32 to vector<2x128xf32>
    %316 = arith.subf %315, %307 : vector<2x128xf32>
    %317 = arith.mulf %316, %314 : vector<2x128xf32>
    %318 = arith.mulf %307, %257 : vector<2x128xf32>
    %319 = arith.addf %317, %318 : vector<2x128xf32>
    %320 = vector.extract_strided_slice %5 {offsets = [10, 0], sizes = [2, 384], strides = [1, 1]} : vector<16x768xf32> to vector<2x384xf32>
    %321 = vector.extract_strided_slice %5 {offsets = [4, 384], sizes = [2, 384], strides = [1, 1]} : vector<16x768xf32> to vector<2x384xf32>
    %c0_71 = arith.constant 0 : index
    %c0_72 = arith.constant 0 : index
    %322 = vector.load %arg3[%c0_71, %c0_72] : memref<128x384xf32, #tpu.memory_space<vmem>>, vector<128x384xf32>
    %cst_73 = arith.constant dense<0.000000e+00> : vector<2x384xf32>
    %323 = tpu.matmul %291, %322, %cst_73 {dimension_numbers = #tpu.dot_dimension_numbers<[1], [0], [0], [1], [0, 0, 1, 1], [], []>} : vector<2x128xf32>, vector<128x384xf32>, vector<2x384xf32> -> vector<2x384xf32>
    %c0_74 = arith.constant 0 : index
    %c0_75 = arith.constant 0 : index
    %324 = vector.load %arg4[%c0_74, %c0_75] : memref<128x384xf32, #tpu.memory_space<vmem>>, vector<128x384xf32>
    %cst_76 = arith.constant dense<0.000000e+00> : vector<2x384xf32>
    %325 = tpu.matmul %319, %324, %cst_76 {dimension_numbers = #tpu.dot_dimension_numbers<[1], [0], [0], [1], [0, 0, 1, 1], [], []>} : vector<2x128xf32>, vector<128x384xf32>, vector<2x384xf32> -> vector<2x384xf32>
    %326 = vector.extract_strided_slice %320 {offsets = [0, 0], sizes = [2, 128], strides = [1, 1]} : vector<2x384xf32> to vector<2x128xf32>
    %327 = vector.extract_strided_slice %323 {offsets = [0, 0], sizes = [2, 128], strides = [1, 1]} : vector<2x384xf32> to vector<2x128xf32>
    %328 = arith.addf %326, %327 : vector<2x128xf32>
    %329 = arith.negf %328 : vector<2x128xf32>
    %330 = math.exp %329 : vector<2x128xf32>
    %cst_77 = arith.constant 1.000000e+00 : f32
    %331 = vector.broadcast %cst_77 : f32 to vector<2x128xf32>
    %332 = arith.addf %331, %330 : vector<2x128xf32>
    %333 = arith.divf %331, %332 : vector<2x128xf32>
    %334 = vector.extract_strided_slice %320 {offsets = [0, 128], sizes = [2, 128], strides = [1, 1]} : vector<2x384xf32> to vector<2x128xf32>
    %335 = vector.extract_strided_slice %323 {offsets = [0, 128], sizes = [2, 128], strides = [1, 1]} : vector<2x384xf32> to vector<2x128xf32>
    %336 = arith.addf %334, %335 : vector<2x128xf32>
    %337 = arith.negf %336 : vector<2x128xf32>
    %338 = math.exp %337 : vector<2x128xf32>
    %cst_78 = arith.constant 1.000000e+00 : f32
    %339 = vector.broadcast %cst_78 : f32 to vector<2x128xf32>
    %340 = arith.addf %339, %338 : vector<2x128xf32>
    %341 = arith.divf %339, %340 : vector<2x128xf32>
    %342 = vector.extract_strided_slice %320 {offsets = [0, 256], sizes = [2, 128], strides = [1, 1]} : vector<2x384xf32> to vector<2x128xf32>
    %343 = vector.extract_strided_slice %323 {offsets = [0, 256], sizes = [2, 128], strides = [1, 1]} : vector<2x384xf32> to vector<2x128xf32>
    %344 = vector.broadcast %6 : vector<1x128xf32> to vector<2x128xf32>
    %345 = arith.addf %343, %344 : vector<2x128xf32>
    %346 = arith.mulf %333, %345 : vector<2x128xf32>
    %347 = arith.addf %342, %346 : vector<2x128xf32>
    %348 = math.tanh %347 : vector<2x128xf32>
    %cst_79 = arith.constant 1.000000e+00 : f32
    %349 = vector.broadcast %cst_79 : f32 to vector<2x128xf32>
    %350 = arith.subf %349, %341 : vector<2x128xf32>
    %351 = arith.mulf %350, %348 : vector<2x128xf32>
    %352 = arith.mulf %341, %291 : vector<2x128xf32>
    %353 = arith.addf %351, %352 : vector<2x128xf32>
    %354 = vector.extract_strided_slice %321 {offsets = [0, 0], sizes = [2, 128], strides = [1, 1]} : vector<2x384xf32> to vector<2x128xf32>
    %355 = vector.extract_strided_slice %325 {offsets = [0, 0], sizes = [2, 128], strides = [1, 1]} : vector<2x384xf32> to vector<2x128xf32>
    %356 = arith.addf %354, %355 : vector<2x128xf32>
    %357 = arith.negf %356 : vector<2x128xf32>
    %358 = math.exp %357 : vector<2x128xf32>
    %cst_80 = arith.constant 1.000000e+00 : f32
    %359 = vector.broadcast %cst_80 : f32 to vector<2x128xf32>
    %360 = arith.addf %359, %358 : vector<2x128xf32>
    %361 = arith.divf %359, %360 : vector<2x128xf32>
    %362 = vector.extract_strided_slice %321 {offsets = [0, 128], sizes = [2, 128], strides = [1, 1]} : vector<2x384xf32> to vector<2x128xf32>
    %363 = vector.extract_strided_slice %325 {offsets = [0, 128], sizes = [2, 128], strides = [1, 1]} : vector<2x384xf32> to vector<2x128xf32>
    %364 = arith.addf %362, %363 : vector<2x128xf32>
    %365 = arith.negf %364 : vector<2x128xf32>
    %366 = math.exp %365 : vector<2x128xf32>
    %cst_81 = arith.constant 1.000000e+00 : f32
    %367 = vector.broadcast %cst_81 : f32 to vector<2x128xf32>
    %368 = arith.addf %367, %366 : vector<2x128xf32>
    %369 = arith.divf %367, %368 : vector<2x128xf32>
    %370 = vector.extract_strided_slice %321 {offsets = [0, 256], sizes = [2, 128], strides = [1, 1]} : vector<2x384xf32> to vector<2x128xf32>
    %371 = vector.extract_strided_slice %325 {offsets = [0, 256], sizes = [2, 128], strides = [1, 1]} : vector<2x384xf32> to vector<2x128xf32>
    %372 = vector.broadcast %7 : vector<1x128xf32> to vector<2x128xf32>
    %373 = arith.addf %371, %372 : vector<2x128xf32>
    %374 = arith.mulf %361, %373 : vector<2x128xf32>
    %375 = arith.addf %370, %374 : vector<2x128xf32>
    %376 = math.tanh %375 : vector<2x128xf32>
    %cst_82 = arith.constant 1.000000e+00 : f32
    %377 = vector.broadcast %cst_82 : f32 to vector<2x128xf32>
    %378 = arith.subf %377, %369 : vector<2x128xf32>
    %379 = arith.mulf %378, %376 : vector<2x128xf32>
    %380 = arith.mulf %369, %319 : vector<2x128xf32>
    %381 = arith.addf %379, %380 : vector<2x128xf32>
    %382 = vector.extract_strided_slice %5 {offsets = [12, 0], sizes = [2, 384], strides = [1, 1]} : vector<16x768xf32> to vector<2x384xf32>
    %383 = vector.extract_strided_slice %5 {offsets = [2, 384], sizes = [2, 384], strides = [1, 1]} : vector<16x768xf32> to vector<2x384xf32>
    %c0_83 = arith.constant 0 : index
    %c0_84 = arith.constant 0 : index
    %384 = vector.load %arg3[%c0_83, %c0_84] : memref<128x384xf32, #tpu.memory_space<vmem>>, vector<128x384xf32>
    %cst_85 = arith.constant dense<0.000000e+00> : vector<2x384xf32>
    %385 = tpu.matmul %353, %384, %cst_85 {dimension_numbers = #tpu.dot_dimension_numbers<[1], [0], [0], [1], [0, 0, 1, 1], [], []>} : vector<2x128xf32>, vector<128x384xf32>, vector<2x384xf32> -> vector<2x384xf32>
    %c0_86 = arith.constant 0 : index
    %c0_87 = arith.constant 0 : index
    %386 = vector.load %arg4[%c0_86, %c0_87] : memref<128x384xf32, #tpu.memory_space<vmem>>, vector<128x384xf32>
    %cst_88 = arith.constant dense<0.000000e+00> : vector<2x384xf32>
    %387 = tpu.matmul %381, %386, %cst_88 {dimension_numbers = #tpu.dot_dimension_numbers<[1], [0], [0], [1], [0, 0, 1, 1], [], []>} : vector<2x128xf32>, vector<128x384xf32>, vector<2x384xf32> -> vector<2x384xf32>
    %388 = vector.extract_strided_slice %382 {offsets = [0, 0], sizes = [2, 128], strides = [1, 1]} : vector<2x384xf32> to vector<2x128xf32>
    %389 = vector.extract_strided_slice %385 {offsets = [0, 0], sizes = [2, 128], strides = [1, 1]} : vector<2x384xf32> to vector<2x128xf32>
    %390 = arith.addf %388, %389 : vector<2x128xf32>
    %391 = arith.negf %390 : vector<2x128xf32>
    %392 = math.exp %391 : vector<2x128xf32>
    %cst_89 = arith.constant 1.000000e+00 : f32
    %393 = vector.broadcast %cst_89 : f32 to vector<2x128xf32>
    %394 = arith.addf %393, %392 : vector<2x128xf32>
    %395 = arith.divf %393, %394 : vector<2x128xf32>
    %396 = vector.extract_strided_slice %382 {offsets = [0, 128], sizes = [2, 128], strides = [1, 1]} : vector<2x384xf32> to vector<2x128xf32>
    %397 = vector.extract_strided_slice %385 {offsets = [0, 128], sizes = [2, 128], strides = [1, 1]} : vector<2x384xf32> to vector<2x128xf32>
    %398 = arith.addf %396, %397 : vector<2x128xf32>
    %399 = arith.negf %398 : vector<2x128xf32>
    %400 = math.exp %399 : vector<2x128xf32>
    %cst_90 = arith.constant 1.000000e+00 : f32
    %401 = vector.broadcast %cst_90 : f32 to vector<2x128xf32>
    %402 = arith.addf %401, %400 : vector<2x128xf32>
    %403 = arith.divf %401, %402 : vector<2x128xf32>
    %404 = vector.extract_strided_slice %382 {offsets = [0, 256], sizes = [2, 128], strides = [1, 1]} : vector<2x384xf32> to vector<2x128xf32>
    %405 = vector.extract_strided_slice %385 {offsets = [0, 256], sizes = [2, 128], strides = [1, 1]} : vector<2x384xf32> to vector<2x128xf32>
    %406 = vector.broadcast %6 : vector<1x128xf32> to vector<2x128xf32>
    %407 = arith.addf %405, %406 : vector<2x128xf32>
    %408 = arith.mulf %395, %407 : vector<2x128xf32>
    %409 = arith.addf %404, %408 : vector<2x128xf32>
    %410 = math.tanh %409 : vector<2x128xf32>
    %cst_91 = arith.constant 1.000000e+00 : f32
    %411 = vector.broadcast %cst_91 : f32 to vector<2x128xf32>
    %412 = arith.subf %411, %403 : vector<2x128xf32>
    %413 = arith.mulf %412, %410 : vector<2x128xf32>
    %414 = arith.mulf %403, %353 : vector<2x128xf32>
    %415 = arith.addf %413, %414 : vector<2x128xf32>
    %416 = vector.extract_strided_slice %383 {offsets = [0, 0], sizes = [2, 128], strides = [1, 1]} : vector<2x384xf32> to vector<2x128xf32>
    %417 = vector.extract_strided_slice %387 {offsets = [0, 0], sizes = [2, 128], strides = [1, 1]} : vector<2x384xf32> to vector<2x128xf32>
    %418 = arith.addf %416, %417 : vector<2x128xf32>
    %419 = arith.negf %418 : vector<2x128xf32>
    %420 = math.exp %419 : vector<2x128xf32>
    %cst_92 = arith.constant 1.000000e+00 : f32
    %421 = vector.broadcast %cst_92 : f32 to vector<2x128xf32>
    %422 = arith.addf %421, %420 : vector<2x128xf32>
    %423 = arith.divf %421, %422 : vector<2x128xf32>
    %424 = vector.extract_strided_slice %383 {offsets = [0, 128], sizes = [2, 128], strides = [1, 1]} : vector<2x384xf32> to vector<2x128xf32>
    %425 = vector.extract_strided_slice %387 {offsets = [0, 128], sizes = [2, 128], strides = [1, 1]} : vector<2x384xf32> to vector<2x128xf32>
    %426 = arith.addf %424, %425 : vector<2x128xf32>
    %427 = arith.negf %426 : vector<2x128xf32>
    %428 = math.exp %427 : vector<2x128xf32>
    %cst_93 = arith.constant 1.000000e+00 : f32
    %429 = vector.broadcast %cst_93 : f32 to vector<2x128xf32>
    %430 = arith.addf %429, %428 : vector<2x128xf32>
    %431 = arith.divf %429, %430 : vector<2x128xf32>
    %432 = vector.extract_strided_slice %383 {offsets = [0, 256], sizes = [2, 128], strides = [1, 1]} : vector<2x384xf32> to vector<2x128xf32>
    %433 = vector.extract_strided_slice %387 {offsets = [0, 256], sizes = [2, 128], strides = [1, 1]} : vector<2x384xf32> to vector<2x128xf32>
    %434 = vector.broadcast %7 : vector<1x128xf32> to vector<2x128xf32>
    %435 = arith.addf %433, %434 : vector<2x128xf32>
    %436 = arith.mulf %423, %435 : vector<2x128xf32>
    %437 = arith.addf %432, %436 : vector<2x128xf32>
    %438 = math.tanh %437 : vector<2x128xf32>
    %cst_94 = arith.constant 1.000000e+00 : f32
    %439 = vector.broadcast %cst_94 : f32 to vector<2x128xf32>
    %440 = arith.subf %439, %431 : vector<2x128xf32>
    %441 = arith.mulf %440, %438 : vector<2x128xf32>
    %442 = arith.mulf %431, %381 : vector<2x128xf32>
    %443 = arith.addf %441, %442 : vector<2x128xf32>
    %444 = vector.extract_strided_slice %5 {offsets = [14, 0], sizes = [2, 384], strides = [1, 1]} : vector<16x768xf32> to vector<2x384xf32>
    %445 = vector.extract_strided_slice %5 {offsets = [0, 384], sizes = [2, 384], strides = [1, 1]} : vector<16x768xf32> to vector<2x384xf32>
    %c0_95 = arith.constant 0 : index
    %c0_96 = arith.constant 0 : index
    %446 = vector.load %arg3[%c0_95, %c0_96] : memref<128x384xf32, #tpu.memory_space<vmem>>, vector<128x384xf32>
    %cst_97 = arith.constant dense<0.000000e+00> : vector<2x384xf32>
    %447 = tpu.matmul %415, %446, %cst_97 {dimension_numbers = #tpu.dot_dimension_numbers<[1], [0], [0], [1], [0, 0, 1, 1], [], []>} : vector<2x128xf32>, vector<128x384xf32>, vector<2x384xf32> -> vector<2x384xf32>
    %c0_98 = arith.constant 0 : index
    %c0_99 = arith.constant 0 : index
    %448 = vector.load %arg4[%c0_98, %c0_99] : memref<128x384xf32, #tpu.memory_space<vmem>>, vector<128x384xf32>
    %cst_100 = arith.constant dense<0.000000e+00> : vector<2x384xf32>
    %449 = tpu.matmul %443, %448, %cst_100 {dimension_numbers = #tpu.dot_dimension_numbers<[1], [0], [0], [1], [0, 0, 1, 1], [], []>} : vector<2x128xf32>, vector<128x384xf32>, vector<2x384xf32> -> vector<2x384xf32>
    %450 = vector.extract_strided_slice %444 {offsets = [0, 0], sizes = [2, 128], strides = [1, 1]} : vector<2x384xf32> to vector<2x128xf32>
    %451 = vector.extract_strided_slice %447 {offsets = [0, 0], sizes = [2, 128], strides = [1, 1]} : vector<2x384xf32> to vector<2x128xf32>
    %452 = arith.addf %450, %451 : vector<2x128xf32>
    %453 = arith.negf %452 : vector<2x128xf32>
    %454 = math.exp %453 : vector<2x128xf32>
    %cst_101 = arith.constant 1.000000e+00 : f32
    %455 = vector.broadcast %cst_101 : f32 to vector<2x128xf32>
    %456 = arith.addf %455, %454 : vector<2x128xf32>
    %457 = arith.divf %455, %456 : vector<2x128xf32>
    %458 = vector.extract_strided_slice %444 {offsets = [0, 128], sizes = [2, 128], strides = [1, 1]} : vector<2x384xf32> to vector<2x128xf32>
    %459 = vector.extract_strided_slice %447 {offsets = [0, 128], sizes = [2, 128], strides = [1, 1]} : vector<2x384xf32> to vector<2x128xf32>
    %460 = arith.addf %458, %459 : vector<2x128xf32>
    %461 = arith.negf %460 : vector<2x128xf32>
    %462 = math.exp %461 : vector<2x128xf32>
    %cst_102 = arith.constant 1.000000e+00 : f32
    %463 = vector.broadcast %cst_102 : f32 to vector<2x128xf32>
    %464 = arith.addf %463, %462 : vector<2x128xf32>
    %465 = arith.divf %463, %464 : vector<2x128xf32>
    %466 = vector.extract_strided_slice %444 {offsets = [0, 256], sizes = [2, 128], strides = [1, 1]} : vector<2x384xf32> to vector<2x128xf32>
    %467 = vector.extract_strided_slice %447 {offsets = [0, 256], sizes = [2, 128], strides = [1, 1]} : vector<2x384xf32> to vector<2x128xf32>
    %468 = vector.broadcast %6 : vector<1x128xf32> to vector<2x128xf32>
    %469 = arith.addf %467, %468 : vector<2x128xf32>
    %470 = arith.mulf %457, %469 : vector<2x128xf32>
    %471 = arith.addf %466, %470 : vector<2x128xf32>
    %472 = math.tanh %471 : vector<2x128xf32>
    %cst_103 = arith.constant 1.000000e+00 : f32
    %473 = vector.broadcast %cst_103 : f32 to vector<2x128xf32>
    %474 = arith.subf %473, %465 : vector<2x128xf32>
    %475 = arith.mulf %474, %472 : vector<2x128xf32>
    %476 = arith.mulf %465, %415 : vector<2x128xf32>
    %477 = arith.addf %475, %476 : vector<2x128xf32>
    %478 = vector.extract_strided_slice %445 {offsets = [0, 0], sizes = [2, 128], strides = [1, 1]} : vector<2x384xf32> to vector<2x128xf32>
    %479 = vector.extract_strided_slice %449 {offsets = [0, 0], sizes = [2, 128], strides = [1, 1]} : vector<2x384xf32> to vector<2x128xf32>
    %480 = arith.addf %478, %479 : vector<2x128xf32>
    %481 = arith.negf %480 : vector<2x128xf32>
    %482 = math.exp %481 : vector<2x128xf32>
    %cst_104 = arith.constant 1.000000e+00 : f32
    %483 = vector.broadcast %cst_104 : f32 to vector<2x128xf32>
    %484 = arith.addf %483, %482 : vector<2x128xf32>
    %485 = arith.divf %483, %484 : vector<2x128xf32>
    %486 = vector.extract_strided_slice %445 {offsets = [0, 128], sizes = [2, 128], strides = [1, 1]} : vector<2x384xf32> to vector<2x128xf32>
    %487 = vector.extract_strided_slice %449 {offsets = [0, 128], sizes = [2, 128], strides = [1, 1]} : vector<2x384xf32> to vector<2x128xf32>
    %488 = arith.addf %486, %487 : vector<2x128xf32>
    %489 = arith.negf %488 : vector<2x128xf32>
    %490 = math.exp %489 : vector<2x128xf32>
    %cst_105 = arith.constant 1.000000e+00 : f32
    %491 = vector.broadcast %cst_105 : f32 to vector<2x128xf32>
    %492 = arith.addf %491, %490 : vector<2x128xf32>
    %493 = arith.divf %491, %492 : vector<2x128xf32>
    %494 = vector.extract_strided_slice %445 {offsets = [0, 256], sizes = [2, 128], strides = [1, 1]} : vector<2x384xf32> to vector<2x128xf32>
    %495 = vector.extract_strided_slice %449 {offsets = [0, 256], sizes = [2, 128], strides = [1, 1]} : vector<2x384xf32> to vector<2x128xf32>
    %496 = vector.broadcast %7 : vector<1x128xf32> to vector<2x128xf32>
    %497 = arith.addf %495, %496 : vector<2x128xf32>
    %498 = arith.mulf %485, %497 : vector<2x128xf32>
    %499 = arith.addf %494, %498 : vector<2x128xf32>
    %500 = math.tanh %499 : vector<2x128xf32>
    %cst_106 = arith.constant 1.000000e+00 : f32
    %501 = vector.broadcast %cst_106 : f32 to vector<2x128xf32>
    %502 = arith.subf %501, %493 : vector<2x128xf32>
    %503 = arith.mulf %502, %500 : vector<2x128xf32>
    %504 = arith.mulf %493, %443 : vector<2x128xf32>
    %505 = arith.addf %503, %504 : vector<2x128xf32>
    %506 = tpu.concatenate %505, %477 in 1 : vector<2x128xf32>, vector<2x128xf32> -> vector<2x256xf32>
    %c0_107 = arith.constant 0 : index
    %c0_108 = arith.constant 0 : index
    %507 = vector.load %arg7[%c0_107, %c0_108] : memref<256x2xf32, #tpu.memory_space<vmem>>, vector<256x2xf32>
    %cst_109 = arith.constant dense<0.000000e+00> : vector<2x2xf32>
    %508 = tpu.matmul %506, %507, %cst_109 {dimension_numbers = #tpu.dot_dimension_numbers<[1], [0], [0], [1], [0, 0, 1, 1], [], []>} : vector<2x256xf32>, vector<256x2xf32>, vector<2x2xf32> -> vector<2x2xf32>
    %c0_110 = arith.constant 0 : index
    %c0_111 = arith.constant 0 : index
    %509 = vector.load %arg8[%c0_110, %c0_111] : memref<1x2xf32, #tpu.memory_space<vmem>>, vector<1x2xf32>
    %510 = vector.broadcast %509 : vector<1x2xf32> to vector<2x2xf32>
    %511 = arith.addf %508, %510 : vector<2x2xf32>
    %c0_112 = arith.constant 0 : index
    %c0_113 = arith.constant 0 : index
    %512 = vector.load %arg9[%c0_112, %c0_113] : memref<2x2xf32, #tpu.memory_space<vmem>>, vector<2x2xf32>
    tpu.vector_store %arg9[%c0_112, %c0_113], %511 {strides = array<i32>} : memref<2x2xf32, #tpu.memory_space<vmem>>, vector<2x2xf32>,
    return
  }
}

</mosaic_0001>

<llo_original>
// kernel: forward.1
$region0: #{forward.1}
  #allocation0 [shape = 'u32[]', space=smem, size = 0x4, offset = 0x4, fixed_abs, tag = 'smem constant byte address 0x4 - core index']
  #allocation1 [shape = 'u32[144,128]{1,0:T(1,128)}', space=vmem, size = 0x12000, scoped, tag = 'internal scratch']
  %s0 = inlined_call_operand.vmem [shape: f32[16,10], index: 0, kind: input, shape index: {}]
  %s1 = inlined_call_operand.vmem [shape: f32[10,768], index: 1, kind: input, shape index: {}]
  %s2 = inlined_call_operand.vmem [shape: f32[1,768], index: 2, kind: input, shape index: {}]
  %s3 = inlined_call_operand.vmem [shape: f32[128,384], index: 3, kind: input, shape index: {}]
  %s4 = inlined_call_operand.vmem [shape: f32[128,384], index: 4, kind: input, shape index: {}]
  %s5 = inlined_call_operand.vmem [shape: f32[1,128], index: 5, kind: input, shape index: {}]
  %s6 = inlined_call_operand.vmem [shape: f32[1,128], index: 6, kind: input, shape index: {}]
  %s7 = inlined_call_operand.vmem [shape: f32[256,2], index: 7, kind: input, shape index: {}]
  %s8 = inlined_call_operand.vmem [shape: f32[1,2], index: 8, kind: input, shape index: {}]
  %s9 = inlined_call_operand.hbm [shape: f32[2,2], index: 9, kind: output, shape index: {}]
  %s10 = sld [smem:[#allocation0]]
  $region46: #{forward.1} parent=0
    _
  %s12 = ssub.s32 1, %s10
  %s13 = scalar_select 0, %s12, %s10
  $region1: #{forward.1} parent=0
    #allocation2 [shape = 'u8[1024]{0}', space=vmem, size = 0x400, scoped, tag = 'output window, operand 0, single buffered']
    #allocation3 [shape = 's32[1]{0}', space=sflag, size = 0x4, scoped, tag = 'scoped memory for forward.1']
    %14 = vsyncpa [#allocation3], 0
    // Predicated region
    $region2: #{forward.1} parent=1 // pred_check
      _
    $region3: #{forward.1} parent=1 // pred_check_branch
      %16 = sbr.rel (0) target = $region5
    $region4: #{forward.1} parent=1 // pred_region
      _
    $region5: #{forward.1} parent=1 // pred_fallthru
      _
    // Predicated region
    $region6: #{forward.1} parent=1 // pred_check
      _
    $region7: #{forward.1} parent=1 // pred_check_branch
      %18 = sbr.rel (0) target = $region9
    $region8: #{forward.1} parent=1 // pred_region
      _
    $region9: #{forward.1} parent=1 // pred_fallthru
      _
    // Predicated region
    $region10: #{forward.1} parent=1 // pred_check
      _
    $region11: #{forward.1} parent=1 // pred_check_branch
      %20 = sbr.rel (0) target = $region13
    $region12: #{forward.1} parent=1 // pred_region
      _
    $region13: #{forward.1} parent=1 // pred_fallthru
      _
    // Predicated region
    $region14: #{forward.1} parent=1 // pred_check
      _
    $region15: #{forward.1} parent=1 // pred_check_branch
      %22 = sbr.rel (0) target = $region17
    $region16: #{forward.1} parent=1 // pred_region
      _
    $region17: #{forward.1} parent=1 // pred_fallthru
      _
    // Predicated region
    $region18: #{forward.1} parent=1 // pred_check
      _
    $region19: #{forward.1} parent=1 // pred_check_branch
      %24 = sbr.rel (0) target = $region21
    $region20: #{forward.1} parent=1 // pred_region
      _
    $region21: #{forward.1} parent=1 // pred_fallthru
      _
    // Predicated region
    $region22: #{forward.1} parent=1 // pred_check
      _
    $region23: #{forward.1} parent=1 // pred_check_branch
      %26 = sbr.rel (0) target = $region25
    $region24: #{forward.1} parent=1 // pred_region
      _
    $region25: #{forward.1} parent=1 // pred_fallthru
      _
    // Predicated region
    $region26: #{forward.1} parent=1 // pred_check
      _
    $region27: #{forward.1} parent=1 // pred_check_branch
      %28 = sbr.rel (0) target = $region29
    $region28: #{forward.1} parent=1 // pred_region
      _
    $region29: #{forward.1} parent=1 // pred_fallthru
      _
    // Predicated region
    $region30: #{forward.1} parent=1 // pred_check
      _
    $region31: #{forward.1} parent=1 // pred_check_branch
      %30 = sbr.rel (0) target = $region33
    $region32: #{forward.1} parent=1 // pred_region
      _
    $region33: #{forward.1} parent=1 // pred_fallthru
      _
    // Predicated region
    $region34: #{forward.1} parent=1 // pred_check
      _
    $region35: #{forward.1} parent=1 // pred_check_branch
      %32 = sbr.rel (0) target = $region37
    $region36: #{forward.1} parent=1 // pred_region
      _
    $region37: #{forward.1} parent=1 // pred_fallthru
      _
    %v33 = vld [vmem:[%s0] sm:$0xff]
    %v34 = vld [vmem:[%s0 + $0x8] sm:$0xff]
    %v35 = vld [vmem:[%s1] sm:$0xff]
    %v36 = vld [vmem:[%s1 + $0x8] sm:$0xff]
    %v37 = vld [vmem:[%s1 + $0x10] sm:$0xff]
    %v38 = vld [vmem:[%s1 + $0x18] sm:$0xff]
    %v39 = vld [vmem:[%s1 + $0x20] sm:$0xff]
    %v40 = vld [vmem:[%s1 + $0x28] sm:$0xff]
    %v41 = vld [vmem:[%s1 + $0x30] sm:$0x3]
    %v42 = vld [vmem:[%s1 + $0x38] sm:$0x3]
    %v43 = vld [vmem:[%s1 + $0x40] sm:$0x3]
    %v44 = vld [vmem:[%s1 + $0x48] sm:$0x3]
    %v45 = vld [vmem:[%s1 + $0x50] sm:$0x3]
    %v46 = vld [vmem:[%s1 + $0x58] sm:$0x3]
    %v47 = vld [vmem:[%s2] sm:$0x3f]
    %v49 = vlaneseq
    %v50 = vshrl.u32 %v49, 7
    %v51 = vsub.s32 0, %v50
    %v52 = vrot.slane %v47, %v51
    %v53 = vlaneseq
    %v54 = vshrl.u32 %v53, 7
    %v55 = vsub.s32 1, %v54
    %v56 = vrot.slane %v47, %v55
    %v57 = vlaneseq
    %v58 = vshrl.u32 %v57, 7
    %v59 = vsub.s32 2, %v58
    %v60 = vrot.slane %v47, %v59
    %v61 = vlaneseq
    %v62 = vshrl.u32 %v61, 7
    %v63 = vsub.s32 3, %v62
    %v64 = vrot.slane %v47, %v63
    %v65 = vlaneseq
    %v66 = vshrl.u32 %v65, 7
    %v67 = vsub.s32 4, %v66
    %v68 = vrot.slane %v47, %v67
    %v69 = vlaneseq
    %v70 = vshrl.u32 %v69, 7
    %v71 = vsub.s32 5, %v70
    %v72 = vrot.slane %v47, %v71
    %vm79 = vcmask 80896
    %v81 = vsel %vm79, %v33, 0
    %v84 = vsel %vm79, %v34, 0
    %vm86 = vcmask 1041408
    %v88 = vsel %vm86, %v41, 0
    %v91 = vsel %vm86, %v42, 0
    %v94 = vsel %vm86, %v43, 0
    %v97 = vsel %vm86, %v44, 0
    %v100 = vsel %vm86, %v45, 0
    %v103 = vsel %vm86, %v46, 0
    %105 = vmatprep.subr.mxu0 %v36
    %106 = vmatpush1.msra.mxu0 %v35
    %107 = vmatprep.subr.mxu0 %v91
    %108 = vmatpush1.msra.mxu0 %v88
    %109 = vmatprep.subr.mxu0 0.0
    %110 = vmatpush1.msra.mxu0 0.0
    %111 = vmatprep.subr.mxu0 0.0
    %112 = vmatpush1.msra.mxu0 0.0
    %113 = vmatprep.subr.mxu0 0.0
    %114 = vmatpush1.msra.mxu0 0.0
    %115 = vmatprep.subr.mxu0 0.0
    %116 = vmatpush1.msra.mxu0 0.0
    %117 = vmatprep.subr.mxu0 0.0
    %118 = vmatpush1.msra.mxu0 0.0
    %119 = vmatprep.subr.mxu0 0.0
    %120 = vmatpush1.msra.mxu0 0.0
    %121 = vmatprep.subr.mxu0 0.0
    %122 = vmatpush1.msra.mxu0 0.0
    %123 = vmatprep.subr.mxu0 0.0
    %124 = vmatpush1.msra.mxu0 0.0
    %125 = vmatprep.subr.mxu0 0.0
    %126 = vmatpush1.msra.mxu0 0.0
    %127 = vmatprep.subr.mxu0 0.0
    %128 = vmatpush1.msra.mxu0 0.0
    %129 = vmatprep.subr.mxu0 0.0
    %130 = vmatpush1.msra.mxu0 0.0
    %131 = vmatprep.subr.mxu0 0.0
    %132 = vmatpush1.msra.mxu0 0.0
    %133 = vmatprep.subr.mxu0 0.0
    %134 = vmatpush1.msra.mxu0 0.0
    %135 = vmatprep.subr.mxu0 0.0
    %136 = vmatpush1.msra.mxu0 0.0
    %137 = vmatprep.subr.mxu0 0.0
    %138 = vmatpush1.msra.mxu0 0.0
    %139 = vmatprep.subr.mxu0 0.0
    %140 = vmatpush1.msra.mxu0 0.0
    %141 = vmatprep.subr.mxu0 0.0
    %142 = vmatpush1.msra.mxu0 0.0
    %143 = vmatprep.subr.mxu0 0.0
    %144 = vmatpush1.msra.mxu0 0.0
    %145 = vmatprep.subr.mxu0 0.0
    %146 = vmatpush1.msra.mxu0 0.0
    %147 = vmatprep.subr.mxu0 0.0
    %148 = vmatpush1.msra.mxu0 0.0
    %149 = vmatprep.subr.mxu0 0.0
    %150 = vmatpush1.msra.mxu0 0.0
    %151 = vmatprep.subr.mxu0 0.0
    %152 = vmatpush1.msra.mxu0 0.0
    %153 = vmatprep.subr.mxu0 0.0
    %154 = vmatpush1.msra.mxu0 0.0
    %155 = vmatprep.subr.mxu0 0.0
    %156 = vmatpush1.msra.mxu0 0.0
    %157 = vmatprep.subr.mxu0 0.0
    %158 = vmatpush1.msra.mxu0 0.0
    %159 = vmatprep.subr.mxu0 0.0
    %160 = vmatpush1.msra.mxu0 0.0
    %161 = vmatprep.subr.mxu0 0.0
    %162 = vmatpush1.msra.mxu0 0.0
    %163 = vmatprep.subr.mxu0 0.0
    %164 = vmatpush1.msra.mxu0 0.0
    %165 = vmatprep.subr.mxu0 0.0
    %166 = vmatpush1.msra.mxu0 0.0
    %167 = vmatprep.subr.mxu0 0.0
    %168 = vmatpush1.msra.mxu0 0.0
    %169 = vmatprep.mubr.f32.mxu0 0.0
    %170 = vmatmul.mubr.f32.gmra.mrb[0].mxu0 %v81
    %v171 = vpop.f32.mrb[0].mxu0
    %v172 = vadd.f32 %v52, %v171
    %v173 = vpop.f32.mrb[0].mxu0
    %v174 = vadd.f32 %v56, %v173
    %175 = vmatprep.mubr.f32.mxu0 0.0
    %176 = vmatmul.mubr.f32.gmra.mrb[0].mxu0 %v84
    %v177 = vpop.f32.mrb[0].mxu0
    %v178 = vadd.f32 %v52, %v177
    %v179 = vpop.f32.mrb[0].mxu0
    %v180 = vadd.f32 %v56, %v179
    %181 = vdwg.mxu0
    %182 = vmatprep.subr.mxu0 %v38
    %183 = vmatpush1.msra.mxu0 %v37
    %184 = vmatprep.subr.mxu0 %v97
    %185 = vmatpush1.msra.mxu0 %v94
    %186 = vmatprep.subr.mxu0 0.0
    %187 = vmatpush1.msra.mxu0 0.0
    %188 = vmatprep.subr.mxu0 0.0
    %189 = vmatpush1.msra.mxu0 0.0
    %190 = vmatprep.subr.mxu0 0.0
    %191 = vmatpush1.msra.mxu0 0.0
    %192 = vmatprep.subr.mxu0 0.0
    %193 = vmatpush1.msra.mxu0 0.0
    %194 = vmatprep.subr.mxu0 0.0
    %195 = vmatpush1.msra.mxu0 0.0
    %196 = vmatprep.subr.mxu0 0.0
    %197 = vmatpush1.msra.mxu0 0.0
    %198 = vmatprep.subr.mxu0 0.0
    %199 = vmatpush1.msra.mxu0 0.0
    %200 = vmatprep.subr.mxu0 0.0
    %201 = vmatpush1.msra.mxu0 0.0
    %202 = vmatprep.subr.mxu0 0.0
    %203 = vmatpush1.msra.mxu0 0.0
    %204 = vmatprep.subr.mxu0 0.0
    %205 = vmatpush1.msra.mxu0 0.0
    %206 = vmatprep.subr.mxu0 0.0
    %207 = vmatpush1.msra.mxu0 0.0
    %208 = vmatprep.subr.mxu0 0.0
    %209 = vmatpush1.msra.mxu0 0.0
    %210 = vmatprep.subr.mxu0 0.0
    %211 = vmatpush1.msra.mxu0 0.0
    %212 = vmatprep.subr.mxu0 0.0
    %213 = vmatpush1.msra.mxu0 0.0
    %214 = vmatprep.subr.mxu0 0.0
    %215 = vmatpush1.msra.mxu0 0.0
    %216 = vmatprep.subr.mxu0 0.0
    %217 = vmatpush1.msra.mxu0 0.0
    %218 = vmatprep.subr.mxu0 0.0
    %219 = vmatpush1.msra.mxu0 0.0
    %220 = vmatprep.subr.mxu0 0.0
    %221 = vmatpush1.msra.mxu0 0.0
    %222 = vmatprep.subr.mxu0 0.0
    %223 = vmatpush1.msra.mxu0 0.0
    %224 = vmatprep.subr.mxu0 0.0
    %225 = vmatpush1.msra.mxu0 0.0
    %226 = vmatprep.subr.mxu0 0.0
    %227 = vmatpush1.msra.mxu0 0.0
    %228 = vmatprep.subr.mxu0 0.0
    %229 = vmatpush1.msra.mxu0 0.0
    %230 = vmatprep.subr.mxu0 0.0
    %231 = vmatpush1.msra.mxu0 0.0
    %232 = vmatprep.subr.mxu0 0.0
    %233 = vmatpush1.msra.mxu0 0.0
    %234 = vmatprep.subr.mxu0 0.0
    %235 = vmatpush1.msra.mxu0 0.0
    %236 = vmatprep.subr.mxu0 0.0
    %237 = vmatpush1.msra.mxu0 0.0
    %238 = vmatprep.subr.mxu0 0.0
    %239 = vmatpush1.msra.mxu0 0.0
    %240 = vmatprep.subr.mxu0 0.0
    %241 = vmatpush1.msra.mxu0 0.0
    %242 = vmatprep.subr.mxu0 0.0
    %243 = vmatpush1.msra.mxu0 0.0
    %244 = vmatprep.subr.mxu0 0.0
    %245 = vmatpush1.msra.mxu0 0.0
    %246 = vmatprep.mubr.f32.mxu0 0.0
    %247 = vmatmul.mubr.f32.gmra.mrb[0].mxu0 %v81
    %v248 = vpop.f32.mrb[0].mxu0
    %v249 = vadd.f32 %v60, %v248
    %v250 = vpop.f32.mrb[0].mxu0
    %v251 = vadd.f32 %v64, %v250
    %252 = vmatprep.mubr.f32.mxu0 0.0
    %253 = vmatmul.mubr.f32.gmra.mrb[0].mxu0 %v84
    %v254 = vpop.f32.mrb[0].mxu0
    %v255 = vadd.f32 %v60, %v254
    %v256 = vpop.f32.mrb[0].mxu0
    %v257 = vadd.f32 %v64, %v256
    %258 = vdwg.mxu0
    %259 = vmatprep.subr.mxu0 %v40
    %260 = vmatpush1.msra.mxu0 %v39
    %261 = vmatprep.subr.mxu0 %v103
    %262 = vmatpush1.msra.mxu0 %v100
    %263 = vmatprep.subr.mxu0 0.0
    %264 = vmatpush1.msra.mxu0 0.0
    %265 = vmatprep.subr.mxu0 0.0
    %266 = vmatpush1.msra.mxu0 0.0
    %267 = vmatprep.subr.mxu0 0.0
    %268 = vmatpush1.msra.mxu0 0.0
    %269 = vmatprep.subr.mxu0 0.0
    %270 = vmatpush1.msra.mxu0 0.0
    %271 = vmatprep.subr.mxu0 0.0
    %272 = vmatpush1.msra.mxu0 0.0
    %273 = vmatprep.subr.mxu0 0.0
    %274 = vmatpush1.msra.mxu0 0.0
    %275 = vmatprep.subr.mxu0 0.0
    %276 = vmatpush1.msra.mxu0 0.0
    %277 = vmatprep.subr.mxu0 0.0
    %278 = vmatpush1.msra.mxu0 0.0
    %279 = vmatprep.subr.mxu0 0.0
    %280 = vmatpush1.msra.mxu0 0.0
    %281 = vmatprep.subr.mxu0 0.0
    %282 = vmatpush1.msra.mxu0 0.0
    %283 = vmatprep.subr.mxu0 0.0
    %284 = vmatpush1.msra.mxu0 0.0
    %285 = vmatprep.subr.mxu0 0.0
    %286 = vmatpush1.msra.mxu0 0.0
    %287 = vmatprep.subr.mxu0 0.0
    %288 = vmatpush1.msra.mxu0 0.0
    %289 = vmatprep.subr.mxu0 0.0
    %290 = vmatpush1.msra.mxu0 0.0
    %291 = vmatprep.subr.mxu0 0.0
    %292 = vmatpush1.msra.mxu0 0.0
    %293 = vmatprep.subr.mxu0 0.0
    %294 = vmatpush1.msra.mxu0 0.0
    %295 = vmatprep.subr.mxu0 0.0
    %296 = vmatpush1.msra.mxu0 0.0
    %297 = vmatprep.subr.mxu0 0.0
    %298 = vmatpush1.msra.mxu0 0.0
    %299 = vmatprep.subr.mxu0 0.0
    %300 = vmatpush1.msra.mxu0 0.0
    %301 = vmatprep.subr.mxu0 0.0
    %302 = vmatpush1.msra.mxu0 0.0
    %303 = vmatprep.subr.mxu0 0.0
    %304 = vmatpush1.msra.mxu0 0.0
    %305 = vmatprep.subr.mxu0 0.0
    %306 = vmatpush1.msra.mxu0 0.0
    %307 = vmatprep.subr.mxu0 0.0
    %308 = vmatpush1.msra.mxu0 0.0
    %309 = vmatprep.subr.mxu0 0.0
    %310 = vmatpush1.msra.mxu0 0.0
    %311 = vmatprep.subr.mxu0 0.0
    %312 = vmatpush1.msra.mxu0 0.0
    %313 = vmatprep.subr.mxu0 0.0
    %314 = vmatpush1.msra.mxu0 0.0
    %315 = vmatprep.subr.mxu0 0.0
    %316 = vmatpush1.msra.mxu0 0.0
    %317 = vmatprep.subr.mxu0 0.0
    %318 = vmatpush1.msra.mxu0 0.0
    %319 = vmatprep.subr.mxu0 0.0
    %320 = vmatpush1.msra.mxu0 0.0
    %321 = vmatprep.subr.mxu0 0.0
    %322 = vmatpush1.msra.mxu0 0.0
    %323 = vmatprep.mubr.f32.mxu0 0.0
    %324 = vmatmul.mubr.f32.gmra.mrb[0].mxu0 %v81
    %v325 = vpop.f32.mrb[0].mxu0
    %v326 = vadd.f32 %v68, %v325
    %v327 = vpop.f32.mrb[0].mxu0
    %v328 = vadd.f32 %v72, %v327
    %329 = vmatprep.mubr.f32.mxu0 0.0
    %330 = vmatmul.mubr.f32.gmra.mrb[0].mxu0 %v84
    %v331 = vpop.f32.mrb[0].mxu0
    %v332 = vadd.f32 %v68, %v331
    %v333 = vpop.f32.mrb[0].mxu0
    %v334 = vadd.f32 %v72, %v333
    %335 = vdwg.mxu0
    %v336 = vld [vmem:[%s5] sm:$0x1]
    %v337 = vld [vmem:[%s6] sm:$0x1]
    %v338 = vld [vmem:[%s3] sm:$0xff]
    %v339 = vld [vmem:[%s3 + $0x8] sm:$0xff]
    %v340 = vld [vmem:[%s3 + $0x10] sm:$0xff]
    %v341 = vld [vmem:[%s3 + $0x18] sm:$0xff]
    %v342 = vld [vmem:[%s3 + $0x20] sm:$0xff]
    %v343 = vld [vmem:[%s3 + $0x28] sm:$0xff]
    %v344 = vld [vmem:[%s3 + $0x30] sm:$0xff]
    %v345 = vld [vmem:[%s3 + $0x38] sm:$0xff]
    %v346 = vld [vmem:[%s3 + $0x40] sm:$0xff]
    %v347 = vld [vmem:[%s3 + $0x48] sm:$0xff]
    %v348 = vld [vmem:[%s3 + $0x50] sm:$0xff]
    %v349 = vld [vmem:[%s3 + $0x58] sm:$0xff]
    %v350 = vld [vmem:[%s3 + $0x60] sm:$0xff]
    %v351 = vld [vmem:[%s3 + $0x68] sm:$0xff]
    %v352 = vld [vmem:[%s3 + $0x70] sm:$0xff]
    %v353 = vld [vmem:[%s3 + $0x78] sm:$0xff]
    %v354 = vld [vmem:[%s3 + $0x80] sm:$0xff]
    %v355 = vld [vmem:[%s3 + $0x88] sm:$0xff]
    %v356 = vld [vmem:[%s3 + $0x90] sm:$0xff]
    %v357 = vld [vmem:[%s3 + $0x98] sm:$0xff]
    %v358 = vld [vmem:[%s3 + $0xa0] sm:$0xff]
    %v359 = vld [vmem:[%s3 + $0xa8] sm:$0xff]
    %v360 = vld [vmem:[%s3 + $0xb0] sm:$0xff]
    %v361 = vld [vmem:[%s3 + $0xb8] sm:$0xff]
    %v362 = vld [vmem:[%s3 + $0xc0] sm:$0xff]
    %v363 = vld [vmem:[%s3 + $0xc8] sm:$0xff]
    %v364 = vld [vmem:[%s3 + $0xd0] sm:$0xff]
    %v365 = vld [vmem:[%s3 + $0xd8] sm:$0xff]
    %v366 = vld [vmem:[%s3 + $0xe0] sm:$0xff]
    %v367 = vld [vmem:[%s3 + $0xe8] sm:$0xff]
    %v368 = vld [vmem:[%s3 + $0xf0] sm:$0xff]
    %v369 = vld [vmem:[%s3 + $0xf8] sm:$0xff]
    %v370 = vld [vmem:[%s3 + $0x100] sm:$0xff]
    %v371 = vld [vmem:[%s3 + $0x108] sm:$0xff]
    %v372 = vld [vmem:[%s3 + $0x110] sm:$0xff]
    %v373 = vld [vmem:[%s3 + $0x118] sm:$0xff]
    %v374 = vld [vmem:[%s3 + $0x120] sm:$0xff]
    %v375 = vld [vmem:[%s3 + $0x128] sm:$0xff]
    %v376 = vld [vmem:[%s3 + $0x130] sm:$0xff]
    %v377 = vld [vmem:[%s3 + $0x138] sm:$0xff]
    %v378 = vld [vmem:[%s3 + $0x140] sm:$0xff]
    %v379 = vld [vmem:[%s3 + $0x148] sm:$0xff]
    %v380 = vld [vmem:[%s3 + $0x150] sm:$0xff]
    %v381 = vld [vmem:[%s3 + $0x158] sm:$0xff]
    %v382 = vld [vmem:[%s3 + $0x160] sm:$0xff]
    %v383 = vld [vmem:[%s3 + $0x168] sm:$0xff]
    %v384 = vld [vmem:[%s3 + $0x170] sm:$0xff]
    %v385 = vld [vmem:[%s3 + $0x178] sm:$0xff]
    %386 = vmatprep.subr.mxu0 %v339
    %387 = vmatpush1.msra.mxu0 %v338
    %388 = vmatprep.subr.mxu0 %v342
    %389 = vmatpush1.msra.mxu0 %v341
    %390 = vmatprep.subr.mxu0 %v345
    %391 = vmatpush1.msra.mxu0 %v344
    %392 = vmatprep.subr.mxu0 %v348
    %393 = vmatpush1.msra.mxu0 %v347
    %394 = vmatprep.subr.mxu0 %v351
    %395 = vmatpush1.msra.mxu0 %v350
    %396 = vmatprep.subr.mxu0 %v354
    %397 = vmatpush1.msra.mxu0 %v353
    %398 = vmatprep.subr.mxu0 %v357
    %399 = vmatpush1.msra.mxu0 %v356
    %400 = vmatprep.subr.mxu0 %v360
    %401 = vmatpush1.msra.mxu0 %v359
    %402 = vmatprep.subr.mxu0 %v363
    %403 = vmatpush1.msra.mxu0 %v362
    %404 = vmatprep.subr.mxu0 %v366
    %405 = vmatpush1.msra.mxu0 %v365
    %406 = vmatprep.subr.mxu0 %v369
    %407 = vmatpush1.msra.mxu0 %v368
    %408 = vmatprep.subr.mxu0 %v372
    %409 = vmatpush1.msra.mxu0 %v371
    %410 = vmatprep.subr.mxu0 %v375
    %411 = vmatpush1.msra.mxu0 %v374
    %412 = vmatprep.subr.mxu0 %v378
    %413 = vmatpush1.msra.mxu0 %v377
    %414 = vmatprep.subr.mxu0 %v381
    %415 = vmatpush1.msra.mxu0 %v380
    %416 = vmatprep.subr.mxu0 %v384
    %417 = vmatpush1.msra.mxu0 %v383
    %418 = vmatprep.subr.mxu0 0.0
    %419 = vmatpush1.msra.mxu0 0.0
    %420 = vmatprep.subr.mxu0 0.0
    %421 = vmatpush1.msra.mxu0 0.0
    %422 = vmatprep.subr.mxu0 0.0
    %423 = vmatpush1.msra.mxu0 0.0
    %424 = vmatprep.subr.mxu0 0.0
    %425 = vmatpush1.msra.mxu0 0.0
    %426 = vmatprep.subr.mxu0 0.0
    %427 = vmatpush1.msra.mxu0 0.0
    %428 = vmatprep.subr.mxu0 0.0
    %429 = vmatpush1.msra.mxu0 0.0
    %430 = vmatprep.subr.mxu0 0.0
    %431 = vmatpush1.msra.mxu0 0.0
    %432 = vmatprep.subr.mxu0 0.0
    %433 = vmatpush1.msra.mxu0 0.0
    %434 = vmatprep.subr.mxu0 0.0
    %435 = vmatpush1.msra.mxu0 0.0
    %436 = vmatprep.subr.mxu0 0.0
    %437 = vmatpush1.msra.mxu0 0.0
    %438 = vmatprep.subr.mxu0 0.0
    %439 = vmatpush1.msra.mxu0 0.0
    %440 = vmatprep.subr.mxu0 0.0
    %441 = vmatpush1.msra.mxu0 0.0
    %442 = vmatprep.subr.mxu0 0.0
    %443 = vmatpush1.msra.mxu0 0.0
    %444 = vmatprep.subr.mxu0 0.0
    %445 = vmatpush1.msra.mxu0 0.0
    %446 = vmatprep.subr.mxu0 0.0
    %447 = vmatpush1.msra.mxu0 0.0
    %448 = vmatprep.subr.mxu0 0.0
    %449 = vmatpush1.msra.mxu0 0.0
    %450 = vmatprep.mubr.f32.mxu0 0.0
    %451 = vmatmul.mubr.f32.gmra.mrb[0].mxu0 0.0
    %v452 = vpop.f32.mrb[0].mxu0
    %v453 = vadd.f32 0.0, %v452
    %v454 = vpop.f32.mrb[0].mxu0
    %v455 = vadd.f32 0.0, %v454
    %456 = vdwg.mxu0
    %457 = vmatprep.subr.mxu0 0.0
    %458 = vmatpush1.msra.mxu0 %v340
    %459 = vmatprep.subr.mxu0 0.0
    %460 = vmatpush1.msra.mxu0 %v343
    %461 = vmatprep.subr.mxu0 0.0
    %462 = vmatpush1.msra.mxu0 %v346
    %463 = vmatprep.subr.mxu0 0.0
    %464 = vmatpush1.msra.mxu0 %v349
    %465 = vmatprep.subr.mxu0 0.0
    %466 = vmatpush1.msra.mxu0 %v352
    %467 = vmatprep.subr.mxu0 0.0
    %468 = vmatpush1.msra.mxu0 %v355
    %469 = vmatprep.subr.mxu0 0.0
    %470 = vmatpush1.msra.mxu0 %v358
    %471 = vmatprep.subr.mxu0 0.0
    %472 = vmatpush1.msra.mxu0 %v361
    %473 = vmatprep.subr.mxu0 0.0
    %474 = vmatpush1.msra.mxu0 %v364
    %475 = vmatprep.subr.mxu0 0.0
    %476 = vmatpush1.msra.mxu0 %v367
    %477 = vmatprep.subr.mxu0 0.0
    %478 = vmatpush1.msra.mxu0 %v370
    %479 = vmatprep.subr.mxu0 0.0
    %480 = vmatpush1.msra.mxu0 %v373
    %481 = vmatprep.subr.mxu0 0.0
    %482 = vmatpush1.msra.mxu0 %v376
    %483 = vmatprep.subr.mxu0 0.0
    %484 = vmatpush1.msra.mxu0 %v379
    %485 = vmatprep.subr.mxu0 0.0
    %486 = vmatpush1.msra.mxu0 %v382
    %487 = vmatprep.subr.mxu0 0.0
    %488 = vmatpush1.msra.mxu0 %v385
    %489 = vmatprep.subr.mxu0 0.0
    %490 = vmatpush1.msra.mxu0 0.0
    %491 = vmatprep.subr.mxu0 0.0
    %492 = vmatpush1.msra.mxu0 0.0
    %493 = vmatprep.subr.mxu0 0.0
    %494 = vmatpush1.msra.mxu0 0.0
    %495 = vmatprep.subr.mxu0 0.0
    %496 = vmatpush1.msra.mxu0 0.0
    %497 = vmatprep.subr.mxu0 0.0
    %498 = vmatpush1.msra.mxu0 0.0
    %499 = vmatprep.subr.mxu0 0.0
    %500 = vmatpush1.msra.mxu0 0.0
    %501 = vmatprep.subr.mxu0 0.0
    %502 = vmatpush1.msra.mxu0 0.0
    %503 = vmatprep.subr.mxu0 0.0
    %504 = vmatpush1.msra.mxu0 0.0
    %505 = vmatprep.subr.mxu0 0.0
    %506 = vmatpush1.msra.mxu0 0.0
    %507 = vmatprep.subr.mxu0 0.0
    %508 = vmatpush1.msra.mxu0 0.0
    %509 = vmatprep.subr.mxu0 0.0
    %510 = vmatpush1.msra.mxu0 0.0
    %511 = vmatprep.subr.mxu0 0.0
    %512 = vmatpush1.msra.mxu0 0.0
    %513 = vmatprep.subr.mxu0 0.0
    %514 = vmatpush1.msra.mxu0 0.0
    %515 = vmatprep.subr.mxu0 0.0
    %516 = vmatpush1.msra.mxu0 0.0
    %517 = vmatprep.subr.mxu0 0.0
    %518 = vmatpush1.msra.mxu0 0.0
    %519 = vmatprep.subr.mxu0 0.0
    %520 = vmatpush1.msra.mxu0 0.0
    %521 = vmatprep.mubr.f32.mxu0 0.0
    %522 = vmatmul.mubr.f32.gmra.mrb[0].mxu0 0.0
    %v523 = vpop.f32.mrb[0].mxu0
    %v524 = vadd.f32 0.0, %v523
    %v525 = vpop.f32.mrb[0].mxu0
    %526 = vdwg.mxu0
    %v527 = vld [vmem:[%s4] sm:$0xff]
    %v528 = vld [vmem:[%s4 + $0x8] sm:$0xff]
    %v529 = vld [vmem:[%s4 + $0x10] sm:$0xff]
    %v530 = vld [vmem:[%s4 + $0x18] sm:$0xff]
    %v531 = vld [vmem:[%s4 + $0x20] sm:$0xff]
    %v532 = vld [vmem:[%s4 + $0x28] sm:$0xff]
    %v533 = vld [vmem:[%s4 + $0x30] sm:$0xff]
    %v534 = vld [vmem:[%s4 + $0x38] sm:$0xff]
    %v535 = vld [vmem:[%s4 + $0x40] sm:$0xff]
    %v536 = vld [vmem:[%s4 + $0x48] sm:$0xff]
    %v537 = vld [vmem:[%s4 + $0x50] sm:$0xff]
    %v538 = vld [vmem:[%s4 + $0x58] sm:$0xff]
    %v539 = vld [vmem:[%s4 + $0x60] sm:$0xff]
    %v540 = vld [vmem:[%s4 + $0x68] sm:$0xff]
    %v541 = vld [vmem:[%s4 + $0x70] sm:$0xff]
    %v542 = vld [vmem:[%s4 + $0x78] sm:$0xff]
    %v543 = vld [vmem:[%s4 + $0x80] sm:$0xff]
    %v544 = vld [vmem:[%s4 + $0x88] sm:$0xff]
    %v545 = vld [vmem:[%s4 + $0x90] sm:$0xff]
    %v546 = vld [vmem:[%s4 + $0x98] sm:$0xff]
    %v547 = vld [vmem:[%s4 + $0xa0] sm:$0xff]
    %v548 = vld [vmem:[%s4 + $0xa8] sm:$0xff]
    %v549 = vld [vmem:[%s4 + $0xb0] sm:$0xff]
    %v550 = vld [vmem:[%s4 + $0xb8] sm:$0xff]
    %v551 = vld [vmem:[%s4 + $0xc0] sm:$0xff]
    %v552 = vld [vmem:[%s4 + $0xc8] sm:$0xff]
    %v553 = vld [vmem:[%s4 + $0xd0] sm:$0xff]
    %v554 = vld [vmem:[%s4 + $0xd8] sm:$0xff]
    %v555 = vld [vmem:[%s4 + $0xe0] sm:$0xff]
    %v556 = vld [vmem:[%s4 + $0xe8] sm:$0xff]
    %v557 = vld [vmem:[%s4 + $0xf0] sm:$0xff]
    %v558 = vld [vmem:[%s4 + $0xf8] sm:$0xff]
    %v559 = vld [vmem:[%s4 + $0x100] sm:$0xff]
    %v560 = vld [vmem:[%s4 + $0x108] sm:$0xff]
    %v561 = vld [vmem:[%s4 + $0x110] sm:$0xff]
    %v562 = vld [vmem:[%s4 + $0x118] sm:$0xff]
    %v563 = vld [vmem:[%s4 + $0x120] sm:$0xff]
    %v564 = vld [vmem:[%s4 + $0x128] sm:$0xff]
    %v565 = vld [vmem:[%s4 + $0x130] sm:$0xff]
    %v566 = vld [vmem:[%s4 + $0x138] sm:$0xff]
    %v567 = vld [vmem:[%s4 + $0x140] sm:$0xff]
    %v568 = vld [vmem:[%s4 + $0x148] sm:$0xff]
    %v569 = vld [vmem:[%s4 + $0x150] sm:$0xff]
    %v570 = vld [vmem:[%s4 + $0x158] sm:$0xff]
    %v571 = vld [vmem:[%s4 + $0x160] sm:$0xff]
    %v572 = vld [vmem:[%s4 + $0x168] sm:$0xff]
    %v573 = vld [vmem:[%s4 + $0x170] sm:$0xff]
    %v574 = vld [vmem:[%s4 + $0x178] sm:$0xff]
    %575 = vmatprep.subr.mxu0 %v528
    %576 = vmatpush1.msra.mxu0 %v527
    %577 = vmatprep.subr.mxu0 %v531
    %578 = vmatpush1.msra.mxu0 %v530
    %579 = vmatprep.subr.mxu0 %v534
    %580 = vmatpush1.msra.mxu0 %v533
    %581 = vmatprep.subr.mxu0 %v537
    %582 = vmatpush1.msra.mxu0 %v536
    %583 = vmatprep.subr.mxu0 %v540
    %584 = vmatpush1.msra.mxu0 %v539
    %585 = vmatprep.subr.mxu0 %v543
    %586 = vmatpush1.msra.mxu0 %v542
    %587 = vmatprep.subr.mxu0 %v546
    %588 = vmatpush1.msra.mxu0 %v545
    %589 = vmatprep.subr.mxu0 %v549
    %590 = vmatpush1.msra.mxu0 %v548
    %591 = vmatprep.subr.mxu0 %v552
    %592 = vmatpush1.msra.mxu0 %v551
    %593 = vmatprep.subr.mxu0 %v555
    %594 = vmatpush1.msra.mxu0 %v554
    %595 = vmatprep.subr.mxu0 %v558
    %596 = vmatpush1.msra.mxu0 %v557
    %597 = vmatprep.subr.mxu0 %v561
    %598 = vmatpush1.msra.mxu0 %v560
    %599 = vmatprep.subr.mxu0 %v564
    %600 = vmatpush1.msra.mxu0 %v563
    %601 = vmatprep.subr.mxu0 %v567
    %602 = vmatpush1.msra.mxu0 %v566
    %603 = vmatprep.subr.mxu0 %v570
    %604 = vmatpush1.msra.mxu0 %v569
    %605 = vmatprep.subr.mxu0 %v573
    %606 = vmatpush1.msra.mxu0 %v572
    %607 = vmatprep.subr.mxu0 0.0
    %608 = vmatpush1.msra.mxu0 0.0
    %609 = vmatprep.subr.mxu0 0.0
    %610 = vmatpush1.msra.mxu0 0.0
    %611 = vmatprep.subr.mxu0 0.0
    %612 = vmatpush1.msra.mxu0 0.0
    %613 = vmatprep.subr.mxu0 0.0
    %614 = vmatpush1.msra.mxu0 0.0
    %615 = vmatprep.subr.mxu0 0.0
    %616 = vmatpush1.msra.mxu0 0.0
    %617 = vmatprep.subr.mxu0 0.0
    %618 = vmatpush1.msra.mxu0 0.0
    %619 = vmatprep.subr.mxu0 0.0
    %620 = vmatpush1.msra.mxu0 0.0
    %621 = vmatprep.subr.mxu0 0.0
    %622 = vmatpush1.msra.mxu0 0.0
    %623 = vmatprep.subr.mxu0 0.0
    %624 = vmatpush1.msra.mxu0 0.0
    %625 = vmatprep.subr.mxu0 0.0
    %626 = vmatpush1.msra.mxu0 0.0
    %627 = vmatprep.subr.mxu0 0.0
    %628 = vmatpush1.msra.mxu0 0.0
    %629 = vmatprep.subr.mxu0 0.0
    %630 = vmatpush1.msra.mxu0 0.0
    %631 = vmatprep.subr.mxu0 0.0
    %632 = vmatpush1.msra.mxu0 0.0
    %633 = vmatprep.subr.mxu0 0.0
    %634 = vmatpush1.msra.mxu0 0.0
    %635 = vmatprep.subr.mxu0 0.0
    %636 = vmatpush1.msra.mxu0 0.0
    %637 = vmatprep.subr.mxu0 0.0
    %638 = vmatpush1.msra.mxu0 0.0
    %639 = vmatprep.mubr.f32.mxu0 0.0
    %640 = vmatmul.mubr.f32.gmra.mrb[0].mxu0 0.0
    %v641 = vpop.f32.mrb[0].mxu0
    %v642 = vadd.f32 0.0, %v641
    %v643 = vpop.f32.mrb[0].mxu0
    %v644 = vadd.f32 0.0, %v643
    %645 = vdwg.mxu0
    %646 = vmatprep.subr.mxu0 0.0
    %647 = vmatpush1.msra.mxu0 %v529
    %648 = vmatprep.subr.mxu0 0.0
    %649 = vmatpush1.msra.mxu0 %v532
    %650 = vmatprep.subr.mxu0 0.0
    %651 = vmatpush1.msra.mxu0 %v535
    %652 = vmatprep.subr.mxu0 0.0
    %653 = vmatpush1.msra.mxu0 %v538
    %654 = vmatprep.subr.mxu0 0.0
    %655 = vmatpush1.msra.mxu0 %v541
    %656 = vmatprep.subr.mxu0 0.0
    %657 = vmatpush1.msra.mxu0 %v544
    %658 = vmatprep.subr.mxu0 0.0
    %659 = vmatpush1.msra.mxu0 %v547
    %660 = vmatprep.subr.mxu0 0.0
    %661 = vmatpush1.msra.mxu0 %v550
    %662 = vmatprep.subr.mxu0 0.0
    %663 = vmatpush1.msra.mxu0 %v553
    %664 = vmatprep.subr.mxu0 0.0
    %665 = vmatpush1.msra.mxu0 %v556
    %666 = vmatprep.subr.mxu0 0.0
    %667 = vmatpush1.msra.mxu0 %v559
    %668 = vmatprep.subr.mxu0 0.0
    %669 = vmatpush1.msra.mxu0 %v562
    %670 = vmatprep.subr.mxu0 0.0
    %671 = vmatpush1.msra.mxu0 %v565
    %672 = vmatprep.subr.mxu0 0.0
    %673 = vmatpush1.msra.mxu0 %v568
    %674 = vmatprep.subr.mxu0 0.0
    %675 = vmatpush1.msra.mxu0 %v571
    %676 = vmatprep.subr.mxu0 0.0
    %677 = vmatpush1.msra.mxu0 %v574
    %678 = vmatprep.subr.mxu0 0.0
    %679 = vmatpush1.msra.mxu0 0.0
    %680 = vmatprep.subr.mxu0 0.0
    %681 = vmatpush1.msra.mxu0 0.0
    %682 = vmatprep.subr.mxu0 0.0
    %683 = vmatpush1.msra.mxu0 0.0
    %684 = vmatprep.subr.mxu0 0.0
    %685 = vmatpush1.msra.mxu0 0.0
    %686 = vmatprep.subr.mxu0 0.0
    %687 = vmatpush1.msra.mxu0 0.0
    %688 = vmatprep.subr.mxu0 0.0
    %689 = vmatpush1.msra.mxu0 0.0
    %690 = vmatprep.subr.mxu0 0.0
    %691 = vmatpush1.msra.mxu0 0.0
    %692 = vmatprep.subr.mxu0 0.0
    %693 = vmatpush1.msra.mxu0 0.0
    %694 = vmatprep.subr.mxu0 0.0
    %695 = vmatpush1.msra.mxu0 0.0
    %696 = vmatprep.subr.mxu0 0.0
    %697 = vmatpush1.msra.mxu0 0.0
    %698 = vmatprep.subr.mxu0 0.0
    %699 = vmatpush1.msra.mxu0 0.0
    %700 = vmatprep.subr.mxu0 0.0
    %701 = vmatpush1.msra.mxu0 0.0
    %702 = vmatprep.subr.mxu0 0.0
    %703 = vmatpush1.msra.mxu0 0.0
    %704 = vmatprep.subr.mxu0 0.0
    %705 = vmatpush1.msra.mxu0 0.0
    %706 = vmatprep.subr.mxu0 0.0
    %707 = vmatpush1.msra.mxu0 0.0
    %708 = vmatprep.subr.mxu0 0.0
    %709 = vmatpush1.msra.mxu0 0.0
    %710 = vmatprep.mubr.f32.mxu0 0.0
    %711 = vmatmul.mubr.f32.gmra.mrb[0].mxu0 0.0
    %v712 = vpop.f32.mrb[0].mxu0
    %v713 = vadd.f32 0.0, %v712
    %v714 = vpop.f32.mrb[0].mxu0
    %715 = vdwg.mxu0
    %v716 = vadd.f32 %v172, %v453
    %v717 = vxor.u32 %v716, 2147483648
    %v718 = vmul.f32 %v717, 1.442695
    %v719 = vpow.pop %v718
    %v720 = vadd.f32 %v719, 1.0
    %v721 = vrcp.pop %v720
    %v722 = vmul.f32 1.0, %v721
    %v723 = vadd.f32 %v174, %v455
    %v724 = vxor.u32 %v723, 2147483648
    %v725 = vmul.f32 %v724, 1.442695
    %v726 = vpow.pop %v725
    %v727 = vadd.f32 %v726, 1.0
    %v728 = vrcp.pop %v727
    %v729 = vmul.f32 1.0, %v728
    %v731 = vlaneseq
    %v732 = vshrl.u32 %v731, 7
    %v733 = vsub.s32 0, %v732
    %v734 = vrot.slane %v336, %v733
    %v736 = vadd.f32 %v524, %v734
    %v737 = vmul.f32 %v722, %v736
    %v738 = vadd.f32 %v249, %v737
    %v739 = vtanh.pop %v738
    %v740 = vsub.f32 1.0, %v729
    %v741 = vmul.f32 %v740, %v739
    %v742 = vmul.f32 %v729, 0.0
    %v743 = vadd.f32 %v741, %v742
    %v745 = vrot.slane %v642, 2
    %v747 = vadd.f32 %v257, %v745
    %v748 = vxor.u32 %v747, 2147483648
    %v749 = vmul.f32 %v748, 1.442695
    %v750 = vpow.pop %v749
    %v751 = vadd.f32 %v750, 1.0
    %v752 = vrcp.pop %v751
    %v753 = vmul.f32 1.0, %v752
    %v755 = vrot.slane %v644, 2
    %v757 = vadd.f32 %v332, %v755
    %v758 = vxor.u32 %v757, 2147483648
    %v759 = vmul.f32 %v758, 1.442695
    %v760 = vpow.pop %v759
    %v761 = vadd.f32 %v760, 1.0
    %v762 = vrcp.pop %v761
    %v763 = vmul.f32 1.0, %v762
    %v765 = vlaneseq
    %v766 = vshrl.u32 %v765, 7
    %v767 = vsub.s32 0, %v766
    %v768 = vrot.slane %v337, %v767
    %v770 = vadd.f32 %v713, %v768
    %v772 = vrot.slane %v770, 2
    %v774 = vmul.f32 %v753, %v772
    %v775 = vadd.f32 %v334, %v774
    %v776 = vtanh.pop %v775
    %v777 = vsub.f32 1.0, %v763
    %v778 = vmul.f32 %v777, %v776
    %v779 = vmul.f32 %v763, 0.0
    %v780 = vadd.f32 %v778, %v779
    %781 = vmatprep.subr.mxu0 %v339
    %782 = vmatpush1.msra.mxu0 %v338
    %783 = vmatprep.subr.mxu0 %v342
    %784 = vmatpush1.msra.mxu0 %v341
    %785 = vmatprep.subr.mxu0 %v345
    %786 = vmatpush1.msra.mxu0 %v344
    %787 = vmatprep.subr.mxu0 %v348
    %788 = vmatpush1.msra.mxu0 %v347
    %789 = vmatprep.subr.mxu0 %v351
    %790 = vmatpush1.msra.mxu0 %v350
    %791 = vmatprep.subr.mxu0 %v354
    %792 = vmatpush1.msra.mxu0 %v353
    %793 = vmatprep.subr.mxu0 %v357
    %794 = vmatpush1.msra.mxu0 %v356
    %795 = vmatprep.subr.mxu0 %v360
    %796 = vmatpush1.msra.mxu0 %v359
    %797 = vmatprep.subr.mxu0 %v363
    %798 = vmatpush1.msra.mxu0 %v362
    %799 = vmatprep.subr.mxu0 %v366
    %800 = vmatpush1.msra.mxu0 %v365
    %801 = vmatprep.subr.mxu0 %v369
    %802 = vmatpush1.msra.mxu0 %v368
    %803 = vmatprep.subr.mxu0 %v372
    %804 = vmatpush1.msra.mxu0 %v371
    %805 = vmatprep.subr.mxu0 %v375
    %806 = vmatpush1.msra.mxu0 %v374
    %807 = vmatprep.subr.mxu0 %v378
    %808 = vmatpush1.msra.mxu0 %v377
    %809 = vmatprep.subr.mxu0 %v381
    %810 = vmatpush1.msra.mxu0 %v380
    %811 = vmatprep.subr.mxu0 %v384
    %812 = vmatpush1.msra.mxu0 %v383
    %813 = vmatprep.subr.mxu0 0.0
    %814 = vmatpush1.msra.mxu0 0.0
    %815 = vmatprep.subr.mxu0 0.0
    %816 = vmatpush1.msra.mxu0 0.0
    %817 = vmatprep.subr.mxu0 0.0
    %818 = vmatpush1.msra.mxu0 0.0
    %819 = vmatprep.subr.mxu0 0.0
    %820 = vmatpush1.msra.mxu0 0.0
    %821 = vmatprep.subr.mxu0 0.0
    %822 = vmatpush1.msra.mxu0 0.0
    %823 = vmatprep.subr.mxu0 0.0
    %824 = vmatpush1.msra.mxu0 0.0
    %825 = vmatprep.subr.mxu0 0.0
    %826 = vmatpush1.msra.mxu0 0.0
    %827 = vmatprep.subr.mxu0 0.0
    %828 = vmatpush1.msra.mxu0 0.0
    %829 = vmatprep.subr.mxu0 0.0
    %830 = vmatpush1.msra.mxu0 0.0
    %831 = vmatprep.subr.mxu0 0.0
    %832 = vmatpush1.msra.mxu0 0.0
    %833 = vmatprep.subr.mxu0 0.0
    %834 = vmatpush1.msra.mxu0 0.0
    %835 = vmatprep.subr.mxu0 0.0
    %836 = vmatpush1.msra.mxu0 0.0
    %837 = vmatprep.subr.mxu0 0.0
    %838 = vmatpush1.msra.mxu0 0.0
    %839 = vmatprep.subr.mxu0 0.0
    %840 = vmatpush1.msra.mxu0 0.0
    %841 = vmatprep.subr.mxu0 0.0
    %842 = vmatpush1.msra.mxu0 0.0
    %843 = vmatprep.subr.mxu0 0.0
    %844 = vmatpush1.msra.mxu0 0.0
    %845 = vmatprep.mubr.f32.mxu0 0.0
    %846 = vmatmul.mubr.f32.gmra.mrb[0].mxu0 %v743
    %v847 = vpop.f32.mrb[0].mxu0
    %v848 = vadd.f32 0.0, %v847
    %v849 = vpop.f32.mrb[0].mxu0
    %v850 = vadd.f32 0.0, %v849
    %851 = vdwg.mxu0
    %852 = vmatprep.subr.mxu0 0.0
    %853 = vmatpush1.msra.mxu0 %v340
    %854 = vmatprep.subr.mxu0 0.0
    %855 = vmatpush1.msra.mxu0 %v343
    %856 = vmatprep.subr.mxu0 0.0
    %857 = vmatpush1.msra.mxu0 %v346
    %858 = vmatprep.subr.mxu0 0.0
    %859 = vmatpush1.msra.mxu0 %v349
    %860 = vmatprep.subr.mxu0 0.0
    %861 = vmatpush1.msra.mxu0 %v352
    %862 = vmatprep.subr.mxu0 0.0
    %863 = vmatpush1.msra.mxu0 %v355
    %864 = vmatprep.subr.mxu0 0.0
    %865 = vmatpush1.msra.mxu0 %v358
    %866 = vmatprep.subr.mxu0 0.0
    %867 = vmatpush1.msra.mxu0 %v361
    %868 = vmatprep.subr.mxu0 0.0
    %869 = vmatpush1.msra.mxu0 %v364
    %870 = vmatprep.subr.mxu0 0.0
    %871 = vmatpush1.msra.mxu0 %v367
    %872 = vmatprep.subr.mxu0 0.0
    %873 = vmatpush1.msra.mxu0 %v370
    %874 = vmatprep.subr.mxu0 0.0
    %875 = vmatpush1.msra.mxu0 %v373
    %876 = vmatprep.subr.mxu0 0.0
    %877 = vmatpush1.msra.mxu0 %v376
    %878 = vmatprep.subr.mxu0 0.0
    %879 = vmatpush1.msra.mxu0 %v379
    %880 = vmatprep.subr.mxu0 0.0
    %881 = vmatpush1.msra.mxu0 %v382
    %882 = vmatprep.subr.mxu0 0.0
    %883 = vmatpush1.msra.mxu0 %v385
    %884 = vmatprep.subr.mxu0 0.0
    %885 = vmatpush1.msra.mxu0 0.0
    %886 = vmatprep.subr.mxu0 0.0
    %887 = vmatpush1.msra.mxu0 0.0
    %888 = vmatprep.subr.mxu0 0.0
    %889 = vmatpush1.msra.mxu0 0.0
    %890 = vmatprep.subr.mxu0 0.0
    %891 = vmatpush1.msra.mxu0 0.0
    %892 = vmatprep.subr.mxu0 0.0
    %893 = vmatpush1.msra.mxu0 0.0
    %894 = vmatprep.subr.mxu0 0.0
    %895 = vmatpush1.msra.mxu0 0.0
    %896 = vmatprep.subr.mxu0 0.0
    %897 = vmatpush1.msra.mxu0 0.0
    %898 = vmatprep.subr.mxu0 0.0
    %899 = vmatpush1.msra.mxu0 0.0
    %900 = vmatprep.subr.mxu0 0.0
    %901 = vmatpush1.msra.mxu0 0.0
    %902 = vmatprep.subr.mxu0 0.0
    %903 = vmatpush1.msra.mxu0 0.0
    %904 = vmatprep.subr.mxu0 0.0
    %905 = vmatpush1.msra.mxu0 0.0
    %906 = vmatprep.subr.mxu0 0.0
    %907 = vmatpush1.msra.mxu0 0.0
    %908 = vmatprep.subr.mxu0 0.0
    %909 = vmatpush1.msra.mxu0 0.0
    %910 = vmatprep.subr.mxu0 0.0
    %911 = vmatpush1.msra.mxu0 0.0
    %912 = vmatprep.subr.mxu0 0.0
    %913 = vmatpush1.msra.mxu0 0.0
    %914 = vmatprep.subr.mxu0 0.0
    %915 = vmatpush1.msra.mxu0 0.0
    %916 = vmatprep.mubr.f32.mxu0 0.0
    %917 = vmatmul.mubr.f32.gmra.mrb[0].mxu0 %v743
    %v918 = vpop.f32.mrb[0].mxu0
    %v919 = vadd.f32 0.0, %v918
    %v920 = vpop.f32.mrb[0].mxu0
    %921 = vdwg.mxu0
    %v923 = vrot.slane %v780, 6
    %925 = vmatprep.subr.mxu0 %v528
    %926 = vmatpush1.msra.mxu0 %v527
    %927 = vmatprep.subr.mxu0 %v531
    %928 = vmatpush1.msra.mxu0 %v530
    %929 = vmatprep.subr.mxu0 %v534
    %930 = vmatpush1.msra.mxu0 %v533
    %931 = vmatprep.subr.mxu0 %v537
    %932 = vmatpush1.msra.mxu0 %v536
    %933 = vmatprep.subr.mxu0 %v540
    %934 = vmatpush1.msra.mxu0 %v539
    %935 = vmatprep.subr.mxu0 %v543
    %936 = vmatpush1.msra.mxu0 %v542
    %937 = vmatprep.subr.mxu0 %v546
    %938 = vmatpush1.msra.mxu0 %v545
    %939 = vmatprep.subr.mxu0 %v549
    %940 = vmatpush1.msra.mxu0 %v548
    %941 = vmatprep.subr.mxu0 %v552
    %942 = vmatpush1.msra.mxu0 %v551
    %943 = vmatprep.subr.mxu0 %v555
    %944 = vmatpush1.msra.mxu0 %v554
    %945 = vmatprep.subr.mxu0 %v558
    %946 = vmatpush1.msra.mxu0 %v557
    %947 = vmatprep.subr.mxu0 %v561
    %948 = vmatpush1.msra.mxu0 %v560
    %949 = vmatprep.subr.mxu0 %v564
    %950 = vmatpush1.msra.mxu0 %v563
    %951 = vmatprep.subr.mxu0 %v567
    %952 = vmatpush1.msra.mxu0 %v566
    %953 = vmatprep.subr.mxu0 %v570
    %954 = vmatpush1.msra.mxu0 %v569
    %955 = vmatprep.subr.mxu0 %v573
    %956 = vmatpush1.msra.mxu0 %v572
    %957 = vmatprep.subr.mxu0 0.0
    %958 = vmatpush1.msra.mxu0 0.0
    %959 = vmatprep.subr.mxu0 0.0
    %960 = vmatpush1.msra.mxu0 0.0
    %961 = vmatprep.subr.mxu0 0.0
    %962 = vmatpush1.msra.mxu0 0.0
    %963 = vmatprep.subr.mxu0 0.0
    %964 = vmatpush1.msra.mxu0 0.0
    %965 = vmatprep.subr.mxu0 0.0
    %966 = vmatpush1.msra.mxu0 0.0
    %967 = vmatprep.subr.mxu0 0.0
    %968 = vmatpush1.msra.mxu0 0.0
    %969 = vmatprep.subr.mxu0 0.0
    %970 = vmatpush1.msra.mxu0 0.0
    %971 = vmatprep.subr.mxu0 0.0
    %972 = vmatpush1.msra.mxu0 0.0
    %973 = vmatprep.subr.mxu0 0.0
    %974 = vmatpush1.msra.mxu0 0.0
    %975 = vmatprep.subr.mxu0 0.0
    %976 = vmatpush1.msra.mxu0 0.0
    %977 = vmatprep.subr.mxu0 0.0
    %978 = vmatpush1.msra.mxu0 0.0
    %979 = vmatprep.subr.mxu0 0.0
    %980 = vmatpush1.msra.mxu0 0.0
    %981 = vmatprep.subr.mxu0 0.0
    %982 = vmatpush1.msra.mxu0 0.0
    %983 = vmatprep.subr.mxu0 0.0
    %984 = vmatpush1.msra.mxu0 0.0
    %985 = vmatprep.subr.mxu0 0.0
    %986 = vmatpush1.msra.mxu0 0.0
    %987 = vmatprep.subr.mxu0 0.0
    %988 = vmatpush1.msra.mxu0 0.0
    %989 = vmatprep.mubr.f32.mxu0 0.0
    %990 = vmatmul.mubr.f32.gmra.mrb[0].mxu0 %v923
    %v991 = vpop.f32.mrb[0].mxu0
    %v992 = vadd.f32 0.0, %v991
    %v993 = vpop.f32.mrb[0].mxu0
    %v994 = vadd.f32 0.0, %v993
    %995 = vdwg.mxu0
    %996 = vmatprep.subr.mxu0 0.0
    %997 = vmatpush1.msra.mxu0 %v529
    %998 = vmatprep.subr.mxu0 0.0
    %999 = vmatpush1.msra.mxu0 %v532
    %1000 = vmatprep.subr.mxu0 0.0
    %1001 = vmatpush1.msra.mxu0 %v535
    %1002 = vmatprep.subr.mxu0 0.0
    %1003 = vmatpush1.msra.mxu0 %v538
    %1004 = vmatprep.subr.mxu0 0.0
    %1005 = vmatpush1.msra.mxu0 %v541
    %1006 = vmatprep.subr.mxu0 0.0
    %1007 = vmatpush1.msra.mxu0 %v544
    %1008 = vmatprep.subr.mxu0 0.0
    %1009 = vmatpush1.msra.mxu0 %v547
    %1010 = vmatprep.subr.mxu0 0.0
    %1011 = vmatpush1.msra.mxu0 %v550
    %1012 = vmatprep.subr.mxu0 0.0
    %1013 = vmatpush1.msra.mxu0 %v553
    %1014 = vmatprep.subr.mxu0 0.0
    %1015 = vmatpush1.msra.mxu0 %v556
    %1016 = vmatprep.subr.mxu0 0.0
    %1017 = vmatpush1.msra.mxu0 %v559
    %1018 = vmatprep.subr.mxu0 0.0
    %1019 = vmatpush1.msra.mxu0 %v562
    %1020 = vmatprep.subr.mxu0 0.0
    %1021 = vmatpush1.msra.mxu0 %v565
    %1022 = vmatprep.subr.mxu0 0.0
    %1023 = vmatpush1.msra.mxu0 %v568
    %1024 = vmatprep.subr.mxu0 0.0
    %1025 = vmatpush1.msra.mxu0 %v571
    %1026 = vmatprep.subr.mxu0 0.0
    %1027 = vmatpush1.msra.mxu0 %v574
    %1028 = vmatprep.subr.mxu0 0.0
    %1029 = vmatpush1.msra.mxu0 0.0
    %1030 = vmatprep.subr.mxu0 0.0
    %1031 = vmatpush1.msra.mxu0 0.0
    %1032 = vmatprep.subr.mxu0 0.0
    %1033 = vmatpush1.msra.mxu0 0.0
    %1034 = vmatprep.subr.mxu0 0.0
    %1035 = vmatpush1.msra.mxu0 0.0
    %1036 = vmatprep.subr.mxu0 0.0
    %1037 = vmatpush1.msra.mxu0 0.0
    %1038 = vmatprep.subr.mxu0 0.0
    %1039 = vmatpush1.msra.mxu0 0.0
    %1040 = vmatprep.subr.mxu0 0.0
    %1041 = vmatpush1.msra.mxu0 0.0
    %1042 = vmatprep.subr.mxu0 0.0
    %1043 = vmatpush1.msra.mxu0 0.0
    %1044 = vmatprep.subr.mxu0 0.0
    %1045 = vmatpush1.msra.mxu0 0.0
    %1046 = vmatprep.subr.mxu0 0.0
    %1047 = vmatpush1.msra.mxu0 0.0
    %1048 = vmatprep.subr.mxu0 0.0
    %1049 = vmatpush1.msra.mxu0 0.0
    %1050 = vmatprep.subr.mxu0 0.0
    %1051 = vmatpush1.msra.mxu0 0.0
    %1052 = vmatprep.subr.mxu0 0.0
    %1053 = vmatpush1.msra.mxu0 0.0
    %1054 = vmatprep.subr.mxu0 0.0
    %1055 = vmatpush1.msra.mxu0 0.0
    %1056 = vmatprep.subr.mxu0 0.0
    %1057 = vmatpush1.msra.mxu0 0.0
    %1058 = vmatprep.subr.mxu0 0.0
    %1059 = vmatpush1.msra.mxu0 0.0
    %1060 = vmatprep.mubr.f32.mxu0 0.0
    %1061 = vmatmul.mubr.f32.gmra.mrb[0].mxu0 %v923
    %v1062 = vpop.f32.mrb[0].mxu0
    %v1063 = vadd.f32 0.0, %v1062
    %v1064 = vpop.f32.mrb[0].mxu0
    %1065 = vdwg.mxu0
    %v1067 = vrot.slane %v848, 6
    %v1069 = vadd.f32 %v172, %v1067
    %v1070 = vxor.u32 %v1069, 2147483648
    %v1071 = vmul.f32 %v1070, 1.442695
    %v1072 = vpow.pop %v1071
    %v1073 = vadd.f32 %v1072, 1.0
    %v1074 = vrcp.pop %v1073
    %v1075 = vmul.f32 1.0, %v1074
    %v1077 = vrot.slane %v850, 6
    %v1079 = vadd.f32 %v174, %v1077
    %v1080 = vxor.u32 %v1079, 2147483648
    %v1081 = vmul.f32 %v1080, 1.442695
    %v1082 = vpow.pop %v1081
    %v1083 = vadd.f32 %v1082, 1.0
    %v1084 = vrcp.pop %v1083
    %v1085 = vmul.f32 1.0, %v1084
    %v1086 = vadd.f32 %v919, %v734
    %v1088 = vrot.slane %v1086, 6
    %v1090 = vmul.f32 %v1075, %v1088
    %v1091 = vadd.f32 %v249, %v1090
    %v1092 = vtanh.pop %v1091
    %v1093 = vsub.f32 1.0, %v1085
    %v1094 = vmul.f32 %v1093, %v1092
    %v1096 = vrot.slane %v743, 6
    %v1098 = vmul.f32 %v1085, %v1096
    %v1099 = vadd.f32 %v1094, %v1098
    %v1101 = vrot.slane %v992, 4
    %v1103 = vadd.f32 %v257, %v1101
    %v1104 = vxor.u32 %v1103, 2147483648
    %v1105 = vmul.f32 %v1104, 1.442695
    %v1106 = vpow.pop %v1105
    %v1107 = vadd.f32 %v1106, 1.0
    %v1108 = vrcp.pop %v1107
    %v1109 = vmul.f32 1.0, %v1108
    %v1111 = vrot.slane %v994, 4
    %v1113 = vadd.f32 %v332, %v1111
    %v1114 = vxor.u32 %v1113, 2147483648
    %v1115 = vmul.f32 %v1114, 1.442695
    %v1116 = vpow.pop %v1115
    %v1117 = vadd.f32 %v1116, 1.0
    %v1118 = vrcp.pop %v1117
    %v1119 = vmul.f32 1.0, %v1118
    %v1120 = vadd.f32 %v1063, %v768
    %v1122 = vrot.slane %v1120, 4
    %v1124 = vmul.f32 %v1109, %v1122
    %v1125 = vadd.f32 %v334, %v1124
    %v1126 = vtanh.pop %v1125
    %v1127 = vsub.f32 1.0, %v1119
    %v1128 = vmul.f32 %v1127, %v1126
    %v1129 = vrot.slane %v780, 2
    %v1131 = vmul.f32 %v1119, %v1129
    %v1132 = vadd.f32 %v1128, %v1131
    %v1134 = vrot.slane %v1099, 2
    %1136 = vmatprep.subr.mxu0 %v339
    %1137 = vmatpush1.msra.mxu0 %v338
    %1138 = vmatprep.subr.mxu0 %v342
    %1139 = vmatpush1.msra.mxu0 %v341
    %1140 = vmatprep.subr.mxu0 %v345
    %1141 = vmatpush1.msra.mxu0 %v344
    %1142 = vmatprep.subr.mxu0 %v348
    %1143 = vmatpush1.msra.mxu0 %v347
    %1144 = vmatprep.subr.mxu0 %v351
    %1145 = vmatpush1.msra.mxu0 %v350
    %1146 = vmatprep.subr.mxu0 %v354
    %1147 = vmatpush1.msra.mxu0 %v353
    %1148 = vmatprep.subr.mxu0 %v357
    %1149 = vmatpush1.msra.mxu0 %v356
    %1150 = vmatprep.subr.mxu0 %v360
    %1151 = vmatpush1.msra.mxu0 %v359
    %1152 = vmatprep.subr.mxu0 %v363
    %1153 = vmatpush1.msra.mxu0 %v362
    %1154 = vmatprep.subr.mxu0 %v366
    %1155 = vmatpush1.msra.mxu0 %v365
    %1156 = vmatprep.subr.mxu0 %v369
    %1157 = vmatpush1.msra.mxu0 %v368
    %1158 = vmatprep.subr.mxu0 %v372
    %1159 = vmatpush1.msra.mxu0 %v371
    %1160 = vmatprep.subr.mxu0 %v375
    %1161 = vmatpush1.msra.mxu0 %v374
    %1162 = vmatprep.subr.mxu0 %v378
    %1163 = vmatpush1.msra.mxu0 %v377
    %1164 = vmatprep.subr.mxu0 %v381
    %1165 = vmatpush1.msra.mxu0 %v380
    %1166 = vmatprep.subr.mxu0 %v384
    %1167 = vmatpush1.msra.mxu0 %v383
    %1168 = vmatprep.subr.mxu0 0.0
    %1169 = vmatpush1.msra.mxu0 0.0
    %1170 = vmatprep.subr.mxu0 0.0
    %1171 = vmatpush1.msra.mxu0 0.0
    %1172 = vmatprep.subr.mxu0 0.0
    %1173 = vmatpush1.msra.mxu0 0.0
    %1174 = vmatprep.subr.mxu0 0.0
    %1175 = vmatpush1.msra.mxu0 0.0
    %1176 = vmatprep.subr.mxu0 0.0
    %1177 = vmatpush1.msra.mxu0 0.0
    %1178 = vmatprep.subr.mxu0 0.0
    %1179 = vmatpush1.msra.mxu0 0.0
    %1180 = vmatprep.subr.mxu0 0.0
    %1181 = vmatpush1.msra.mxu0 0.0
    %1182 = vmatprep.subr.mxu0 0.0
    %1183 = vmatpush1.msra.mxu0 0.0
    %1184 = vmatprep.subr.mxu0 0.0
    %1185 = vmatpush1.msra.mxu0 0.0
    %1186 = vmatprep.subr.mxu0 0.0
    %1187 = vmatpush1.msra.mxu0 0.0
    %1188 = vmatprep.subr.mxu0 0.0
    %1189 = vmatpush1.msra.mxu0 0.0
    %1190 = vmatprep.subr.mxu0 0.0
    %1191 = vmatpush1.msra.mxu0 0.0
    %1192 = vmatprep.subr.mxu0 0.0
    %1193 = vmatpush1.msra.mxu0 0.0
    %1194 = vmatprep.subr.mxu0 0.0
    %1195 = vmatpush1.msra.mxu0 0.0
    %1196 = vmatprep.subr.mxu0 0.0
    %1197 = vmatpush1.msra.mxu0 0.0
    %1198 = vmatprep.subr.mxu0 0.0
    %1199 = vmatpush1.msra.mxu0 0.0
    %1200 = vmatprep.mubr.f32.mxu0 0.0
    %1201 = vmatmul.mubr.f32.gmra.mrb[0].mxu0 %v1134
    %v1202 = vpop.f32.mrb[0].mxu0
    %v1203 = vadd.f32 0.0, %v1202
    %v1204 = vpop.f32.mrb[0].mxu0
    %v1205 = vadd.f32 0.0, %v1204
    %1206 = vdwg.mxu0
    %1207 = vmatprep.subr.mxu0 0.0
    %1208 = vmatpush1.msra.mxu0 %v340
    %1209 = vmatprep.subr.mxu0 0.0
    %1210 = vmatpush1.msra.mxu0 %v343
    %1211 = vmatprep.subr.mxu0 0.0
    %1212 = vmatpush1.msra.mxu0 %v346
    %1213 = vmatprep.subr.mxu0 0.0
    %1214 = vmatpush1.msra.mxu0 %v349
    %1215 = vmatprep.subr.mxu0 0.0
    %1216 = vmatpush1.msra.mxu0 %v352
    %1217 = vmatprep.subr.mxu0 0.0
    %1218 = vmatpush1.msra.mxu0 %v355
    %1219 = vmatprep.subr.mxu0 0.0
    %1220 = vmatpush1.msra.mxu0 %v358
    %1221 = vmatprep.subr.mxu0 0.0
    %1222 = vmatpush1.msra.mxu0 %v361
    %1223 = vmatprep.subr.mxu0 0.0
    %1224 = vmatpush1.msra.mxu0 %v364
    %1225 = vmatprep.subr.mxu0 0.0
    %1226 = vmatpush1.msra.mxu0 %v367
    %1227 = vmatprep.subr.mxu0 0.0
    %1228 = vmatpush1.msra.mxu0 %v370
    %1229 = vmatprep.subr.mxu0 0.0
    %1230 = vmatpush1.msra.mxu0 %v373
    %1231 = vmatprep.subr.mxu0 0.0
    %1232 = vmatpush1.msra.mxu0 %v376
    %1233 = vmatprep.subr.mxu0 0.0
    %1234 = vmatpush1.msra.mxu0 %v379
    %1235 = vmatprep.subr.mxu0 0.0
    %1236 = vmatpush1.msra.mxu0 %v382
    %1237 = vmatprep.subr.mxu0 0.0
    %1238 = vmatpush1.msra.mxu0 %v385
    %1239 = vmatprep.subr.mxu0 0.0
    %1240 = vmatpush1.msra.mxu0 0.0
    %1241 = vmatprep.subr.mxu0 0.0
    %1242 = vmatpush1.msra.mxu0 0.0
    %1243 = vmatprep.subr.mxu0 0.0
    %1244 = vmatpush1.msra.mxu0 0.0
    %1245 = vmatprep.subr.mxu0 0.0
    %1246 = vmatpush1.msra.mxu0 0.0
    %1247 = vmatprep.subr.mxu0 0.0
    %1248 = vmatpush1.msra.mxu0 0.0
    %1249 = vmatprep.subr.mxu0 0.0
    %1250 = vmatpush1.msra.mxu0 0.0
    %1251 = vmatprep.subr.mxu0 0.0
    %1252 = vmatpush1.msra.mxu0 0.0
    %1253 = vmatprep.subr.mxu0 0.0
    %1254 = vmatpush1.msra.mxu0 0.0
    %1255 = vmatprep.subr.mxu0 0.0
    %1256 = vmatpush1.msra.mxu0 0.0
    %1257 = vmatprep.subr.mxu0 0.0
    %1258 = vmatpush1.msra.mxu0 0.0
    %1259 = vmatprep.subr.mxu0 0.0
    %1260 = vmatpush1.msra.mxu0 0.0
    %1261 = vmatprep.subr.mxu0 0.0
    %1262 = vmatpush1.msra.mxu0 0.0
    %1263 = vmatprep.subr.mxu0 0.0
    %1264 = vmatpush1.msra.mxu0 0.0
    %1265 = vmatprep.subr.mxu0 0.0
    %1266 = vmatpush1.msra.mxu0 0.0
    %1267 = vmatprep.subr.mxu0 0.0
    %1268 = vmatpush1.msra.mxu0 0.0
    %1269 = vmatprep.subr.mxu0 0.0
    %1270 = vmatpush1.msra.mxu0 0.0
    %1271 = vmatprep.mubr.f32.mxu0 0.0
    %1272 = vmatmul.mubr.f32.gmra.mrb[0].mxu0 %v1134
    %v1273 = vpop.f32.mrb[0].mxu0
    %v1274 = vadd.f32 0.0, %v1273
    %v1275 = vpop.f32.mrb[0].mxu0
    %1276 = vdwg.mxu0
    %v1278 = vrot.slane %v1132, 4
    %1280 = vmatprep.subr.mxu0 %v528
    %1281 = vmatpush1.msra.mxu0 %v527
    %1282 = vmatprep.subr.mxu0 %v531
    %1283 = vmatpush1.msra.mxu0 %v530
    %1284 = vmatprep.subr.mxu0 %v534
    %1285 = vmatpush1.msra.mxu0 %v533
    %1286 = vmatprep.subr.mxu0 %v537
    %1287 = vmatpush1.msra.mxu0 %v536
    %1288 = vmatprep.subr.mxu0 %v540
    %1289 = vmatpush1.msra.mxu0 %v539
    %1290 = vmatprep.subr.mxu0 %v543
    %1291 = vmatpush1.msra.mxu0 %v542
    %1292 = vmatprep.subr.mxu0 %v546
    %1293 = vmatpush1.msra.mxu0 %v545
    %1294 = vmatprep.subr.mxu0 %v549
    %1295 = vmatpush1.msra.mxu0 %v548
    %1296 = vmatprep.subr.mxu0 %v552
    %1297 = vmatpush1.msra.mxu0 %v551
    %1298 = vmatprep.subr.mxu0 %v555
    %1299 = vmatpush1.msra.mxu0 %v554
    %1300 = vmatprep.subr.mxu0 %v558
    %1301 = vmatpush1.msra.mxu0 %v557
    %1302 = vmatprep.subr.mxu0 %v561
    %1303 = vmatpush1.msra.mxu0 %v560
    %1304 = vmatprep.subr.mxu0 %v564
    %1305 = vmatpush1.msra.mxu0 %v563
    %1306 = vmatprep.subr.mxu0 %v567
    %1307 = vmatpush1.msra.mxu0 %v566
    %1308 = vmatprep.subr.mxu0 %v570
    %1309 = vmatpush1.msra.mxu0 %v569
    %1310 = vmatprep.subr.mxu0 %v573
    %1311 = vmatpush1.msra.mxu0 %v572
    %1312 = vmatprep.subr.mxu0 0.0
    %1313 = vmatpush1.msra.mxu0 0.0
    %1314 = vmatprep.subr.mxu0 0.0
    %1315 = vmatpush1.msra.mxu0 0.0
    %1316 = vmatprep.subr.mxu0 0.0
    %1317 = vmatpush1.msra.mxu0 0.0
    %1318 = vmatprep.subr.mxu0 0.0
    %1319 = vmatpush1.msra.mxu0 0.0
    %1320 = vmatprep.subr.mxu0 0.0
    %1321 = vmatpush1.msra.mxu0 0.0
    %1322 = vmatprep.subr.mxu0 0.0
    %1323 = vmatpush1.msra.mxu0 0.0
    %1324 = vmatprep.subr.mxu0 0.0
    %1325 = vmatpush1.msra.mxu0 0.0
    %1326 = vmatprep.subr.mxu0 0.0
    %1327 = vmatpush1.msra.mxu0 0.0
    %1328 = vmatprep.subr.mxu0 0.0
    %1329 = vmatpush1.msra.mxu0 0.0
    %1330 = vmatprep.subr.mxu0 0.0
    %1331 = vmatpush1.msra.mxu0 0.0
    %1332 = vmatprep.subr.mxu0 0.0
    %1333 = vmatpush1.msra.mxu0 0.0
    %1334 = vmatprep.subr.mxu0 0.0
    %1335 = vmatpush1.msra.mxu0 0.0
    %1336 = vmatprep.subr.mxu0 0.0
    %1337 = vmatpush1.msra.mxu0 0.0
    %1338 = vmatprep.subr.mxu0 0.0
    %1339 = vmatpush1.msra.mxu0 0.0
    %1340 = vmatprep.subr.mxu0 0.0
    %1341 = vmatpush1.msra.mxu0 0.0
    %1342 = vmatprep.subr.mxu0 0.0
    %1343 = vmatpush1.msra.mxu0 0.0
    %1344 = vmatprep.mubr.f32.mxu0 0.0
    %1345 = vmatmul.mubr.f32.gmra.mrb[0].mxu0 %v1278
    %v1346 = vpop.f32.mrb[0].mxu0
    %v1347 = vadd.f32 0.0, %v1346
    %v1348 = vpop.f32.mrb[0].mxu0
    %v1349 = vadd.f32 0.0, %v1348
    %1350 = vdwg.mxu0
    %1351 = vmatprep.subr.mxu0 0.0
    %1352 = vmatpush1.msra.mxu0 %v529
    %1353 = vmatprep.subr.mxu0 0.0
    %1354 = vmatpush1.msra.mxu0 %v532
    %1355 = vmatprep.subr.mxu0 0.0
    %1356 = vmatpush1.msra.mxu0 %v535
    %1357 = vmatprep.subr.mxu0 0.0
    %1358 = vmatpush1.msra.mxu0 %v538
    %1359 = vmatprep.subr.mxu0 0.0
    %1360 = vmatpush1.msra.mxu0 %v541
    %1361 = vmatprep.subr.mxu0 0.0
    %1362 = vmatpush1.msra.mxu0 %v544
    %1363 = vmatprep.subr.mxu0 0.0
    %1364 = vmatpush1.msra.mxu0 %v547
    %1365 = vmatprep.subr.mxu0 0.0
    %1366 = vmatpush1.msra.mxu0 %v550
    %1367 = vmatprep.subr.mxu0 0.0
    %1368 = vmatpush1.msra.mxu0 %v553
    %1369 = vmatprep.subr.mxu0 0.0
    %1370 = vmatpush1.msra.mxu0 %v556
    %1371 = vmatprep.subr.mxu0 0.0
    %1372 = vmatpush1.msra.mxu0 %v559
    %1373 = vmatprep.subr.mxu0 0.0
    %1374 = vmatpush1.msra.mxu0 %v562
    %1375 = vmatprep.subr.mxu0 0.0
    %1376 = vmatpush1.msra.mxu0 %v565
    %1377 = vmatprep.subr.mxu0 0.0
    %1378 = vmatpush1.msra.mxu0 %v568
    %1379 = vmatprep.subr.mxu0 0.0
    %1380 = vmatpush1.msra.mxu0 %v571
    %1381 = vmatprep.subr.mxu0 0.0
    %1382 = vmatpush1.msra.mxu0 %v574
    %1383 = vmatprep.subr.mxu0 0.0
    %1384 = vmatpush1.msra.mxu0 0.0
    %1385 = vmatprep.subr.mxu0 0.0
    %1386 = vmatpush1.msra.mxu0 0.0
    %1387 = vmatprep.subr.mxu0 0.0
    %1388 = vmatpush1.msra.mxu0 0.0
    %1389 = vmatprep.subr.mxu0 0.0
    %1390 = vmatpush1.msra.mxu0 0.0
    %1391 = vmatprep.subr.mxu0 0.0
    %1392 = vmatpush1.msra.mxu0 0.0
    %1393 = vmatprep.subr.mxu0 0.0
    %1394 = vmatpush1.msra.mxu0 0.0
    %1395 = vmatprep.subr.mxu0 0.0
    %1396 = vmatpush1.msra.mxu0 0.0
    %1397 = vmatprep.subr.mxu0 0.0
    %1398 = vmatpush1.msra.mxu0 0.0
    %1399 = vmatprep.subr.mxu0 0.0
    %1400 = vmatpush1.msra.mxu0 0.0
    %1401 = vmatprep.subr.mxu0 0.0
    %1402 = vmatpush1.msra.mxu0 0.0
    %1403 = vmatprep.subr.mxu0 0.0
    %1404 = vmatpush1.msra.mxu0 0.0
    %1405 = vmatprep.subr.mxu0 0.0
    %1406 = vmatpush1.msra.mxu0 0.0
    %1407 = vmatprep.subr.mxu0 0.0
    %1408 = vmatpush1.msra.mxu0 0.0
    %1409 = vmatprep.subr.mxu0 0.0
    %1410 = vmatpush1.msra.mxu0 0.0
    %1411 = vmatprep.subr.mxu0 0.0
    %1412 = vmatpush1.msra.mxu0 0.0
    %1413 = vmatprep.subr.mxu0 0.0
    %1414 = vmatpush1.msra.mxu0 0.0
    %1415 = vmatprep.mubr.f32.mxu0 0.0
    %1416 = vmatmul.mubr.f32.gmra.mrb[0].mxu0 %v1278
    %v1417 = vpop.f32.mrb[0].mxu0
    %v1418 = vadd.f32 0.0, %v1417
    %v1419 = vpop.f32.mrb[0].mxu0
    %1420 = vdwg.mxu0
    %v1422 = vrot.slane %v1203, 4
    %v1424 = vadd.f32 %v172, %v1422
    %v1425 = vxor.u32 %v1424, 2147483648
    %v1426 = vmul.f32 %v1425, 1.442695
    %v1427 = vpow.pop %v1426
    %v1428 = vadd.f32 %v1427, 1.0
    %v1429 = vrcp.pop %v1428
    %v1430 = vmul.f32 1.0, %v1429
    %v1432 = vrot.slane %v1205, 4
    %v1434 = vadd.f32 %v174, %v1432
    %v1435 = vxor.u32 %v1434, 2147483648
    %v1436 = vmul.f32 %v1435, 1.442695
    %v1437 = vpow.pop %v1436
    %v1438 = vadd.f32 %v1437, 1.0
    %v1439 = vrcp.pop %v1438
    %v1440 = vmul.f32 1.0, %v1439
    %v1441 = vadd.f32 %v1274, %v734
    %v1443 = vrot.slane %v1441, 4
    %v1445 = vmul.f32 %v1430, %v1443
    %v1446 = vadd.f32 %v249, %v1445
    %v1447 = vtanh.pop %v1446
    %v1448 = vsub.f32 1.0, %v1440
    %v1449 = vmul.f32 %v1448, %v1447
    %v1450 = vrot.slane %v1099, 6
    %v1452 = vmul.f32 %v1440, %v1450
    %v1453 = vadd.f32 %v1449, %v1452
    %v1455 = vrot.slane %v1347, 6
    %v1457 = vadd.f32 %v257, %v1455
    %v1458 = vxor.u32 %v1457, 2147483648
    %v1459 = vmul.f32 %v1458, 1.442695
    %v1460 = vpow.pop %v1459
    %v1461 = vadd.f32 %v1460, 1.0
    %v1462 = vrcp.pop %v1461
    %v1463 = vmul.f32 1.0, %v1462
    %v1465 = vrot.slane %v1349, 6
    %v1467 = vadd.f32 %v332, %v1465
    %v1468 = vxor.u32 %v1467, 2147483648
    %v1469 = vmul.f32 %v1468, 1.442695
    %v1470 = vpow.pop %v1469
    %v1471 = vadd.f32 %v1470, 1.0
    %v1472 = vrcp.pop %v1471
    %v1473 = vmul.f32 1.0, %v1472
    %v1474 = vadd.f32 %v1418, %v768
    %v1476 = vrot.slane %v1474, 6
    %v1478 = vmul.f32 %v1463, %v1476
    %v1479 = vadd.f32 %v334, %v1478
    %v1480 = vtanh.pop %v1479
    %v1481 = vsub.f32 1.0, %v1473
    %v1482 = vmul.f32 %v1481, %v1480
    %v1483 = vrot.slane %v1132, 2
    %v1485 = vmul.f32 %v1473, %v1483
    %v1486 = vadd.f32 %v1482, %v1485
    %v1488 = vrot.slane %v1453, 4
    %1490 = vmatprep.subr.mxu0 %v339
    %1491 = vmatpush1.msra.mxu0 %v338
    %1492 = vmatprep.subr.mxu0 %v342
    %1493 = vmatpush1.msra.mxu0 %v341
    %1494 = vmatprep.subr.mxu0 %v345
    %1495 = vmatpush1.msra.mxu0 %v344
    %1496 = vmatprep.subr.mxu0 %v348
    %1497 = vmatpush1.msra.mxu0 %v347
    %1498 = vmatprep.subr.mxu0 %v351
    %1499 = vmatpush1.msra.mxu0 %v350
    %1500 = vmatprep.subr.mxu0 %v354
    %1501 = vmatpush1.msra.mxu0 %v353
    %1502 = vmatprep.subr.mxu0 %v357
    %1503 = vmatpush1.msra.mxu0 %v356
    %1504 = vmatprep.subr.mxu0 %v360
    %1505 = vmatpush1.msra.mxu0 %v359
    %1506 = vmatprep.subr.mxu0 %v363
    %1507 = vmatpush1.msra.mxu0 %v362
    %1508 = vmatprep.subr.mxu0 %v366
    %1509 = vmatpush1.msra.mxu0 %v365
    %1510 = vmatprep.subr.mxu0 %v369
    %1511 = vmatpush1.msra.mxu0 %v368
    %1512 = vmatprep.subr.mxu0 %v372
    %1513 = vmatpush1.msra.mxu0 %v371
    %1514 = vmatprep.subr.mxu0 %v375
    %1515 = vmatpush1.msra.mxu0 %v374
    %1516 = vmatprep.subr.mxu0 %v378
    %1517 = vmatpush1.msra.mxu0 %v377
    %1518 = vmatprep.subr.mxu0 %v381
    %1519 = vmatpush1.msra.mxu0 %v380
    %1520 = vmatprep.subr.mxu0 %v384
    %1521 = vmatpush1.msra.mxu0 %v383
    %1522 = vmatprep.subr.mxu0 0.0
    %1523 = vmatpush1.msra.mxu0 0.0
    %1524 = vmatprep.subr.mxu0 0.0
    %1525 = vmatpush1.msra.mxu0 0.0
    %1526 = vmatprep.subr.mxu0 0.0
    %1527 = vmatpush1.msra.mxu0 0.0
    %1528 = vmatprep.subr.mxu0 0.0
    %1529 = vmatpush1.msra.mxu0 0.0
    %1530 = vmatprep.subr.mxu0 0.0
    %1531 = vmatpush1.msra.mxu0 0.0
    %1532 = vmatprep.subr.mxu0 0.0
    %1533 = vmatpush1.msra.mxu0 0.0
    %1534 = vmatprep.subr.mxu0 0.0
    %1535 = vmatpush1.msra.mxu0 0.0
    %1536 = vmatprep.subr.mxu0 0.0
    %1537 = vmatpush1.msra.mxu0 0.0
    %1538 = vmatprep.subr.mxu0 0.0
    %1539 = vmatpush1.msra.mxu0 0.0
    %1540 = vmatprep.subr.mxu0 0.0
    %1541 = vmatpush1.msra.mxu0 0.0
    %1542 = vmatprep.subr.mxu0 0.0
    %1543 = vmatpush1.msra.mxu0 0.0
    %1544 = vmatprep.subr.mxu0 0.0
    %1545 = vmatpush1.msra.mxu0 0.0
    %1546 = vmatprep.subr.mxu0 0.0
    %1547 = vmatpush1.msra.mxu0 0.0
    %1548 = vmatprep.subr.mxu0 0.0
    %1549 = vmatpush1.msra.mxu0 0.0
    %1550 = vmatprep.subr.mxu0 0.0
    %1551 = vmatpush1.msra.mxu0 0.0
    %1552 = vmatprep.subr.mxu0 0.0
    %1553 = vmatpush1.msra.mxu0 0.0
    %1554 = vmatprep.mubr.f32.mxu0 0.0
    %1555 = vmatmul.mubr.f32.gmra.mrb[0].mxu0 %v1488
    %v1556 = vpop.f32.mrb[0].mxu0
    %v1557 = vadd.f32 0.0, %v1556
    %v1558 = vpop.f32.mrb[0].mxu0
    %v1559 = vadd.f32 0.0, %v1558
    %1560 = vdwg.mxu0
    %1561 = vmatprep.subr.mxu0 0.0
    %1562 = vmatpush1.msra.mxu0 %v340
    %1563 = vmatprep.subr.mxu0 0.0
    %1564 = vmatpush1.msra.mxu0 %v343
    %1565 = vmatprep.subr.mxu0 0.0
    %1566 = vmatpush1.msra.mxu0 %v346
    %1567 = vmatprep.subr.mxu0 0.0
    %1568 = vmatpush1.msra.mxu0 %v349
    %1569 = vmatprep.subr.mxu0 0.0
    %1570 = vmatpush1.msra.mxu0 %v352
    %1571 = vmatprep.subr.mxu0 0.0
    %1572 = vmatpush1.msra.mxu0 %v355
    %1573 = vmatprep.subr.mxu0 0.0
    %1574 = vmatpush1.msra.mxu0 %v358
    %1575 = vmatprep.subr.mxu0 0.0
    %1576 = vmatpush1.msra.mxu0 %v361
    %1577 = vmatprep.subr.mxu0 0.0
    %1578 = vmatpush1.msra.mxu0 %v364
    %1579 = vmatprep.subr.mxu0 0.0
    %1580 = vmatpush1.msra.mxu0 %v367
    %1581 = vmatprep.subr.mxu0 0.0
    %1582 = vmatpush1.msra.mxu0 %v370
    %1583 = vmatprep.subr.mxu0 0.0
    %1584 = vmatpush1.msra.mxu0 %v373
    %1585 = vmatprep.subr.mxu0 0.0
    %1586 = vmatpush1.msra.mxu0 %v376
    %1587 = vmatprep.subr.mxu0 0.0
    %1588 = vmatpush1.msra.mxu0 %v379
    %1589 = vmatprep.subr.mxu0 0.0
    %1590 = vmatpush1.msra.mxu0 %v382
    %1591 = vmatprep.subr.mxu0 0.0
    %1592 = vmatpush1.msra.mxu0 %v385
    %1593 = vmatprep.subr.mxu0 0.0
    %1594 = vmatpush1.msra.mxu0 0.0
    %1595 = vmatprep.subr.mxu0 0.0
    %1596 = vmatpush1.msra.mxu0 0.0
    %1597 = vmatprep.subr.mxu0 0.0
    %1598 = vmatpush1.msra.mxu0 0.0
    %1599 = vmatprep.subr.mxu0 0.0
    %1600 = vmatpush1.msra.mxu0 0.0
    %1601 = vmatprep.subr.mxu0 0.0
    %1602 = vmatpush1.msra.mxu0 0.0
    %1603 = vmatprep.subr.mxu0 0.0
    %1604 = vmatpush1.msra.mxu0 0.0
    %1605 = vmatprep.subr.mxu0 0.0
    %1606 = vmatpush1.msra.mxu0 0.0
    %1607 = vmatprep.subr.mxu0 0.0
    %1608 = vmatpush1.msra.mxu0 0.0
    %1609 = vmatprep.subr.mxu0 0.0
    %1610 = vmatpush1.msra.mxu0 0.0
    %1611 = vmatprep.subr.mxu0 0.0
    %1612 = vmatpush1.msra.mxu0 0.0
    %1613 = vmatprep.subr.mxu0 0.0
    %1614 = vmatpush1.msra.mxu0 0.0
    %1615 = vmatprep.subr.mxu0 0.0
    %1616 = vmatpush1.msra.mxu0 0.0
    %1617 = vmatprep.subr.mxu0 0.0
    %1618 = vmatpush1.msra.mxu0 0.0
    %1619 = vmatprep.subr.mxu0 0.0
    %1620 = vmatpush1.msra.mxu0 0.0
    %1621 = vmatprep.subr.mxu0 0.0
    %1622 = vmatpush1.msra.mxu0 0.0
    %1623 = vmatprep.subr.mxu0 0.0
    %1624 = vmatpush1.msra.mxu0 0.0
    %1625 = vmatprep.mubr.f32.mxu0 0.0
    %1626 = vmatmul.mubr.f32.gmra.mrb[0].mxu0 %v1488
    %v1627 = vpop.f32.mrb[0].mxu0
    %v1628 = vadd.f32 0.0, %v1627
    %v1629 = vpop.f32.mrb[0].mxu0
    %1630 = vdwg.mxu0
    %v1632 = vrot.slane %v1486, 2
    %1634 = vmatprep.subr.mxu0 %v528
    %1635 = vmatpush1.msra.mxu0 %v527
    %1636 = vmatprep.subr.mxu0 %v531
    %1637 = vmatpush1.msra.mxu0 %v530
    %1638 = vmatprep.subr.mxu0 %v534
    %1639 = vmatpush1.msra.mxu0 %v533
    %1640 = vmatprep.subr.mxu0 %v537
    %1641 = vmatpush1.msra.mxu0 %v536
    %1642 = vmatprep.subr.mxu0 %v540
    %1643 = vmatpush1.msra.mxu0 %v539
    %1644 = vmatprep.subr.mxu0 %v543
    %1645 = vmatpush1.msra.mxu0 %v542
    %1646 = vmatprep.subr.mxu0 %v546
    %1647 = vmatpush1.msra.mxu0 %v545
    %1648 = vmatprep.subr.mxu0 %v549
    %1649 = vmatpush1.msra.mxu0 %v548
    %1650 = vmatprep.subr.mxu0 %v552
    %1651 = vmatpush1.msra.mxu0 %v551
    %1652 = vmatprep.subr.mxu0 %v555
    %1653 = vmatpush1.msra.mxu0 %v554
    %1654 = vmatprep.subr.mxu0 %v558
    %1655 = vmatpush1.msra.mxu0 %v557
    %1656 = vmatprep.subr.mxu0 %v561
    %1657 = vmatpush1.msra.mxu0 %v560
    %1658 = vmatprep.subr.mxu0 %v564
    %1659 = vmatpush1.msra.mxu0 %v563
    %1660 = vmatprep.subr.mxu0 %v567
    %1661 = vmatpush1.msra.mxu0 %v566
    %1662 = vmatprep.subr.mxu0 %v570
    %1663 = vmatpush1.msra.mxu0 %v569
    %1664 = vmatprep.subr.mxu0 %v573
    %1665 = vmatpush1.msra.mxu0 %v572
    %1666 = vmatprep.subr.mxu0 0.0
    %1667 = vmatpush1.msra.mxu0 0.0
    %1668 = vmatprep.subr.mxu0 0.0
    %1669 = vmatpush1.msra.mxu0 0.0
    %1670 = vmatprep.subr.mxu0 0.0
    %1671 = vmatpush1.msra.mxu0 0.0
    %1672 = vmatprep.subr.mxu0 0.0
    %1673 = vmatpush1.msra.mxu0 0.0
    %1674 = vmatprep.subr.mxu0 0.0
    %1675 = vmatpush1.msra.mxu0 0.0
    %1676 = vmatprep.subr.mxu0 0.0
    %1677 = vmatpush1.msra.mxu0 0.0
    %1678 = vmatprep.subr.mxu0 0.0
    %1679 = vmatpush1.msra.mxu0 0.0
    %1680 = vmatprep.subr.mxu0 0.0
    %1681 = vmatpush1.msra.mxu0 0.0
    %1682 = vmatprep.subr.mxu0 0.0
    %1683 = vmatpush1.msra.mxu0 0.0
    %1684 = vmatprep.subr.mxu0 0.0
    %1685 = vmatpush1.msra.mxu0 0.0
    %1686 = vmatprep.subr.mxu0 0.0
    %1687 = vmatpush1.msra.mxu0 0.0
    %1688 = vmatprep.subr.mxu0 0.0
    %1689 = vmatpush1.msra.mxu0 0.0
    %1690 = vmatprep.subr.mxu0 0.0
    %1691 = vmatpush1.msra.mxu0 0.0
    %1692 = vmatprep.subr.mxu0 0.0
    %1693 = vmatpush1.msra.mxu0 0.0
    %1694 = vmatprep.subr.mxu0 0.0
    %1695 = vmatpush1.msra.mxu0 0.0
    %1696 = vmatprep.subr.mxu0 0.0
    %1697 = vmatpush1.msra.mxu0 0.0
    %1698 = vmatprep.mubr.f32.mxu0 0.0
    %1699 = vmatmul.mubr.f32.gmra.mrb[0].mxu0 %v1632
    %v1700 = vpop.f32.mrb[0].mxu0
    %v1701 = vadd.f32 0.0, %v1700
    %v1702 = vpop.f32.mrb[0].mxu0
    %v1703 = vadd.f32 0.0, %v1702
    %1704 = vdwg.mxu0
    %1705 = vmatprep.subr.mxu0 0.0
    %1706 = vmatpush1.msra.mxu0 %v529
    %1707 = vmatprep.subr.mxu0 0.0
    %1708 = vmatpush1.msra.mxu0 %v532
    %1709 = vmatprep.subr.mxu0 0.0
    %1710 = vmatpush1.msra.mxu0 %v535
    %1711 = vmatprep.subr.mxu0 0.0
    %1712 = vmatpush1.msra.mxu0 %v538
    %1713 = vmatprep.subr.mxu0 0.0
    %1714 = vmatpush1.msra.mxu0 %v541
    %1715 = vmatprep.subr.mxu0 0.0
    %1716 = vmatpush1.msra.mxu0 %v544
    %1717 = vmatprep.subr.mxu0 0.0
    %1718 = vmatpush1.msra.mxu0 %v547
    %1719 = vmatprep.subr.mxu0 0.0
    %1720 = vmatpush1.msra.mxu0 %v550
    %1721 = vmatprep.subr.mxu0 0.0
    %1722 = vmatpush1.msra.mxu0 %v553
    %1723 = vmatprep.subr.mxu0 0.0
    %1724 = vmatpush1.msra.mxu0 %v556
    %1725 = vmatprep.subr.mxu0 0.0
    %1726 = vmatpush1.msra.mxu0 %v559
    %1727 = vmatprep.subr.mxu0 0.0
    %1728 = vmatpush1.msra.mxu0 %v562
    %1729 = vmatprep.subr.mxu0 0.0
    %1730 = vmatpush1.msra.mxu0 %v565
    %1731 = vmatprep.subr.mxu0 0.0
    %1732 = vmatpush1.msra.mxu0 %v568
    %1733 = vmatprep.subr.mxu0 0.0
    %1734 = vmatpush1.msra.mxu0 %v571
    %1735 = vmatprep.subr.mxu0 0.0
    %1736 = vmatpush1.msra.mxu0 %v574
    %1737 = vmatprep.subr.mxu0 0.0
    %1738 = vmatpush1.msra.mxu0 0.0
    %1739 = vmatprep.subr.mxu0 0.0
    %1740 = vmatpush1.msra.mxu0 0.0
    %1741 = vmatprep.subr.mxu0 0.0
    %1742 = vmatpush1.msra.mxu0 0.0
    %1743 = vmatprep.subr.mxu0 0.0
    %1744 = vmatpush1.msra.mxu0 0.0
    %1745 = vmatprep.subr.mxu0 0.0
    %1746 = vmatpush1.msra.mxu0 0.0
    %1747 = vmatprep.subr.mxu0 0.0
    %1748 = vmatpush1.msra.mxu0 0.0
    %1749 = vmatprep.subr.mxu0 0.0
    %1750 = vmatpush1.msra.mxu0 0.0
    %1751 = vmatprep.subr.mxu0 0.0
    %1752 = vmatpush1.msra.mxu0 0.0
    %1753 = vmatprep.subr.mxu0 0.0
    %1754 = vmatpush1.msra.mxu0 0.0
    %1755 = vmatprep.subr.mxu0 0.0
    %1756 = vmatpush1.msra.mxu0 0.0
    %1757 = vmatprep.subr.mxu0 0.0
    %1758 = vmatpush1.msra.mxu0 0.0
    %1759 = vmatprep.subr.mxu0 0.0
    %1760 = vmatpush1.msra.mxu0 0.0
    %1761 = vmatprep.subr.mxu0 0.0
    %1762 = vmatpush1.msra.mxu0 0.0
    %1763 = vmatprep.subr.mxu0 0.0
    %1764 = vmatpush1.msra.mxu0 0.0
    %1765 = vmatprep.subr.mxu0 0.0
    %1766 = vmatpush1.msra.mxu0 0.0
    %1767 = vmatprep.subr.mxu0 0.0
    %1768 = vmatpush1.msra.mxu0 0.0
    %1769 = vmatprep.mubr.f32.mxu0 0.0
    %1770 = vmatmul.mubr.f32.gmra.mrb[0].mxu0 %v1632
    %v1771 = vpop.f32.mrb[0].mxu0
    %v1772 = vadd.f32 0.0, %v1771
    %v1773 = vpop.f32.mrb[0].mxu0
    %1774 = vdwg.mxu0
    %v1776 = vrot.slane %v1557, 2
    %v1778 = vadd.f32 %v172, %v1776
    %v1779 = vxor.u32 %v1778, 2147483648
    %v1780 = vmul.f32 %v1779, 1.442695
    %v1781 = vpow.pop %v1780
    %v1782 = vadd.f32 %v1781, 1.0
    %v1783 = vrcp.pop %v1782
    %v1784 = vmul.f32 1.0, %v1783
    %v1786 = vrot.slane %v1559, 2
    %v1788 = vadd.f32 %v174, %v1786
    %v1789 = vxor.u32 %v1788, 2147483648
    %v1790 = vmul.f32 %v1789, 1.442695
    %v1791 = vpow.pop %v1790
    %v1792 = vadd.f32 %v1791, 1.0
    %v1793 = vrcp.pop %v1792
    %v1794 = vmul.f32 1.0, %v1793
    %v1795 = vadd.f32 %v1628, %v734
    %v1797 = vrot.slane %v1795, 2
    %v1799 = vmul.f32 %v1784, %v1797
    %v1800 = vadd.f32 %v249, %v1799
    %v1801 = vtanh.pop %v1800
    %v1802 = vsub.f32 1.0, %v1794
    %v1803 = vmul.f32 %v1802, %v1801
    %v1804 = vrot.slane %v1453, 6
    %v1806 = vmul.f32 %v1794, %v1804
    %v1807 = vadd.f32 %v1803, %v1806
    %v1808 = vadd.f32 %v257, %v1701
    %v1809 = vxor.u32 %v1808, 2147483648
    %v1810 = vmul.f32 %v1809, 1.442695
    %v1811 = vpow.pop %v1810
    %v1812 = vadd.f32 %v1811, 1.0
    %v1813 = vrcp.pop %v1812
    %v1814 = vmul.f32 1.0, %v1813
    %v1815 = vadd.f32 %v332, %v1703
    %v1816 = vxor.u32 %v1815, 2147483648
    %v1817 = vmul.f32 %v1816, 1.442695
    %v1818 = vpow.pop %v1817
    %v1819 = vadd.f32 %v1818, 1.0
    %v1820 = vrcp.pop %v1819
    %v1821 = vmul.f32 1.0, %v1820
    %v1822 = vadd.f32 %v1772, %v768
    %v1823 = vmul.f32 %v1814, %v1822
    %v1824 = vadd.f32 %v334, %v1823
    %v1825 = vtanh.pop %v1824
    %v1826 = vsub.f32 1.0, %v1821
    %v1827 = vmul.f32 %v1826, %v1825
    %v1828 = vmul.f32 %v1821, %v1632
    %v1829 = vadd.f32 %v1827, %v1828
    %v1831 = vrot.slane %v1807, 6
    %1833 = vmatprep.subr.mxu0 %v339
    %1834 = vmatpush1.msra.mxu0 %v338
    %1835 = vmatprep.subr.mxu0 %v342
    %1836 = vmatpush1.msra.mxu0 %v341
    %1837 = vmatprep.subr.mxu0 %v345
    %1838 = vmatpush1.msra.mxu0 %v344
    %1839 = vmatprep.subr.mxu0 %v348
    %1840 = vmatpush1.msra.mxu0 %v347
    %1841 = vmatprep.subr.mxu0 %v351
    %1842 = vmatpush1.msra.mxu0 %v350
    %1843 = vmatprep.subr.mxu0 %v354
    %1844 = vmatpush1.msra.mxu0 %v353
    %1845 = vmatprep.subr.mxu0 %v357
    %1846 = vmatpush1.msra.mxu0 %v356
    %1847 = vmatprep.subr.mxu0 %v360
    %1848 = vmatpush1.msra.mxu0 %v359
    %1849 = vmatprep.subr.mxu0 %v363
    %1850 = vmatpush1.msra.mxu0 %v362
    %1851 = vmatprep.subr.mxu0 %v366
    %1852 = vmatpush1.msra.mxu0 %v365
    %1853 = vmatprep.subr.mxu0 %v369
    %1854 = vmatpush1.msra.mxu0 %v368
    %1855 = vmatprep.subr.mxu0 %v372
    %1856 = vmatpush1.msra.mxu0 %v371
    %1857 = vmatprep.subr.mxu0 %v375
    %1858 = vmatpush1.msra.mxu0 %v374
    %1859 = vmatprep.subr.mxu0 %v378
    %1860 = vmatpush1.msra.mxu0 %v377
    %1861 = vmatprep.subr.mxu0 %v381
    %1862 = vmatpush1.msra.mxu0 %v380
    %1863 = vmatprep.subr.mxu0 %v384
    %1864 = vmatpush1.msra.mxu0 %v383
    %1865 = vmatprep.subr.mxu0 0.0
    %1866 = vmatpush1.msra.mxu0 0.0
    %1867 = vmatprep.subr.mxu0 0.0
    %1868 = vmatpush1.msra.mxu0 0.0
    %1869 = vmatprep.subr.mxu0 0.0
    %1870 = vmatpush1.msra.mxu0 0.0
    %1871 = vmatprep.subr.mxu0 0.0
    %1872 = vmatpush1.msra.mxu0 0.0
    %1873 = vmatprep.subr.mxu0 0.0
    %1874 = vmatpush1.msra.mxu0 0.0
    %1875 = vmatprep.subr.mxu0 0.0
    %1876 = vmatpush1.msra.mxu0 0.0
    %1877 = vmatprep.subr.mxu0 0.0
    %1878 = vmatpush1.msra.mxu0 0.0
    %1879 = vmatprep.subr.mxu0 0.0
    %1880 = vmatpush1.msra.mxu0 0.0
    %1881 = vmatprep.subr.mxu0 0.0
    %1882 = vmatpush1.msra.mxu0 0.0
    %1883 = vmatprep.subr.mxu0 0.0
    %1884 = vmatpush1.msra.mxu0 0.0
    %1885 = vmatprep.subr.mxu0 0.0
    %1886 = vmatpush1.msra.mxu0 0.0
    %1887 = vmatprep.subr.mxu0 0.0
    %1888 = vmatpush1.msra.mxu0 0.0
    %1889 = vmatprep.subr.mxu0 0.0
    %1890 = vmatpush1.msra.mxu0 0.0
    %1891 = vmatprep.subr.mxu0 0.0
    %1892 = vmatpush1.msra.mxu0 0.0
    %1893 = vmatprep.subr.mxu0 0.0
    %1894 = vmatpush1.msra.mxu0 0.0
    %1895 = vmatprep.subr.mxu0 0.0
    %1896 = vmatpush1.msra.mxu0 0.0
    %1897 = vmatprep.mubr.f32.mxu0 0.0
    %1898 = vmatmul.mubr.f32.gmra.mrb[0].mxu0 %v1831
    %v1899 = vpop.f32.mrb[0].mxu0
    %v1900 = vadd.f32 0.0, %v1899
    %v1901 = vpop.f32.mrb[0].mxu0
    %v1902 = vadd.f32 0.0, %v1901
    %1903 = vdwg.mxu0
    %1904 = vmatprep.subr.mxu0 0.0
    %1905 = vmatpush1.msra.mxu0 %v340
    %1906 = vmatprep.subr.mxu0 0.0
    %1907 = vmatpush1.msra.mxu0 %v343
    %1908 = vmatprep.subr.mxu0 0.0
    %1909 = vmatpush1.msra.mxu0 %v346
    %1910 = vmatprep.subr.mxu0 0.0
    %1911 = vmatpush1.msra.mxu0 %v349
    %1912 = vmatprep.subr.mxu0 0.0
    %1913 = vmatpush1.msra.mxu0 %v352
    %1914 = vmatprep.subr.mxu0 0.0
    %1915 = vmatpush1.msra.mxu0 %v355
    %1916 = vmatprep.subr.mxu0 0.0
    %1917 = vmatpush1.msra.mxu0 %v358
    %1918 = vmatprep.subr.mxu0 0.0
    %1919 = vmatpush1.msra.mxu0 %v361
    %1920 = vmatprep.subr.mxu0 0.0
    %1921 = vmatpush1.msra.mxu0 %v364
    %1922 = vmatprep.subr.mxu0 0.0
    %1923 = vmatpush1.msra.mxu0 %v367
    %1924 = vmatprep.subr.mxu0 0.0
    %1925 = vmatpush1.msra.mxu0 %v370
    %1926 = vmatprep.subr.mxu0 0.0
    %1927 = vmatpush1.msra.mxu0 %v373
    %1928 = vmatprep.subr.mxu0 0.0
    %1929 = vmatpush1.msra.mxu0 %v376
    %1930 = vmatprep.subr.mxu0 0.0
    %1931 = vmatpush1.msra.mxu0 %v379
    %1932 = vmatprep.subr.mxu0 0.0
    %1933 = vmatpush1.msra.mxu0 %v382
    %1934 = vmatprep.subr.mxu0 0.0
    %1935 = vmatpush1.msra.mxu0 %v385
    %1936 = vmatprep.subr.mxu0 0.0
    %1937 = vmatpush1.msra.mxu0 0.0
    %1938 = vmatprep.subr.mxu0 0.0
    %1939 = vmatpush1.msra.mxu0 0.0
    %1940 = vmatprep.subr.mxu0 0.0
    %1941 = vmatpush1.msra.mxu0 0.0
    %1942 = vmatprep.subr.mxu0 0.0
    %1943 = vmatpush1.msra.mxu0 0.0
    %1944 = vmatprep.subr.mxu0 0.0
    %1945 = vmatpush1.msra.mxu0 0.0
    %1946 = vmatprep.subr.mxu0 0.0
    %1947 = vmatpush1.msra.mxu0 0.0
    %1948 = vmatprep.subr.mxu0 0.0
    %1949 = vmatpush1.msra.mxu0 0.0
    %1950 = vmatprep.subr.mxu0 0.0
    %1951 = vmatpush1.msra.mxu0 0.0
    %1952 = vmatprep.subr.mxu0 0.0
    %1953 = vmatpush1.msra.mxu0 0.0
    %1954 = vmatprep.subr.mxu0 0.0
    %1955 = vmatpush1.msra.mxu0 0.0
    %1956 = vmatprep.subr.mxu0 0.0
    %1957 = vmatpush1.msra.mxu0 0.0
    %1958 = vmatprep.subr.mxu0 0.0
    %1959 = vmatpush1.msra.mxu0 0.0
    %1960 = vmatprep.subr.mxu0 0.0
    %1961 = vmatpush1.msra.mxu0 0.0
    %1962 = vmatprep.subr.mxu0 0.0
    %1963 = vmatpush1.msra.mxu0 0.0
    %1964 = vmatprep.subr.mxu0 0.0
    %1965 = vmatpush1.msra.mxu0 0.0
    %1966 = vmatprep.subr.mxu0 0.0
    %1967 = vmatpush1.msra.mxu0 0.0
    %1968 = vmatprep.mubr.f32.mxu0 0.0
    %1969 = vmatmul.mubr.f32.gmra.mrb[0].mxu0 %v1831
    %v1970 = vpop.f32.mrb[0].mxu0
    %v1971 = vadd.f32 0.0, %v1970
    %v1972 = vpop.f32.mrb[0].mxu0
    %1973 = vdwg.mxu0
    %1974 = vmatprep.subr.mxu0 %v528
    %1975 = vmatpush1.msra.mxu0 %v527
    %1976 = vmatprep.subr.mxu0 %v531
    %1977 = vmatpush1.msra.mxu0 %v530
    %1978 = vmatprep.subr.mxu0 %v534
    %1979 = vmatpush1.msra.mxu0 %v533
    %1980 = vmatprep.subr.mxu0 %v537
    %1981 = vmatpush1.msra.mxu0 %v536
    %1982 = vmatprep.subr.mxu0 %v540
    %1983 = vmatpush1.msra.mxu0 %v539
    %1984 = vmatprep.subr.mxu0 %v543
    %1985 = vmatpush1.msra.mxu0 %v542
    %1986 = vmatprep.subr.mxu0 %v546
    %1987 = vmatpush1.msra.mxu0 %v545
    %1988 = vmatprep.subr.mxu0 %v549
    %1989 = vmatpush1.msra.mxu0 %v548
    %1990 = vmatprep.subr.mxu0 %v552
    %1991 = vmatpush1.msra.mxu0 %v551
    %1992 = vmatprep.subr.mxu0 %v555
    %1993 = vmatpush1.msra.mxu0 %v554
    %1994 = vmatprep.subr.mxu0 %v558
    %1995 = vmatpush1.msra.mxu0 %v557
    %1996 = vmatprep.subr.mxu0 %v561
    %1997 = vmatpush1.msra.mxu0 %v560
    %1998 = vmatprep.subr.mxu0 %v564
    %1999 = vmatpush1.msra.mxu0 %v563
    %2000 = vmatprep.subr.mxu0 %v567
    %2001 = vmatpush1.msra.mxu0 %v566
    %2002 = vmatprep.subr.mxu0 %v570
    %2003 = vmatpush1.msra.mxu0 %v569
    %2004 = vmatprep.subr.mxu0 %v573
    %2005 = vmatpush1.msra.mxu0 %v572
    %2006 = vmatprep.subr.mxu0 0.0
    %2007 = vmatpush1.msra.mxu0 0.0
    %2008 = vmatprep.subr.mxu0 0.0
    %2009 = vmatpush1.msra.mxu0 0.0
    %2010 = vmatprep.subr.mxu0 0.0
    %2011 = vmatpush1.msra.mxu0 0.0
    %2012 = vmatprep.subr.mxu0 0.0
    %2013 = vmatpush1.msra.mxu0 0.0
    %2014 = vmatprep.subr.mxu0 0.0
    %2015 = vmatpush1.msra.mxu0 0.0
    %2016 = vmatprep.subr.mxu0 0.0
    %2017 = vmatpush1.msra.mxu0 0.0
    %2018 = vmatprep.subr.mxu0 0.0
    %2019 = vmatpush1.msra.mxu0 0.0
    %2020 = vmatprep.subr.mxu0 0.0
    %2021 = vmatpush1.msra.mxu0 0.0
    %2022 = vmatprep.subr.mxu0 0.0
    %2023 = vmatpush1.msra.mxu0 0.0
    %2024 = vmatprep.subr.mxu0 0.0
    %2025 = vmatpush1.msra.mxu0 0.0
    %2026 = vmatprep.subr.mxu0 0.0
    %2027 = vmatpush1.msra.mxu0 0.0
    %2028 = vmatprep.subr.mxu0 0.0
    %2029 = vmatpush1.msra.mxu0 0.0
    %2030 = vmatprep.subr.mxu0 0.0
    %2031 = vmatpush1.msra.mxu0 0.0
    %2032 = vmatprep.subr.mxu0 0.0
    %2033 = vmatpush1.msra.mxu0 0.0
    %2034 = vmatprep.subr.mxu0 0.0
    %2035 = vmatpush1.msra.mxu0 0.0
    %2036 = vmatprep.subr.mxu0 0.0
    %2037 = vmatpush1.msra.mxu0 0.0
    %2038 = vmatprep.mubr.f32.mxu0 0.0
    %2039 = vmatmul.mubr.f32.gmra.mrb[0].mxu0 %v1829
    %v2040 = vpop.f32.mrb[0].mxu0
    %v2041 = vadd.f32 0.0, %v2040
    %v2042 = vpop.f32.mrb[0].mxu0
    %v2043 = vadd.f32 0.0, %v2042
    %2044 = vdwg.mxu0
    %2045 = vmatprep.subr.mxu0 0.0
    %2046 = vmatpush1.msra.mxu0 %v529
    %2047 = vmatprep.subr.mxu0 0.0
    %2048 = vmatpush1.msra.mxu0 %v532
    %2049 = vmatprep.subr.mxu0 0.0
    %2050 = vmatpush1.msra.mxu0 %v535
    %2051 = vmatprep.subr.mxu0 0.0
    %2052 = vmatpush1.msra.mxu0 %v538
    %2053 = vmatprep.subr.mxu0 0.0
    %2054 = vmatpush1.msra.mxu0 %v541
    %2055 = vmatprep.subr.mxu0 0.0
    %2056 = vmatpush1.msra.mxu0 %v544
    %2057 = vmatprep.subr.mxu0 0.0
    %2058 = vmatpush1.msra.mxu0 %v547
    %2059 = vmatprep.subr.mxu0 0.0
    %2060 = vmatpush1.msra.mxu0 %v550
    %2061 = vmatprep.subr.mxu0 0.0
    %2062 = vmatpush1.msra.mxu0 %v553
    %2063 = vmatprep.subr.mxu0 0.0
    %2064 = vmatpush1.msra.mxu0 %v556
    %2065 = vmatprep.subr.mxu0 0.0
    %2066 = vmatpush1.msra.mxu0 %v559
    %2067 = vmatprep.subr.mxu0 0.0
    %2068 = vmatpush1.msra.mxu0 %v562
    %2069 = vmatprep.subr.mxu0 0.0
    %2070 = vmatpush1.msra.mxu0 %v565
    %2071 = vmatprep.subr.mxu0 0.0
    %2072 = vmatpush1.msra.mxu0 %v568
    %2073 = vmatprep.subr.mxu0 0.0
    %2074 = vmatpush1.msra.mxu0 %v571
    %2075 = vmatprep.subr.mxu0 0.0
    %2076 = vmatpush1.msra.mxu0 %v574
    %2077 = vmatprep.subr.mxu0 0.0
    %2078 = vmatpush1.msra.mxu0 0.0
    %2079 = vmatprep.subr.mxu0 0.0
    %2080 = vmatpush1.msra.mxu0 0.0
    %2081 = vmatprep.subr.mxu0 0.0
    %2082 = vmatpush1.msra.mxu0 0.0
    %2083 = vmatprep.subr.mxu0 0.0
    %2084 = vmatpush1.msra.mxu0 0.0
    %2085 = vmatprep.subr.mxu0 0.0
    %2086 = vmatpush1.msra.mxu0 0.0
    %2087 = vmatprep.subr.mxu0 0.0
    %2088 = vmatpush1.msra.mxu0 0.0
    %2089 = vmatprep.subr.mxu0 0.0
    %2090 = vmatpush1.msra.mxu0 0.0
    %2091 = vmatprep.subr.mxu0 0.0
    %2092 = vmatpush1.msra.mxu0 0.0
    %2093 = vmatprep.subr.mxu0 0.0
    %2094 = vmatpush1.msra.mxu0 0.0
    %2095 = vmatprep.subr.mxu0 0.0
    %2096 = vmatpush1.msra.mxu0 0.0
    %2097 = vmatprep.subr.mxu0 0.0
    %2098 = vmatpush1.msra.mxu0 0.0
    %2099 = vmatprep.subr.mxu0 0.0
    %2100 = vmatpush1.msra.mxu0 0.0
    %2101 = vmatprep.subr.mxu0 0.0
    %2102 = vmatpush1.msra.mxu0 0.0
    %2103 = vmatprep.subr.mxu0 0.0
    %2104 = vmatpush1.msra.mxu0 0.0
    %2105 = vmatprep.subr.mxu0 0.0
    %2106 = vmatpush1.msra.mxu0 0.0
    %2107 = vmatprep.subr.mxu0 0.0
    %2108 = vmatpush1.msra.mxu0 0.0
    %2109 = vmatprep.mubr.f32.mxu0 0.0
    %2110 = vmatmul.mubr.f32.gmra.mrb[0].mxu0 %v1829
    %v2111 = vpop.f32.mrb[0].mxu0
    %v2112 = vadd.f32 0.0, %v2111
    %v2113 = vpop.f32.mrb[0].mxu0
    %2114 = vdwg.mxu0
    %v2115 = vadd.f32 %v178, %v1900
    %v2116 = vxor.u32 %v2115, 2147483648
    %v2117 = vmul.f32 %v2116, 1.442695
    %v2118 = vpow.pop %v2117
    %v2119 = vadd.f32 %v2118, 1.0
    %v2120 = vrcp.pop %v2119
    %v2121 = vmul.f32 1.0, %v2120
    %v2122 = vadd.f32 %v180, %v1902
    %v2123 = vxor.u32 %v2122, 2147483648
    %v2124 = vmul.f32 %v2123, 1.442695
    %v2125 = vpow.pop %v2124
    %v2126 = vadd.f32 %v2125, 1.0
    %v2127 = vrcp.pop %v2126
    %v2128 = vmul.f32 1.0, %v2127
    %v2129 = vadd.f32 %v1971, %v734
    %v2130 = vmul.f32 %v2121, %v2129
    %v2131 = vadd.f32 %v255, %v2130
    %v2132 = vtanh.pop %v2131
    %v2133 = vsub.f32 1.0, %v2128
    %v2134 = vmul.f32 %v2133, %v2132
    %v2135 = vmul.f32 %v2128, %v1831
    %v2136 = vadd.f32 %v2134, %v2135
    %v2138 = vrot.slane %v2041, 2
    %v2140 = vadd.f32 %v251, %v2138
    %v2141 = vxor.u32 %v2140, 2147483648
    %v2142 = vmul.f32 %v2141, 1.442695
    %v2143 = vpow.pop %v2142
    %v2144 = vadd.f32 %v2143, 1.0
    %v2145 = vrcp.pop %v2144
    %v2146 = vmul.f32 1.0, %v2145
    %v2148 = vrot.slane %v2043, 2
    %v2150 = vadd.f32 %v326, %v2148
    %v2151 = vxor.u32 %v2150, 2147483648
    %v2152 = vmul.f32 %v2151, 1.442695
    %v2153 = vpow.pop %v2152
    %v2154 = vadd.f32 %v2153, 1.0
    %v2155 = vrcp.pop %v2154
    %v2156 = vmul.f32 1.0, %v2155
    %v2157 = vadd.f32 %v2112, %v768
    %v2159 = vrot.slane %v2157, 2
    %v2161 = vmul.f32 %v2146, %v2159
    %v2162 = vadd.f32 %v328, %v2161
    %v2163 = vtanh.pop %v2162
    %v2164 = vsub.f32 1.0, %v2156
    %v2165 = vmul.f32 %v2164, %v2163
    %v2167 = vrot.slane %v1829, 2
    %v2169 = vmul.f32 %v2156, %v2167
    %v2170 = vadd.f32 %v2165, %v2169
    %2171 = vmatprep.subr.mxu0 %v339
    %2172 = vmatpush1.msra.mxu0 %v338
    %2173 = vmatprep.subr.mxu0 %v342
    %2174 = vmatpush1.msra.mxu0 %v341
    %2175 = vmatprep.subr.mxu0 %v345
    %2176 = vmatpush1.msra.mxu0 %v344
    %2177 = vmatprep.subr.mxu0 %v348
    %2178 = vmatpush1.msra.mxu0 %v347
    %2179 = vmatprep.subr.mxu0 %v351
    %2180 = vmatpush1.msra.mxu0 %v350
    %2181 = vmatprep.subr.mxu0 %v354
    %2182 = vmatpush1.msra.mxu0 %v353
    %2183 = vmatprep.subr.mxu0 %v357
    %2184 = vmatpush1.msra.mxu0 %v356
    %2185 = vmatprep.subr.mxu0 %v360
    %2186 = vmatpush1.msra.mxu0 %v359
    %2187 = vmatprep.subr.mxu0 %v363
    %2188 = vmatpush1.msra.mxu0 %v362
    %2189 = vmatprep.subr.mxu0 %v366
    %2190 = vmatpush1.msra.mxu0 %v365
    %2191 = vmatprep.subr.mxu0 %v369
    %2192 = vmatpush1.msra.mxu0 %v368
    %2193 = vmatprep.subr.mxu0 %v372
    %2194 = vmatpush1.msra.mxu0 %v371
    %2195 = vmatprep.subr.mxu0 %v375
    %2196 = vmatpush1.msra.mxu0 %v374
    %2197 = vmatprep.subr.mxu0 %v378
    %2198 = vmatpush1.msra.mxu0 %v377
    %2199 = vmatprep.subr.mxu0 %v381
    %2200 = vmatpush1.msra.mxu0 %v380
    %2201 = vmatprep.subr.mxu0 %v384
    %2202 = vmatpush1.msra.mxu0 %v383
    %2203 = vmatprep.subr.mxu0 0.0
    %2204 = vmatpush1.msra.mxu0 0.0
    %2205 = vmatprep.subr.mxu0 0.0
    %2206 = vmatpush1.msra.mxu0 0.0
    %2207 = vmatprep.subr.mxu0 0.0
    %2208 = vmatpush1.msra.mxu0 0.0
    %2209 = vmatprep.subr.mxu0 0.0
    %2210 = vmatpush1.msra.mxu0 0.0
    %2211 = vmatprep.subr.mxu0 0.0
    %2212 = vmatpush1.msra.mxu0 0.0
    %2213 = vmatprep.subr.mxu0 0.0
    %2214 = vmatpush1.msra.mxu0 0.0
    %2215 = vmatprep.subr.mxu0 0.0
    %2216 = vmatpush1.msra.mxu0 0.0
    %2217 = vmatprep.subr.mxu0 0.0
    %2218 = vmatpush1.msra.mxu0 0.0
    %2219 = vmatprep.subr.mxu0 0.0
    %2220 = vmatpush1.msra.mxu0 0.0
    %2221 = vmatprep.subr.mxu0 0.0
    %2222 = vmatpush1.msra.mxu0 0.0
    %2223 = vmatprep.subr.mxu0 0.0
    %2224 = vmatpush1.msra.mxu0 0.0
    %2225 = vmatprep.subr.mxu0 0.0
    %2226 = vmatpush1.msra.mxu0 0.0
    %2227 = vmatprep.subr.mxu0 0.0
    %2228 = vmatpush1.msra.mxu0 0.0
    %2229 = vmatprep.subr.mxu0 0.0
    %2230 = vmatpush1.msra.mxu0 0.0
    %2231 = vmatprep.subr.mxu0 0.0
    %2232 = vmatpush1.msra.mxu0 0.0
    %2233 = vmatprep.subr.mxu0 0.0
    %2234 = vmatpush1.msra.mxu0 0.0
    %2235 = vmatprep.mubr.f32.mxu0 0.0
    %2236 = vmatmul.mubr.f32.gmra.mrb[0].mxu0 %v2136
    %v2237 = vpop.f32.mrb[0].mxu0
    %v2238 = vadd.f32 0.0, %v2237
    %v2239 = vpop.f32.mrb[0].mxu0
    %v2240 = vadd.f32 0.0, %v2239
    %2241 = vdwg.mxu0
    %2242 = vmatprep.subr.mxu0 0.0
    %2243 = vmatpush1.msra.mxu0 %v340
    %2244 = vmatprep.subr.mxu0 0.0
    %2245 = vmatpush1.msra.mxu0 %v343
    %2246 = vmatprep.subr.mxu0 0.0
    %2247 = vmatpush1.msra.mxu0 %v346
    %2248 = vmatprep.subr.mxu0 0.0
    %2249 = vmatpush1.msra.mxu0 %v349
    %2250 = vmatprep.subr.mxu0 0.0
    %2251 = vmatpush1.msra.mxu0 %v352
    %2252 = vmatprep.subr.mxu0 0.0
    %2253 = vmatpush1.msra.mxu0 %v355
    %2254 = vmatprep.subr.mxu0 0.0
    %2255 = vmatpush1.msra.mxu0 %v358
    %2256 = vmatprep.subr.mxu0 0.0
    %2257 = vmatpush1.msra.mxu0 %v361
    %2258 = vmatprep.subr.mxu0 0.0
    %2259 = vmatpush1.msra.mxu0 %v364
    %2260 = vmatprep.subr.mxu0 0.0
    %2261 = vmatpush1.msra.mxu0 %v367
    %2262 = vmatprep.subr.mxu0 0.0
    %2263 = vmatpush1.msra.mxu0 %v370
    %2264 = vmatprep.subr.mxu0 0.0
    %2265 = vmatpush1.msra.mxu0 %v373
    %2266 = vmatprep.subr.mxu0 0.0
    %2267 = vmatpush1.msra.mxu0 %v376
    %2268 = vmatprep.subr.mxu0 0.0
    %2269 = vmatpush1.msra.mxu0 %v379
    %2270 = vmatprep.subr.mxu0 0.0
    %2271 = vmatpush1.msra.mxu0 %v382
    %2272 = vmatprep.subr.mxu0 0.0
    %2273 = vmatpush1.msra.mxu0 %v385
    %2274 = vmatprep.subr.mxu0 0.0
    %2275 = vmatpush1.msra.mxu0 0.0
    %2276 = vmatprep.subr.mxu0 0.0
    %2277 = vmatpush1.msra.mxu0 0.0
    %2278 = vmatprep.subr.mxu0 0.0
    %2279 = vmatpush1.msra.mxu0 0.0
    %2280 = vmatprep.subr.mxu0 0.0
    %2281 = vmatpush1.msra.mxu0 0.0
    %2282 = vmatprep.subr.mxu0 0.0
    %2283 = vmatpush1.msra.mxu0 0.0
    %2284 = vmatprep.subr.mxu0 0.0
    %2285 = vmatpush1.msra.mxu0 0.0
    %2286 = vmatprep.subr.mxu0 0.0
    %2287 = vmatpush1.msra.mxu0 0.0
    %2288 = vmatprep.subr.mxu0 0.0
    %2289 = vmatpush1.msra.mxu0 0.0
    %2290 = vmatprep.subr.mxu0 0.0
    %2291 = vmatpush1.msra.mxu0 0.0
    %2292 = vmatprep.subr.mxu0 0.0
    %2293 = vmatpush1.msra.mxu0 0.0
    %2294 = vmatprep.subr.mxu0 0.0
    %2295 = vmatpush1.msra.mxu0 0.0
    %2296 = vmatprep.subr.mxu0 0.0
    %2297 = vmatpush1.msra.mxu0 0.0
    %2298 = vmatprep.subr.mxu0 0.0
    %2299 = vmatpush1.msra.mxu0 0.0
    %2300 = vmatprep.subr.mxu0 0.0
    %2301 = vmatpush1.msra.mxu0 0.0
    %2302 = vmatprep.subr.mxu0 0.0
    %2303 = vmatpush1.msra.mxu0 0.0
    %2304 = vmatprep.subr.mxu0 0.0
    %2305 = vmatpush1.msra.mxu0 0.0
    %2306 = vmatprep.mubr.f32.mxu0 0.0
    %2307 = vmatmul.mubr.f32.gmra.mrb[0].mxu0 %v2136
    %v2308 = vpop.f32.mrb[0].mxu0
    %v2309 = vadd.f32 0.0, %v2308
    %v2310 = vpop.f32.mrb[0].mxu0
    %2311 = vdwg.mxu0
    %v2313 = vrot.slane %v2170, 6
    %2315 = vmatprep.subr.mxu0 %v528
    %2316 = vmatpush1.msra.mxu0 %v527
    %2317 = vmatprep.subr.mxu0 %v531
    %2318 = vmatpush1.msra.mxu0 %v530
    %2319 = vmatprep.subr.mxu0 %v534
    %2320 = vmatpush1.msra.mxu0 %v533
    %2321 = vmatprep.subr.mxu0 %v537
    %2322 = vmatpush1.msra.mxu0 %v536
    %2323 = vmatprep.subr.mxu0 %v540
    %2324 = vmatpush1.msra.mxu0 %v539
    %2325 = vmatprep.subr.mxu0 %v543
    %2326 = vmatpush1.msra.mxu0 %v542
    %2327 = vmatprep.subr.mxu0 %v546
    %2328 = vmatpush1.msra.mxu0 %v545
    %2329 = vmatprep.subr.mxu0 %v549
    %2330 = vmatpush1.msra.mxu0 %v548
    %2331 = vmatprep.subr.mxu0 %v552
    %2332 = vmatpush1.msra.mxu0 %v551
    %2333 = vmatprep.subr.mxu0 %v555
    %2334 = vmatpush1.msra.mxu0 %v554
    %2335 = vmatprep.subr.mxu0 %v558
    %2336 = vmatpush1.msra.mxu0 %v557
    %2337 = vmatprep.subr.mxu0 %v561
    %2338 = vmatpush1.msra.mxu0 %v560
    %2339 = vmatprep.subr.mxu0 %v564
    %2340 = vmatpush1.msra.mxu0 %v563
    %2341 = vmatprep.subr.mxu0 %v567
    %2342 = vmatpush1.msra.mxu0 %v566
    %2343 = vmatprep.subr.mxu0 %v570
    %2344 = vmatpush1.msra.mxu0 %v569
    %2345 = vmatprep.subr.mxu0 %v573
    %2346 = vmatpush1.msra.mxu0 %v572
    %2347 = vmatprep.subr.mxu0 0.0
    %2348 = vmatpush1.msra.mxu0 0.0
    %2349 = vmatprep.subr.mxu0 0.0
    %2350 = vmatpush1.msra.mxu0 0.0
    %2351 = vmatprep.subr.mxu0 0.0
    %2352 = vmatpush1.msra.mxu0 0.0
    %2353 = vmatprep.subr.mxu0 0.0
    %2354 = vmatpush1.msra.mxu0 0.0
    %2355 = vmatprep.subr.mxu0 0.0
    %2356 = vmatpush1.msra.mxu0 0.0
    %2357 = vmatprep.subr.mxu0 0.0
    %2358 = vmatpush1.msra.mxu0 0.0
    %2359 = vmatprep.subr.mxu0 0.0
    %2360 = vmatpush1.msra.mxu0 0.0
    %2361 = vmatprep.subr.mxu0 0.0
    %2362 = vmatpush1.msra.mxu0 0.0
    %2363 = vmatprep.subr.mxu0 0.0
    %2364 = vmatpush1.msra.mxu0 0.0
    %2365 = vmatprep.subr.mxu0 0.0
    %2366 = vmatpush1.msra.mxu0 0.0
    %2367 = vmatprep.subr.mxu0 0.0
    %2368 = vmatpush1.msra.mxu0 0.0
    %2369 = vmatprep.subr.mxu0 0.0
    %2370 = vmatpush1.msra.mxu0 0.0
    %2371 = vmatprep.subr.mxu0 0.0
    %2372 = vmatpush1.msra.mxu0 0.0
    %2373 = vmatprep.subr.mxu0 0.0
    %2374 = vmatpush1.msra.mxu0 0.0
    %2375 = vmatprep.subr.mxu0 0.0
    %2376 = vmatpush1.msra.mxu0 0.0
    %2377 = vmatprep.subr.mxu0 0.0
    %2378 = vmatpush1.msra.mxu0 0.0
    %2379 = vmatprep.mubr.f32.mxu0 0.0
    %2380 = vmatmul.mubr.f32.gmra.mrb[0].mxu0 %v2313
    %v2381 = vpop.f32.mrb[0].mxu0
    %v2382 = vadd.f32 0.0, %v2381
    %v2383 = vpop.f32.mrb[0].mxu0
    %v2384 = vadd.f32 0.0, %v2383
    %2385 = vdwg.mxu0
    %2386 = vmatprep.subr.mxu0 0.0
    %2387 = vmatpush1.msra.mxu0 %v529
    %2388 = vmatprep.subr.mxu0 0.0
    %2389 = vmatpush1.msra.mxu0 %v532
    %2390 = vmatprep.subr.mxu0 0.0
    %2391 = vmatpush1.msra.mxu0 %v535
    %2392 = vmatprep.subr.mxu0 0.0
    %2393 = vmatpush1.msra.mxu0 %v538
    %2394 = vmatprep.subr.mxu0 0.0
    %2395 = vmatpush1.msra.mxu0 %v541
    %2396 = vmatprep.subr.mxu0 0.0
    %2397 = vmatpush1.msra.mxu0 %v544
    %2398 = vmatprep.subr.mxu0 0.0
    %2399 = vmatpush1.msra.mxu0 %v547
    %2400 = vmatprep.subr.mxu0 0.0
    %2401 = vmatpush1.msra.mxu0 %v550
    %2402 = vmatprep.subr.mxu0 0.0
    %2403 = vmatpush1.msra.mxu0 %v553
    %2404 = vmatprep.subr.mxu0 0.0
    %2405 = vmatpush1.msra.mxu0 %v556
    %2406 = vmatprep.subr.mxu0 0.0
    %2407 = vmatpush1.msra.mxu0 %v559
    %2408 = vmatprep.subr.mxu0 0.0
    %2409 = vmatpush1.msra.mxu0 %v562
    %2410 = vmatprep.subr.mxu0 0.0
    %2411 = vmatpush1.msra.mxu0 %v565
    %2412 = vmatprep.subr.mxu0 0.0
    %2413 = vmatpush1.msra.mxu0 %v568
    %2414 = vmatprep.subr.mxu0 0.0
    %2415 = vmatpush1.msra.mxu0 %v571
    %2416 = vmatprep.subr.mxu0 0.0
    %2417 = vmatpush1.msra.mxu0 %v574
    %2418 = vmatprep.subr.mxu0 0.0
    %2419 = vmatpush1.msra.mxu0 0.0
    %2420 = vmatprep.subr.mxu0 0.0
    %2421 = vmatpush1.msra.mxu0 0.0
    %2422 = vmatprep.subr.mxu0 0.0
    %2423 = vmatpush1.msra.mxu0 0.0
    %2424 = vmatprep.subr.mxu0 0.0
    %2425 = vmatpush1.msra.mxu0 0.0
    %2426 = vmatprep.subr.mxu0 0.0
    %2427 = vmatpush1.msra.mxu0 0.0
    %2428 = vmatprep.subr.mxu0 0.0
    %2429 = vmatpush1.msra.mxu0 0.0
    %2430 = vmatprep.subr.mxu0 0.0
    %2431 = vmatpush1.msra.mxu0 0.0
    %2432 = vmatprep.subr.mxu0 0.0
    %2433 = vmatpush1.msra.mxu0 0.0
    %2434 = vmatprep.subr.mxu0 0.0
    %2435 = vmatpush1.msra.mxu0 0.0
    %2436 = vmatprep.subr.mxu0 0.0
    %2437 = vmatpush1.msra.mxu0 0.0
    %2438 = vmatprep.subr.mxu0 0.0
    %2439 = vmatpush1.msra.mxu0 0.0
    %2440 = vmatprep.subr.mxu0 0.0
    %2441 = vmatpush1.msra.mxu0 0.0
    %2442 = vmatprep.subr.mxu0 0.0
    %2443 = vmatpush1.msra.mxu0 0.0
    %2444 = vmatprep.subr.mxu0 0.0
    %2445 = vmatpush1.msra.mxu0 0.0
    %2446 = vmatprep.subr.mxu0 0.0
    %2447 = vmatpush1.msra.mxu0 0.0
    %2448 = vmatprep.subr.mxu0 0.0
    %2449 = vmatpush1.msra.mxu0 0.0
    %2450 = vmatprep.mubr.f32.mxu0 0.0
    %2451 = vmatmul.mubr.f32.gmra.mrb[0].mxu0 %v2313
    %v2452 = vpop.f32.mrb[0].mxu0
    %v2453 = vadd.f32 0.0, %v2452
    %v2454 = vpop.f32.mrb[0].mxu0
    %2455 = vdwg.mxu0
    %v2457 = vrot.slane %v2238, 6
    %v2459 = vadd.f32 %v178, %v2457
    %v2460 = vxor.u32 %v2459, 2147483648
    %v2461 = vmul.f32 %v2460, 1.442695
    %v2462 = vpow.pop %v2461
    %v2463 = vadd.f32 %v2462, 1.0
    %v2464 = vrcp.pop %v2463
    %v2465 = vmul.f32 1.0, %v2464
    %v2467 = vrot.slane %v2240, 6
    %v2469 = vadd.f32 %v180, %v2467
    %v2470 = vxor.u32 %v2469, 2147483648
    %v2471 = vmul.f32 %v2470, 1.442695
    %v2472 = vpow.pop %v2471
    %v2473 = vadd.f32 %v2472, 1.0
    %v2474 = vrcp.pop %v2473
    %v2475 = vmul.f32 1.0, %v2474
    %v2476 = vadd.f32 %v2309, %v734
    %v2478 = vrot.slane %v2476, 6
    %v2480 = vmul.f32 %v2465, %v2478
    %v2481 = vadd.f32 %v255, %v2480
    %v2482 = vtanh.pop %v2481
    %v2483 = vsub.f32 1.0, %v2475
    %v2484 = vmul.f32 %v2483, %v2482
    %v2486 = vrot.slane %v2136, 6
    %v2488 = vmul.f32 %v2475, %v2486
    %v2489 = vadd.f32 %v2484, %v2488
    %v2491 = vrot.slane %v2382, 4
    %v2493 = vadd.f32 %v251, %v2491
    %v2494 = vxor.u32 %v2493, 2147483648
    %v2495 = vmul.f32 %v2494, 1.442695
    %v2496 = vpow.pop %v2495
    %v2497 = vadd.f32 %v2496, 1.0
    %v2498 = vrcp.pop %v2497
    %v2499 = vmul.f32 1.0, %v2498
    %v2501 = vrot.slane %v2384, 4
    %v2503 = vadd.f32 %v326, %v2501
    %v2504 = vxor.u32 %v2503, 2147483648
    %v2505 = vmul.f32 %v2504, 1.442695
    %v2506 = vpow.pop %v2505
    %v2507 = vadd.f32 %v2506, 1.0
    %v2508 = vrcp.pop %v2507
    %v2509 = vmul.f32 1.0, %v2508
    %v2510 = vadd.f32 %v2453, %v768
    %v2512 = vrot.slane %v2510, 4
    %v2514 = vmul.f32 %v2499, %v2512
    %v2515 = vadd.f32 %v328, %v2514
    %v2516 = vtanh.pop %v2515
    %v2517 = vsub.f32 1.0, %v2509
    %v2518 = vmul.f32 %v2517, %v2516
    %v2519 = vrot.slane %v2170, 2
    %v2521 = vmul.f32 %v2509, %v2519
    %v2522 = vadd.f32 %v2518, %v2521
    %v2524 = vrot.slane %v2489, 2
    %2526 = vmatprep.subr.mxu0 %v339
    %2527 = vmatpush1.msra.mxu0 %v338
    %2528 = vmatprep.subr.mxu0 %v342
    %2529 = vmatpush1.msra.mxu0 %v341
    %2530 = vmatprep.subr.mxu0 %v345
    %2531 = vmatpush1.msra.mxu0 %v344
    %2532 = vmatprep.subr.mxu0 %v348
    %2533 = vmatpush1.msra.mxu0 %v347
    %2534 = vmatprep.subr.mxu0 %v351
    %2535 = vmatpush1.msra.mxu0 %v350
    %2536 = vmatprep.subr.mxu0 %v354
    %2537 = vmatpush1.msra.mxu0 %v353
    %2538 = vmatprep.subr.mxu0 %v357
    %2539 = vmatpush1.msra.mxu0 %v356
    %2540 = vmatprep.subr.mxu0 %v360
    %2541 = vmatpush1.msra.mxu0 %v359
    %2542 = vmatprep.subr.mxu0 %v363
    %2543 = vmatpush1.msra.mxu0 %v362
    %2544 = vmatprep.subr.mxu0 %v366
    %2545 = vmatpush1.msra.mxu0 %v365
    %2546 = vmatprep.subr.mxu0 %v369
    %2547 = vmatpush1.msra.mxu0 %v368
    %2548 = vmatprep.subr.mxu0 %v372
    %2549 = vmatpush1.msra.mxu0 %v371
    %2550 = vmatprep.subr.mxu0 %v375
    %2551 = vmatpush1.msra.mxu0 %v374
    %2552 = vmatprep.subr.mxu0 %v378
    %2553 = vmatpush1.msra.mxu0 %v377
    %2554 = vmatprep.subr.mxu0 %v381
    %2555 = vmatpush1.msra.mxu0 %v380
    %2556 = vmatprep.subr.mxu0 %v384
    %2557 = vmatpush1.msra.mxu0 %v383
    %2558 = vmatprep.subr.mxu0 0.0
    %2559 = vmatpush1.msra.mxu0 0.0
    %2560 = vmatprep.subr.mxu0 0.0
    %2561 = vmatpush1.msra.mxu0 0.0
    %2562 = vmatprep.subr.mxu0 0.0
    %2563 = vmatpush1.msra.mxu0 0.0
    %2564 = vmatprep.subr.mxu0 0.0
    %2565 = vmatpush1.msra.mxu0 0.0
    %2566 = vmatprep.subr.mxu0 0.0
    %2567 = vmatpush1.msra.mxu0 0.0
    %2568 = vmatprep.subr.mxu0 0.0
    %2569 = vmatpush1.msra.mxu0 0.0
    %2570 = vmatprep.subr.mxu0 0.0
    %2571 = vmatpush1.msra.mxu0 0.0
    %2572 = vmatprep.subr.mxu0 0.0
    %2573 = vmatpush1.msra.mxu0 0.0
    %2574 = vmatprep.subr.mxu0 0.0
    %2575 = vmatpush1.msra.mxu0 0.0
    %2576 = vmatprep.subr.mxu0 0.0
    %2577 = vmatpush1.msra.mxu0 0.0
    %2578 = vmatprep.subr.mxu0 0.0
    %2579 = vmatpush1.msra.mxu0 0.0
    %2580 = vmatprep.subr.mxu0 0.0
    %2581 = vmatpush1.msra.mxu0 0.0
    %2582 = vmatprep.subr.mxu0 0.0
    %2583 = vmatpush1.msra.mxu0 0.0
    %2584 = vmatprep.subr.mxu0 0.0
    %2585 = vmatpush1.msra.mxu0 0.0
    %2586 = vmatprep.subr.mxu0 0.0
    %2587 = vmatpush1.msra.mxu0 0.0
    %2588 = vmatprep.subr.mxu0 0.0
    %2589 = vmatpush1.msra.mxu0 0.0
    %2590 = vmatprep.mubr.f32.mxu0 0.0
    %2591 = vmatmul.mubr.f32.gmra.mrb[0].mxu0 %v2524
    %v2592 = vpop.f32.mrb[0].mxu0
    %v2593 = vadd.f32 0.0, %v2592
    %v2594 = vpop.f32.mrb[0].mxu0
    %v2595 = vadd.f32 0.0, %v2594
    %2596 = vdwg.mxu0
    %2597 = vmatprep.subr.mxu0 0.0
    %2598 = vmatpush1.msra.mxu0 %v340
    %2599 = vmatprep.subr.mxu0 0.0
    %2600 = vmatpush1.msra.mxu0 %v343
    %2601 = vmatprep.subr.mxu0 0.0
    %2602 = vmatpush1.msra.mxu0 %v346
    %2603 = vmatprep.subr.mxu0 0.0
    %2604 = vmatpush1.msra.mxu0 %v349
    %2605 = vmatprep.subr.mxu0 0.0
    %2606 = vmatpush1.msra.mxu0 %v352
    %2607 = vmatprep.subr.mxu0 0.0
    %2608 = vmatpush1.msra.mxu0 %v355
    %2609 = vmatprep.subr.mxu0 0.0
    %2610 = vmatpush1.msra.mxu0 %v358
    %2611 = vmatprep.subr.mxu0 0.0
    %2612 = vmatpush1.msra.mxu0 %v361
    %2613 = vmatprep.subr.mxu0 0.0
    %2614 = vmatpush1.msra.mxu0 %v364
    %2615 = vmatprep.subr.mxu0 0.0
    %2616 = vmatpush1.msra.mxu0 %v367
    %2617 = vmatprep.subr.mxu0 0.0
    %2618 = vmatpush1.msra.mxu0 %v370
    %2619 = vmatprep.subr.mxu0 0.0
    %2620 = vmatpush1.msra.mxu0 %v373
    %2621 = vmatprep.subr.mxu0 0.0
    %2622 = vmatpush1.msra.mxu0 %v376
    %2623 = vmatprep.subr.mxu0 0.0
    %2624 = vmatpush1.msra.mxu0 %v379
    %2625 = vmatprep.subr.mxu0 0.0
    %2626 = vmatpush1.msra.mxu0 %v382
    %2627 = vmatprep.subr.mxu0 0.0
    %2628 = vmatpush1.msra.mxu0 %v385
    %2629 = vmatprep.subr.mxu0 0.0
    %2630 = vmatpush1.msra.mxu0 0.0
    %2631 = vmatprep.subr.mxu0 0.0
    %2632 = vmatpush1.msra.mxu0 0.0
    %2633 = vmatprep.subr.mxu0 0.0
    %2634 = vmatpush1.msra.mxu0 0.0
    %2635 = vmatprep.subr.mxu0 0.0
    %2636 = vmatpush1.msra.mxu0 0.0
    %2637 = vmatprep.subr.mxu0 0.0
    %2638 = vmatpush1.msra.mxu0 0.0
    %2639 = vmatprep.subr.mxu0 0.0
    %2640 = vmatpush1.msra.mxu0 0.0
    %2641 = vmatprep.subr.mxu0 0.0
    %2642 = vmatpush1.msra.mxu0 0.0
    %2643 = vmatprep.subr.mxu0 0.0
    %2644 = vmatpush1.msra.mxu0 0.0
    %2645 = vmatprep.subr.mxu0 0.0
    %2646 = vmatpush1.msra.mxu0 0.0
    %2647 = vmatprep.subr.mxu0 0.0
    %2648 = vmatpush1.msra.mxu0 0.0
    %2649 = vmatprep.subr.mxu0 0.0
    %2650 = vmatpush1.msra.mxu0 0.0
    %2651 = vmatprep.subr.mxu0 0.0
    %2652 = vmatpush1.msra.mxu0 0.0
    %2653 = vmatprep.subr.mxu0 0.0
    %2654 = vmatpush1.msra.mxu0 0.0
    %2655 = vmatprep.subr.mxu0 0.0
    %2656 = vmatpush1.msra.mxu0 0.0
    %2657 = vmatprep.subr.mxu0 0.0
    %2658 = vmatpush1.msra.mxu0 0.0
    %2659 = vmatprep.subr.mxu0 0.0
    %2660 = vmatpush1.msra.mxu0 0.0
    %2661 = vmatprep.mubr.f32.mxu0 0.0
    %2662 = vmatmul.mubr.f32.gmra.mrb[0].mxu0 %v2524
    %v2663 = vpop.f32.mrb[0].mxu0
    %v2664 = vadd.f32 0.0, %v2663
    %v2665 = vpop.f32.mrb[0].mxu0
    %2666 = vdwg.mxu0
    %v2668 = vrot.slane %v2522, 4
    %2670 = vmatprep.subr.mxu0 %v528
    %2671 = vmatpush1.msra.mxu0 %v527
    %2672 = vmatprep.subr.mxu0 %v531
    %2673 = vmatpush1.msra.mxu0 %v530
    %2674 = vmatprep.subr.mxu0 %v534
    %2675 = vmatpush1.msra.mxu0 %v533
    %2676 = vmatprep.subr.mxu0 %v537
    %2677 = vmatpush1.msra.mxu0 %v536
    %2678 = vmatprep.subr.mxu0 %v540
    %2679 = vmatpush1.msra.mxu0 %v539
    %2680 = vmatprep.subr.mxu0 %v543
    %2681 = vmatpush1.msra.mxu0 %v542
    %2682 = vmatprep.subr.mxu0 %v546
    %2683 = vmatpush1.msra.mxu0 %v545
    %2684 = vmatprep.subr.mxu0 %v549
    %2685 = vmatpush1.msra.mxu0 %v548
    %2686 = vmatprep.subr.mxu0 %v552
    %2687 = vmatpush1.msra.mxu0 %v551
    %2688 = vmatprep.subr.mxu0 %v555
    %2689 = vmatpush1.msra.mxu0 %v554
    %2690 = vmatprep.subr.mxu0 %v558
    %2691 = vmatpush1.msra.mxu0 %v557
    %2692 = vmatprep.subr.mxu0 %v561
    %2693 = vmatpush1.msra.mxu0 %v560
    %2694 = vmatprep.subr.mxu0 %v564
    %2695 = vmatpush1.msra.mxu0 %v563
    %2696 = vmatprep.subr.mxu0 %v567
    %2697 = vmatpush1.msra.mxu0 %v566
    %2698 = vmatprep.subr.mxu0 %v570
    %2699 = vmatpush1.msra.mxu0 %v569
    %2700 = vmatprep.subr.mxu0 %v573
    %2701 = vmatpush1.msra.mxu0 %v572
    %2702 = vmatprep.subr.mxu0 0.0
    %2703 = vmatpush1.msra.mxu0 0.0
    %2704 = vmatprep.subr.mxu0 0.0
    %2705 = vmatpush1.msra.mxu0 0.0
    %2706 = vmatprep.subr.mxu0 0.0
    %2707 = vmatpush1.msra.mxu0 0.0
    %2708 = vmatprep.subr.mxu0 0.0
    %2709 = vmatpush1.msra.mxu0 0.0
    %2710 = vmatprep.subr.mxu0 0.0
    %2711 = vmatpush1.msra.mxu0 0.0
    %2712 = vmatprep.subr.mxu0 0.0
    %2713 = vmatpush1.msra.mxu0 0.0
    %2714 = vmatprep.subr.mxu0 0.0
    %2715 = vmatpush1.msra.mxu0 0.0
    %2716 = vmatprep.subr.mxu0 0.0
    %2717 = vmatpush1.msra.mxu0 0.0
    %2718 = vmatprep.subr.mxu0 0.0
    %2719 = vmatpush1.msra.mxu0 0.0
    %2720 = vmatprep.subr.mxu0 0.0
    %2721 = vmatpush1.msra.mxu0 0.0
    %2722 = vmatprep.subr.mxu0 0.0
    %2723 = vmatpush1.msra.mxu0 0.0
    %2724 = vmatprep.subr.mxu0 0.0
    %2725 = vmatpush1.msra.mxu0 0.0
    %2726 = vmatprep.subr.mxu0 0.0
    %2727 = vmatpush1.msra.mxu0 0.0
    %2728 = vmatprep.subr.mxu0 0.0
    %2729 = vmatpush1.msra.mxu0 0.0
    %2730 = vmatprep.subr.mxu0 0.0
    %2731 = vmatpush1.msra.mxu0 0.0
    %2732 = vmatprep.subr.mxu0 0.0
    %2733 = vmatpush1.msra.mxu0 0.0
    %2734 = vmatprep.mubr.f32.mxu0 0.0
    %2735 = vmatmul.mubr.f32.gmra.mrb[0].mxu0 %v2668
    %v2736 = vpop.f32.mrb[0].mxu0
    %v2737 = vadd.f32 0.0, %v2736
    %v2738 = vpop.f32.mrb[0].mxu0
    %v2739 = vadd.f32 0.0, %v2738
    %2740 = vdwg.mxu0
    %2741 = vmatprep.subr.mxu0 0.0
    %2742 = vmatpush1.msra.mxu0 %v529
    %2743 = vmatprep.subr.mxu0 0.0
    %2744 = vmatpush1.msra.mxu0 %v532
    %2745 = vmatprep.subr.mxu0 0.0
    %2746 = vmatpush1.msra.mxu0 %v535
    %2747 = vmatprep.subr.mxu0 0.0
    %2748 = vmatpush1.msra.mxu0 %v538
    %2749 = vmatprep.subr.mxu0 0.0
    %2750 = vmatpush1.msra.mxu0 %v541
    %2751 = vmatprep.subr.mxu0 0.0
    %2752 = vmatpush1.msra.mxu0 %v544
    %2753 = vmatprep.subr.mxu0 0.0
    %2754 = vmatpush1.msra.mxu0 %v547
    %2755 = vmatprep.subr.mxu0 0.0
    %2756 = vmatpush1.msra.mxu0 %v550
    %2757 = vmatprep.subr.mxu0 0.0
    %2758 = vmatpush1.msra.mxu0 %v553
    %2759 = vmatprep.subr.mxu0 0.0
    %2760 = vmatpush1.msra.mxu0 %v556
    %2761 = vmatprep.subr.mxu0 0.0
    %2762 = vmatpush1.msra.mxu0 %v559
    %2763 = vmatprep.subr.mxu0 0.0
    %2764 = vmatpush1.msra.mxu0 %v562
    %2765 = vmatprep.subr.mxu0 0.0
    %2766 = vmatpush1.msra.mxu0 %v565
    %2767 = vmatprep.subr.mxu0 0.0
    %2768 = vmatpush1.msra.mxu0 %v568
    %2769 = vmatprep.subr.mxu0 0.0
    %2770 = vmatpush1.msra.mxu0 %v571
    %2771 = vmatprep.subr.mxu0 0.0
    %2772 = vmatpush1.msra.mxu0 %v574
    %2773 = vmatprep.subr.mxu0 0.0
    %2774 = vmatpush1.msra.mxu0 0.0
    %2775 = vmatprep.subr.mxu0 0.0
    %2776 = vmatpush1.msra.mxu0 0.0
    %2777 = vmatprep.subr.mxu0 0.0
    %2778 = vmatpush1.msra.mxu0 0.0
    %2779 = vmatprep.subr.mxu0 0.0
    %2780 = vmatpush1.msra.mxu0 0.0
    %2781 = vmatprep.subr.mxu0 0.0
    %2782 = vmatpush1.msra.mxu0 0.0
    %2783 = vmatprep.subr.mxu0 0.0
    %2784 = vmatpush1.msra.mxu0 0.0
    %2785 = vmatprep.subr.mxu0 0.0
    %2786 = vmatpush1.msra.mxu0 0.0
    %2787 = vmatprep.subr.mxu0 0.0
    %2788 = vmatpush1.msra.mxu0 0.0
    %2789 = vmatprep.subr.mxu0 0.0
    %2790 = vmatpush1.msra.mxu0 0.0
    %2791 = vmatprep.subr.mxu0 0.0
    %2792 = vmatpush1.msra.mxu0 0.0
    %2793 = vmatprep.subr.mxu0 0.0
    %2794 = vmatpush1.msra.mxu0 0.0
    %2795 = vmatprep.subr.mxu0 0.0
    %2796 = vmatpush1.msra.mxu0 0.0
    %2797 = vmatprep.subr.mxu0 0.0
    %2798 = vmatpush1.msra.mxu0 0.0
    %2799 = vmatprep.subr.mxu0 0.0
    %2800 = vmatpush1.msra.mxu0 0.0
    %2801 = vmatprep.subr.mxu0 0.0
    %2802 = vmatpush1.msra.mxu0 0.0
    %2803 = vmatprep.subr.mxu0 0.0
    %2804 = vmatpush1.msra.mxu0 0.0
    %2805 = vmatprep.mubr.f32.mxu0 0.0
    %2806 = vmatmul.mubr.f32.gmra.mrb[0].mxu0 %v2668
    %v2807 = vpop.f32.mrb[0].mxu0
    %v2808 = vadd.f32 0.0, %v2807
    %v2809 = vpop.f32.mrb[0].mxu0
    %2810 = vdwg.mxu0
    %v2812 = vrot.slane %v2593, 4
    %v2814 = vadd.f32 %v178, %v2812
    %v2815 = vxor.u32 %v2814, 2147483648
    %v2816 = vmul.f32 %v2815, 1.442695
    %v2817 = vpow.pop %v2816
    %v2818 = vadd.f32 %v2817, 1.0
    %v2819 = vrcp.pop %v2818
    %v2820 = vmul.f32 1.0, %v2819
    %v2822 = vrot.slane %v2595, 4
    %v2824 = vadd.f32 %v180, %v2822
    %v2825 = vxor.u32 %v2824, 2147483648
    %v2826 = vmul.f32 %v2825, 1.442695
    %v2827 = vpow.pop %v2826
    %v2828 = vadd.f32 %v2827, 1.0
    %v2829 = vrcp.pop %v2828
    %v2830 = vmul.f32 1.0, %v2829
    %v2831 = vadd.f32 %v2664, %v734
    %v2833 = vrot.slane %v2831, 4
    %v2835 = vmul.f32 %v2820, %v2833
    %v2836 = vadd.f32 %v255, %v2835
    %v2837 = vtanh.pop %v2836
    %v2838 = vsub.f32 1.0, %v2830
    %v2839 = vmul.f32 %v2838, %v2837
    %v2840 = vrot.slane %v2489, 6
    %v2842 = vmul.f32 %v2830, %v2840
    %v2843 = vadd.f32 %v2839, %v2842
    %v2845 = vrot.slane %v2737, 6
    %v2847 = vadd.f32 %v251, %v2845
    %v2848 = vxor.u32 %v2847, 2147483648
    %v2849 = vmul.f32 %v2848, 1.442695
    %v2850 = vpow.pop %v2849
    %v2851 = vadd.f32 %v2850, 1.0
    %v2852 = vrcp.pop %v2851
    %v2853 = vmul.f32 1.0, %v2852
    %v2855 = vrot.slane %v2739, 6
    %v2857 = vadd.f32 %v326, %v2855
    %v2858 = vxor.u32 %v2857, 2147483648
    %v2859 = vmul.f32 %v2858, 1.442695
    %v2860 = vpow.pop %v2859
    %v2861 = vadd.f32 %v2860, 1.0
    %v2862 = vrcp.pop %v2861
    %v2863 = vmul.f32 1.0, %v2862
    %v2864 = vadd.f32 %v2808, %v768
    %v2866 = vrot.slane %v2864, 6
    %v2868 = vmul.f32 %v2853, %v2866
    %v2869 = vadd.f32 %v328, %v2868
    %v2870 = vtanh.pop %v2869
    %v2871 = vsub.f32 1.0, %v2863
    %v2872 = vmul.f32 %v2871, %v2870
    %v2873 = vrot.slane %v2522, 2
    %v2875 = vmul.f32 %v2863, %v2873
    %v2876 = vadd.f32 %v2872, %v2875
    %v2878 = vrot.slane %v2843, 4
    %2880 = vmatprep.subr.mxu0 %v339
    %2881 = vmatpush1.msra.mxu0 %v338
    %2882 = vmatprep.subr.mxu0 %v342
    %2883 = vmatpush1.msra.mxu0 %v341
    %2884 = vmatprep.subr.mxu0 %v345
    %2885 = vmatpush1.msra.mxu0 %v344
    %2886 = vmatprep.subr.mxu0 %v348
    %2887 = vmatpush1.msra.mxu0 %v347
    %2888 = vmatprep.subr.mxu0 %v351
    %2889 = vmatpush1.msra.mxu0 %v350
    %2890 = vmatprep.subr.mxu0 %v354
    %2891 = vmatpush1.msra.mxu0 %v353
    %2892 = vmatprep.subr.mxu0 %v357
    %2893 = vmatpush1.msra.mxu0 %v356
    %2894 = vmatprep.subr.mxu0 %v360
    %2895 = vmatpush1.msra.mxu0 %v359
    %2896 = vmatprep.subr.mxu0 %v363
    %2897 = vmatpush1.msra.mxu0 %v362
    %2898 = vmatprep.subr.mxu0 %v366
    %2899 = vmatpush1.msra.mxu0 %v365
    %2900 = vmatprep.subr.mxu0 %v369
    %2901 = vmatpush1.msra.mxu0 %v368
    %2902 = vmatprep.subr.mxu0 %v372
    %2903 = vmatpush1.msra.mxu0 %v371
    %2904 = vmatprep.subr.mxu0 %v375
    %2905 = vmatpush1.msra.mxu0 %v374
    %2906 = vmatprep.subr.mxu0 %v378
    %2907 = vmatpush1.msra.mxu0 %v377
    %2908 = vmatprep.subr.mxu0 %v381
    %2909 = vmatpush1.msra.mxu0 %v380
    %2910 = vmatprep.subr.mxu0 %v384
    %2911 = vmatpush1.msra.mxu0 %v383
    %2912 = vmatprep.subr.mxu0 0.0
    %2913 = vmatpush1.msra.mxu0 0.0
    %2914 = vmatprep.subr.mxu0 0.0
    %2915 = vmatpush1.msra.mxu0 0.0
    %2916 = vmatprep.subr.mxu0 0.0
    %2917 = vmatpush1.msra.mxu0 0.0
    %2918 = vmatprep.subr.mxu0 0.0
    %2919 = vmatpush1.msra.mxu0 0.0
    %2920 = vmatprep.subr.mxu0 0.0
    %2921 = vmatpush1.msra.mxu0 0.0
    %2922 = vmatprep.subr.mxu0 0.0
    %2923 = vmatpush1.msra.mxu0 0.0
    %2924 = vmatprep.subr.mxu0 0.0
    %2925 = vmatpush1.msra.mxu0 0.0
    %2926 = vmatprep.subr.mxu0 0.0
    %2927 = vmatpush1.msra.mxu0 0.0
    %2928 = vmatprep.subr.mxu0 0.0
    %2929 = vmatpush1.msra.mxu0 0.0
    %2930 = vmatprep.subr.mxu0 0.0
    %2931 = vmatpush1.msra.mxu0 0.0
    %2932 = vmatprep.subr.mxu0 0.0
    %2933 = vmatpush1.msra.mxu0 0.0
    %2934 = vmatprep.subr.mxu0 0.0
    %2935 = vmatpush1.msra.mxu0 0.0
    %2936 = vmatprep.subr.mxu0 0.0
    %2937 = vmatpush1.msra.mxu0 0.0
    %2938 = vmatprep.subr.mxu0 0.0
    %2939 = vmatpush1.msra.mxu0 0.0
    %2940 = vmatprep.subr.mxu0 0.0
    %2941 = vmatpush1.msra.mxu0 0.0
    %2942 = vmatprep.subr.mxu0 0.0
    %2943 = vmatpush1.msra.mxu0 0.0
    %2944 = vmatprep.mubr.f32.mxu0 0.0
    %2945 = vmatmul.mubr.f32.gmra.mrb[0].mxu0 %v2878
    %v2946 = vpop.f32.mrb[0].mxu0
    %v2947 = vadd.f32 0.0, %v2946
    %v2948 = vpop.f32.mrb[0].mxu0
    %v2949 = vadd.f32 0.0, %v2948
    %2950 = vdwg.mxu0
    %2951 = vmatprep.subr.mxu0 0.0
    %2952 = vmatpush1.msra.mxu0 %v340
    %2953 = vmatprep.subr.mxu0 0.0
    %2954 = vmatpush1.msra.mxu0 %v343
    %2955 = vmatprep.subr.mxu0 0.0
    %2956 = vmatpush1.msra.mxu0 %v346
    %2957 = vmatprep.subr.mxu0 0.0
    %2958 = vmatpush1.msra.mxu0 %v349
    %2959 = vmatprep.subr.mxu0 0.0
    %2960 = vmatpush1.msra.mxu0 %v352
    %2961 = vmatprep.subr.mxu0 0.0
    %2962 = vmatpush1.msra.mxu0 %v355
    %2963 = vmatprep.subr.mxu0 0.0
    %2964 = vmatpush1.msra.mxu0 %v358
    %2965 = vmatprep.subr.mxu0 0.0
    %2966 = vmatpush1.msra.mxu0 %v361
    %2967 = vmatprep.subr.mxu0 0.0
    %2968 = vmatpush1.msra.mxu0 %v364
    %2969 = vmatprep.subr.mxu0 0.0
    %2970 = vmatpush1.msra.mxu0 %v367
    %2971 = vmatprep.subr.mxu0 0.0
    %2972 = vmatpush1.msra.mxu0 %v370
    %2973 = vmatprep.subr.mxu0 0.0
    %2974 = vmatpush1.msra.mxu0 %v373
    %2975 = vmatprep.subr.mxu0 0.0
    %2976 = vmatpush1.msra.mxu0 %v376
    %2977 = vmatprep.subr.mxu0 0.0
    %2978 = vmatpush1.msra.mxu0 %v379
    %2979 = vmatprep.subr.mxu0 0.0
    %2980 = vmatpush1.msra.mxu0 %v382
    %2981 = vmatprep.subr.mxu0 0.0
    %2982 = vmatpush1.msra.mxu0 %v385
    %2983 = vmatprep.subr.mxu0 0.0
    %2984 = vmatpush1.msra.mxu0 0.0
    %2985 = vmatprep.subr.mxu0 0.0
    %2986 = vmatpush1.msra.mxu0 0.0
    %2987 = vmatprep.subr.mxu0 0.0
    %2988 = vmatpush1.msra.mxu0 0.0
    %2989 = vmatprep.subr.mxu0 0.0
    %2990 = vmatpush1.msra.mxu0 0.0
    %2991 = vmatprep.subr.mxu0 0.0
    %2992 = vmatpush1.msra.mxu0 0.0
    %2993 = vmatprep.subr.mxu0 0.0
    %2994 = vmatpush1.msra.mxu0 0.0
    %2995 = vmatprep.subr.mxu0 0.0
    %2996 = vmatpush1.msra.mxu0 0.0
    %2997 = vmatprep.subr.mxu0 0.0
    %2998 = vmatpush1.msra.mxu0 0.0
    %2999 = vmatprep.subr.mxu0 0.0
    %3000 = vmatpush1.msra.mxu0 0.0
    %3001 = vmatprep.subr.mxu0 0.0
    %3002 = vmatpush1.msra.mxu0 0.0
    %3003 = vmatprep.subr.mxu0 0.0
    %3004 = vmatpush1.msra.mxu0 0.0
    %3005 = vmatprep.subr.mxu0 0.0
    %3006 = vmatpush1.msra.mxu0 0.0
    %3007 = vmatprep.subr.mxu0 0.0
    %3008 = vmatpush1.msra.mxu0 0.0
    %3009 = vmatprep.subr.mxu0 0.0
    %3010 = vmatpush1.msra.mxu0 0.0
    %3011 = vmatprep.subr.mxu0 0.0
    %3012 = vmatpush1.msra.mxu0 0.0
    %3013 = vmatprep.subr.mxu0 0.0
    %3014 = vmatpush1.msra.mxu0 0.0
    %3015 = vmatprep.mubr.f32.mxu0 0.0
    %3016 = vmatmul.mubr.f32.gmra.mrb[0].mxu0 %v2878
    %v3017 = vpop.f32.mrb[0].mxu0
    %v3018 = vadd.f32 0.0, %v3017
    %v3019 = vpop.f32.mrb[0].mxu0
    %3020 = vdwg.mxu0
    %v3022 = vrot.slane %v2876, 2
    %3024 = vmatprep.subr.mxu0 %v528
    %3025 = vmatpush1.msra.mxu0 %v527
    %3026 = vmatprep.subr.mxu0 %v531
    %3027 = vmatpush1.msra.mxu0 %v530
    %3028 = vmatprep.subr.mxu0 %v534
    %3029 = vmatpush1.msra.mxu0 %v533
    %3030 = vmatprep.subr.mxu0 %v537
    %3031 = vmatpush1.msra.mxu0 %v536
    %3032 = vmatprep.subr.mxu0 %v540
    %3033 = vmatpush1.msra.mxu0 %v539
    %3034 = vmatprep.subr.mxu0 %v543
    %3035 = vmatpush1.msra.mxu0 %v542
    %3036 = vmatprep.subr.mxu0 %v546
    %3037 = vmatpush1.msra.mxu0 %v545
    %3038 = vmatprep.subr.mxu0 %v549
    %3039 = vmatpush1.msra.mxu0 %v548
    %3040 = vmatprep.subr.mxu0 %v552
    %3041 = vmatpush1.msra.mxu0 %v551
    %3042 = vmatprep.subr.mxu0 %v555
    %3043 = vmatpush1.msra.mxu0 %v554
    %3044 = vmatprep.subr.mxu0 %v558
    %3045 = vmatpush1.msra.mxu0 %v557
    %3046 = vmatprep.subr.mxu0 %v561
    %3047 = vmatpush1.msra.mxu0 %v560
    %3048 = vmatprep.subr.mxu0 %v564
    %3049 = vmatpush1.msra.mxu0 %v563
    %3050 = vmatprep.subr.mxu0 %v567
    %3051 = vmatpush1.msra.mxu0 %v566
    %3052 = vmatprep.subr.mxu0 %v570
    %3053 = vmatpush1.msra.mxu0 %v569
    %3054 = vmatprep.subr.mxu0 %v573
    %3055 = vmatpush1.msra.mxu0 %v572
    %3056 = vmatprep.subr.mxu0 0.0
    %3057 = vmatpush1.msra.mxu0 0.0
    %3058 = vmatprep.subr.mxu0 0.0
    %3059 = vmatpush1.msra.mxu0 0.0
    %3060 = vmatprep.subr.mxu0 0.0
    %3061 = vmatpush1.msra.mxu0 0.0
    %3062 = vmatprep.subr.mxu0 0.0
    %3063 = vmatpush1.msra.mxu0 0.0
    %3064 = vmatprep.subr.mxu0 0.0
    %3065 = vmatpush1.msra.mxu0 0.0
    %3066 = vmatprep.subr.mxu0 0.0
    %3067 = vmatpush1.msra.mxu0 0.0
    %3068 = vmatprep.subr.mxu0 0.0
    %3069 = vmatpush1.msra.mxu0 0.0
    %3070 = vmatprep.subr.mxu0 0.0
    %3071 = vmatpush1.msra.mxu0 0.0
    %3072 = vmatprep.subr.mxu0 0.0
    %3073 = vmatpush1.msra.mxu0 0.0
    %3074 = vmatprep.subr.mxu0 0.0
    %3075 = vmatpush1.msra.mxu0 0.0
    %3076 = vmatprep.subr.mxu0 0.0
    %3077 = vmatpush1.msra.mxu0 0.0
    %3078 = vmatprep.subr.mxu0 0.0
    %3079 = vmatpush1.msra.mxu0 0.0
    %3080 = vmatprep.subr.mxu0 0.0
    %3081 = vmatpush1.msra.mxu0 0.0
    %3082 = vmatprep.subr.mxu0 0.0
    %3083 = vmatpush1.msra.mxu0 0.0
    %3084 = vmatprep.subr.mxu0 0.0
    %3085 = vmatpush1.msra.mxu0 0.0
    %3086 = vmatprep.subr.mxu0 0.0
    %3087 = vmatpush1.msra.mxu0 0.0
    %3088 = vmatprep.mubr.f32.mxu0 0.0
    %3089 = vmatmul.mubr.f32.gmra.mrb[0].mxu0 %v3022
    %v3090 = vpop.f32.mrb[0].mxu0
    %v3091 = vadd.f32 0.0, %v3090
    %v3092 = vpop.f32.mrb[0].mxu0
    %v3093 = vadd.f32 0.0, %v3092
    %3094 = vdwg.mxu0
    %3095 = vmatprep.subr.mxu0 0.0
    %3096 = vmatpush1.msra.mxu0 %v529
    %3097 = vmatprep.subr.mxu0 0.0
    %3098 = vmatpush1.msra.mxu0 %v532
    %3099 = vmatprep.subr.mxu0 0.0
    %3100 = vmatpush1.msra.mxu0 %v535
    %3101 = vmatprep.subr.mxu0 0.0
    %3102 = vmatpush1.msra.mxu0 %v538
    %3103 = vmatprep.subr.mxu0 0.0
    %3104 = vmatpush1.msra.mxu0 %v541
    %3105 = vmatprep.subr.mxu0 0.0
    %3106 = vmatpush1.msra.mxu0 %v544
    %3107 = vmatprep.subr.mxu0 0.0
    %3108 = vmatpush1.msra.mxu0 %v547
    %3109 = vmatprep.subr.mxu0 0.0
    %3110 = vmatpush1.msra.mxu0 %v550
    %3111 = vmatprep.subr.mxu0 0.0
    %3112 = vmatpush1.msra.mxu0 %v553
    %3113 = vmatprep.subr.mxu0 0.0
    %3114 = vmatpush1.msra.mxu0 %v556
    %3115 = vmatprep.subr.mxu0 0.0
    %3116 = vmatpush1.msra.mxu0 %v559
    %3117 = vmatprep.subr.mxu0 0.0
    %3118 = vmatpush1.msra.mxu0 %v562
    %3119 = vmatprep.subr.mxu0 0.0
    %3120 = vmatpush1.msra.mxu0 %v565
    %3121 = vmatprep.subr.mxu0 0.0
    %3122 = vmatpush1.msra.mxu0 %v568
    %3123 = vmatprep.subr.mxu0 0.0
    %3124 = vmatpush1.msra.mxu0 %v571
    %3125 = vmatprep.subr.mxu0 0.0
    %3126 = vmatpush1.msra.mxu0 %v574
    %3127 = vmatprep.subr.mxu0 0.0
    %3128 = vmatpush1.msra.mxu0 0.0
    %3129 = vmatprep.subr.mxu0 0.0
    %3130 = vmatpush1.msra.mxu0 0.0
    %3131 = vmatprep.subr.mxu0 0.0
    %3132 = vmatpush1.msra.mxu0 0.0
    %3133 = vmatprep.subr.mxu0 0.0
    %3134 = vmatpush1.msra.mxu0 0.0
    %3135 = vmatprep.subr.mxu0 0.0
    %3136 = vmatpush1.msra.mxu0 0.0
    %3137 = vmatprep.subr.mxu0 0.0
    %3138 = vmatpush1.msra.mxu0 0.0
    %3139 = vmatprep.subr.mxu0 0.0
    %3140 = vmatpush1.msra.mxu0 0.0
    %3141 = vmatprep.subr.mxu0 0.0
    %3142 = vmatpush1.msra.mxu0 0.0
    %3143 = vmatprep.subr.mxu0 0.0
    %3144 = vmatpush1.msra.mxu0 0.0
    %3145 = vmatprep.subr.mxu0 0.0
    %3146 = vmatpush1.msra.mxu0 0.0
    %3147 = vmatprep.subr.mxu0 0.0
    %3148 = vmatpush1.msra.mxu0 0.0
    %3149 = vmatprep.subr.mxu0 0.0
    %3150 = vmatpush1.msra.mxu0 0.0
    %3151 = vmatprep.subr.mxu0 0.0
    %3152 = vmatpush1.msra.mxu0 0.0
    %3153 = vmatprep.subr.mxu0 0.0
    %3154 = vmatpush1.msra.mxu0 0.0
    %3155 = vmatprep.subr.mxu0 0.0
    %3156 = vmatpush1.msra.mxu0 0.0
    %3157 = vmatprep.subr.mxu0 0.0
    %3158 = vmatpush1.msra.mxu0 0.0
    %3159 = vmatprep.mubr.f32.mxu0 0.0
    %3160 = vmatmul.mubr.f32.gmra.mrb[0].mxu0 %v3022
    %v3161 = vpop.f32.mrb[0].mxu0
    %v3162 = vadd.f32 0.0, %v3161
    %v3163 = vpop.f32.mrb[0].mxu0
    %3164 = vdwg.mxu0
    %v3166 = vrot.slane %v2947, 2
    %v3168 = vadd.f32 %v178, %v3166
    %v3169 = vxor.u32 %v3168, 2147483648
    %v3170 = vmul.f32 %v3169, 1.442695
    %v3171 = vpow.pop %v3170
    %v3172 = vadd.f32 %v3171, 1.0
    %v3173 = vrcp.pop %v3172
    %v3174 = vmul.f32 1.0, %v3173
    %v3176 = vrot.slane %v2949, 2
    %v3178 = vadd.f32 %v180, %v3176
    %v3179 = vxor.u32 %v3178, 2147483648
    %v3180 = vmul.f32 %v3179, 1.442695
    %v3181 = vpow.pop %v3180
    %v3182 = vadd.f32 %v3181, 1.0
    %v3183 = vrcp.pop %v3182
    %v3184 = vmul.f32 1.0, %v3183
    %v3185 = vadd.f32 %v3018, %v734
    %v3187 = vrot.slane %v3185, 2
    %v3189 = vmul.f32 %v3174, %v3187
    %v3190 = vadd.f32 %v255, %v3189
    %v3191 = vtanh.pop %v3190
    %v3192 = vsub.f32 1.0, %v3184
    %v3193 = vmul.f32 %v3192, %v3191
    %v3194 = vrot.slane %v2843, 6
    %v3196 = vmul.f32 %v3184, %v3194
    %v3197 = vadd.f32 %v3193, %v3196
    %v3198 = vadd.f32 %v251, %v3091
    %v3199 = vxor.u32 %v3198, 2147483648
    %v3200 = vmul.f32 %v3199, 1.442695
    %v3201 = vpow.pop %v3200
    %v3202 = vadd.f32 %v3201, 1.0
    %v3203 = vrcp.pop %v3202
    %v3204 = vmul.f32 1.0, %v3203
    %v3205 = vadd.f32 %v326, %v3093
    %v3206 = vxor.u32 %v3205, 2147483648
    %v3207 = vmul.f32 %v3206, 1.442695
    %v3208 = vpow.pop %v3207
    %v3209 = vadd.f32 %v3208, 1.0
    %v3210 = vrcp.pop %v3209
    %v3211 = vmul.f32 1.0, %v3210
    %v3212 = vadd.f32 %v3162, %v768
    %v3213 = vmul.f32 %v3204, %v3212
    %v3214 = vadd.f32 %v328, %v3213
    %v3215 = vtanh.pop %v3214
    %v3216 = vsub.f32 1.0, %v3211
    %v3217 = vmul.f32 %v3216, %v3215
    %v3218 = vmul.f32 %v3211, %v3022
    %v3219 = vadd.f32 %v3217, %v3218
    %v3221 = vrot.slane %v3197, 6
    %v3223 = vld [vmem:[%s7] sm:$0xff]
    %v3224 = vld [vmem:[%s7 + $0x8] sm:$0xff]
    %v3225 = vld [vmem:[%s7 + $0x10] sm:$0xff]
    %v3226 = vld [vmem:[%s7 + $0x18] sm:$0xff]
    %v3227 = vld [vmem:[%s7 + $0x20] sm:$0xff]
    %v3228 = vld [vmem:[%s7 + $0x28] sm:$0xff]
    %v3229 = vld [vmem:[%s7 + $0x30] sm:$0xff]
    %v3230 = vld [vmem:[%s7 + $0x38] sm:$0xff]
    %v3231 = vld [vmem:[%s7 + $0x40] sm:$0xff]
    %v3232 = vld [vmem:[%s7 + $0x48] sm:$0xff]
    %v3233 = vld [vmem:[%s7 + $0x50] sm:$0xff]
    %v3234 = vld [vmem:[%s7 + $0x58] sm:$0xff]
    %v3235 = vld [vmem:[%s7 + $0x60] sm:$0xff]
    %v3236 = vld [vmem:[%s7 + $0x68] sm:$0xff]
    %v3237 = vld [vmem:[%s7 + $0x70] sm:$0xff]
    %v3238 = vld [vmem:[%s7 + $0x78] sm:$0xff]
    %v3239 = vld [vmem:[%s7 + $0x80] sm:$0xff]
    %v3240 = vld [vmem:[%s7 + $0x88] sm:$0xff]
    %v3241 = vld [vmem:[%s7 + $0x90] sm:$0xff]
    %v3242 = vld [vmem:[%s7 + $0x98] sm:$0xff]
    %v3243 = vld [vmem:[%s7 + $0xa0] sm:$0xff]
    %v3244 = vld [vmem:[%s7 + $0xa8] sm:$0xff]
    %v3245 = vld [vmem:[%s7 + $0xb0] sm:$0xff]
    %v3246 = vld [vmem:[%s7 + $0xb8] sm:$0xff]
    %v3247 = vld [vmem:[%s7 + $0xc0] sm:$0xff]
    %v3248 = vld [vmem:[%s7 + $0xc8] sm:$0xff]
    %v3249 = vld [vmem:[%s7 + $0xd0] sm:$0xff]
    %v3250 = vld [vmem:[%s7 + $0xd8] sm:$0xff]
    %v3251 = vld [vmem:[%s7 + $0xe0] sm:$0xff]
    %v3252 = vld [vmem:[%s7 + $0xe8] sm:$0xff]
    %v3253 = vld [vmem:[%s7 + $0xf0] sm:$0xff]
    %v3254 = vld [vmem:[%s7 + $0xf8] sm:$0xff]
    %v3255 = vld [vmem:[%s8] sm:$0x1]
    %v3257 = vlaneseq
    %v3258 = vshrl.u32 %v3257, 7
    %v3259 = vsub.s32 0, %v3258
    %v3260 = vrot.slane %v3255, %v3259
    %3262 = vmatprep.subr.mxu0 0.0
    %3263 = vmatpush1.msra.mxu0 %v3223
    %3264 = vmatprep.subr.mxu0 0.0
    %3265 = vmatpush1.msra.mxu0 %v3224
    %3266 = vmatprep.subr.mxu0 0.0
    %3267 = vmatpush1.msra.mxu0 %v3225
    %3268 = vmatprep.subr.mxu0 0.0
    %3269 = vmatpush1.msra.mxu0 %v3226
    %3270 = vmatprep.subr.mxu0 0.0
    %3271 = vmatpush1.msra.mxu0 %v3227
    %3272 = vmatprep.subr.mxu0 0.0
    %3273 = vmatpush1.msra.mxu0 %v3228
    %3274 = vmatprep.subr.mxu0 0.0
    %3275 = vmatpush1.msra.mxu0 %v3229
    %3276 = vmatprep.subr.mxu0 0.0
    %3277 = vmatpush1.msra.mxu0 %v3230
    %3278 = vmatprep.subr.mxu0 0.0
    %3279 = vmatpush1.msra.mxu0 %v3231
    %3280 = vmatprep.subr.mxu0 0.0
    %3281 = vmatpush1.msra.mxu0 %v3232
    %3282 = vmatprep.subr.mxu0 0.0
    %3283 = vmatpush1.msra.mxu0 %v3233
    %3284 = vmatprep.subr.mxu0 0.0
    %3285 = vmatpush1.msra.mxu0 %v3234
    %3286 = vmatprep.subr.mxu0 0.0
    %3287 = vmatpush1.msra.mxu0 %v3235
    %3288 = vmatprep.subr.mxu0 0.0
    %3289 = vmatpush1.msra.mxu0 %v3236
    %3290 = vmatprep.subr.mxu0 0.0
    %3291 = vmatpush1.msra.mxu0 %v3237
    %3292 = vmatprep.subr.mxu0 0.0
    %3293 = vmatpush1.msra.mxu0 %v3238
    %3294 = vmatprep.subr.mxu0 0.0
    %3295 = vmatpush1.msra.mxu0 %v3239
    %3296 = vmatprep.subr.mxu0 0.0
    %3297 = vmatpush1.msra.mxu0 %v3240
    %3298 = vmatprep.subr.mxu0 0.0
    %3299 = vmatpush1.msra.mxu0 %v3241
    %3300 = vmatprep.subr.mxu0 0.0
    %3301 = vmatpush1.msra.mxu0 %v3242
    %3302 = vmatprep.subr.mxu0 0.0
    %3303 = vmatpush1.msra.mxu0 %v3243
    %3304 = vmatprep.subr.mxu0 0.0
    %3305 = vmatpush1.msra.mxu0 %v3244
    %3306 = vmatprep.subr.mxu0 0.0
    %3307 = vmatpush1.msra.mxu0 %v3245
    %3308 = vmatprep.subr.mxu0 0.0
    %3309 = vmatpush1.msra.mxu0 %v3246
    %3310 = vmatprep.subr.mxu0 0.0
    %3311 = vmatpush1.msra.mxu0 %v3247
    %3312 = vmatprep.subr.mxu0 0.0
    %3313 = vmatpush1.msra.mxu0 %v3248
    %3314 = vmatprep.subr.mxu0 0.0
    %3315 = vmatpush1.msra.mxu0 %v3249
    %3316 = vmatprep.subr.mxu0 0.0
    %3317 = vmatpush1.msra.mxu0 %v3250
    %3318 = vmatprep.subr.mxu0 0.0
    %3319 = vmatpush1.msra.mxu0 %v3251
    %3320 = vmatprep.subr.mxu0 0.0
    %3321 = vmatpush1.msra.mxu0 %v3252
    %3322 = vmatprep.subr.mxu0 0.0
    %3323 = vmatpush1.msra.mxu0 %v3253
    %3324 = vmatprep.subr.mxu0 0.0
    %3325 = vmatpush1.msra.mxu0 %v3254
    %3326 = vmatprep.mubr.f32.mxu0 %v3221
    %3327 = vmatmul.mubr.f32.gmra.mrb[0].mxu0 %v3219
    %v3328 = vpop.f32.mrb[0].mxu0
    %v3329 = vadd.f32 %v3260, %v3328
    %v3330 = vpop.f32.mrb[0].mxu0
    %3331 = vdwg.mxu0
    %vm3332 = vcmask 9216
    %3333 = vst.msk [vmem:[#allocation2] sm:$0x3] %vm3332, %v3329
    // Predicated region
    $region38: #{forward.1} parent=1 // pred_check
      _
    $region39: #{forward.1} parent=1 // pred_check_branch
      %3335 = sbr.rel (0) target = $region41
    $region40: #{forward.1} parent=1 // pred_region
      %s3337 = ssub.s32 32, 32
      %3338 = vsyncadd [#allocation3], %s3337
      %s3340 = sshll.u32 [#allocation2], 4
      %s3341 = int_to_ptr.vmem [resolvable:$true] %s3340
      %3343 = dma.vmem_to_hbm [thread:$0]  %s3341, 32, %s9, [#allocation3]
    $region41: #{forward.1} parent=1 // pred_fallthru
      _
    // Predicated region
    $region42: #{forward.1} parent=1 // pred_check
      _
    $region43: #{forward.1} parent=1 // pred_check_branch
      %3345 = sbr.rel (0) target = $region45
    $region44: #{forward.1} parent=1 // pred_region
      %3346 = dma.done [#allocation3], 32
    $region45: #{forward.1} parent=1 // pred_fallthru
      _
    %3347 = vsyncpa [#allocation3], 1

</llo_original>
